<compile_context>
chip_gen: v5e
topology: v5e:2x2
jax: 0.10.0
libtpu: 0.0.40
codegen_flags: <defaults>
</compile_context>

<pallas_src>
import functools

import jax
import jax.numpy as jnp
from jax import lax
from jax.experimental import pallas as pl
from jax.experimental.pallas import tpu as pltpu

_LANE = 128
_SUBLANE = 8


def _round_up(x, m):
    return (x + m - 1) // m * m


def _itemsize(dt):
    return jnp.dtype(dt).itemsize


def _vmem_capacity_bytes():
    try:
        info = pltpu.get_tpu_info()
        return int(getattr(info, "vmem_capacity_bytes", 64 << 20))
    except Exception:
        return 64 << 20


# ---------------------------------------------------------------------------
# Pallas kernel: chunk-level input projection + LSTM recurrence over t_blk
# steps.  Grid = (batch_blocks [parallel], time_blocks [arbitrary]).
# ---------------------------------------------------------------------------
def _lstm_chunk_kernel(x_ref, wih_ref, whh_ref, bias_ref, h0_ref, c0_ref,
                       len_ref, out_ref, hN_ref, cN_ref,
                       gx_sc, h_sc, c_sc, *, matmul_dtype, unroll):
    tb = pl.program_id(1)
    b_blk, Hp = hN_ref.shape
    t_blk = out_ref.shape[0]

    # Initialize recurrent state from the provided (static) hidden/cell.
    @pl.when(tb == 0)
    def _():
        h_sc[...] = h0_ref[...].astype(jnp.float32)
        c_sc[...] = c0_ref[...].astype(jnp.float32)

    # ---- In-kernel input projection for the whole chunk ---------------------
    # M = t_blk * b_blk rows -> MXU-efficient, and gates_x never touches HBM.
    x2d = x_ref[0, 0]                                        # [t_blk*b_blk, D]
    gx_sc[...] = (jnp.dot(x2d.astype(matmul_dtype), wih_ref[...],
                          preferred_element_type=jnp.float32)
                  + bias_ref[...])

    # TODO(synk): optionally stage W_hh in the MXU weight registers across the
    # chunk (pltpu.matmul_push_rhs / matmul_acc_lhs) if bundle dumps show the
    # per-step weight push dominating the recurrence latency.
    w_hh = whh_ref[...]                                      # [Hp, 4Hp] matmul_dtype
    lengths = len_ref[...]                                   # [b_blk, 1] int32
    t0 = tb * t_blk

    def step(i, carry):
        h, c = carry
        row = pl.multiple_of(i * b_blk, b_blk)
        gates = gx_sc[pl.ds(row, b_blk), :] + jnp.dot(
            h.astype(matmul_dtype), w_hh, preferred_element_type=jnp.float32)

        # PyTorch nn.LSTM gate order: input, forget, cell(g), output.
        # Slices are lane-dense (Hp is a multiple of 128).
        i_g = jax.nn.sigmoid(gates[:, 0:Hp])
        f_g = jax.nn.sigmoid(gates[:, Hp:2 * Hp])
        g_g = jnp.tanh(gates[:, 2 * Hp:3 * Hp])
        o_g = jax.nn.sigmoid(gates[:, 3 * Hp:4 * Hp])

        c_new = f_g * c + i_g * g_g
        h_new = o_g * jnp.tanh(c_new)

        # Length masking (pack/pad semantics): broadcast once, reuse 3 times.
        mask = jnp.broadcast_to(lengths > (t0 + i), (b_blk, Hp))
        c_next = jnp.where(mask, c_new, c)
        h_next = jnp.where(mask, h_new, h)
        out_ref[i] = (h_new * mask.astype(jnp.float32)).astype(out_ref.dtype)
        return (h_next, c_next)

    h_fin, c_fin = lax.fori_loop(0, t_blk, step, (h_sc[...], c_sc[...]),
                                 unroll=unroll)
    h_sc[...] = h_fin
    c_sc[...] = c_fin

    # Final-state writes only once, at the last time block.
    @pl.when(tb == pl.num_programs(1) - 1)
    def _():
        hN_ref[...] = h_fin
        cN_ref[...] = c_fin


def _choose_t_block(T, b_blk, D, Hp, mm_size, x_size, out_size, budget):
    """Largest time chunk whose pipelined blocks + scratch fit the VMEM budget."""
    d_lanes = _round_up(max(D, 1), _LANE)           # lane padding of the x tile
    per_t = (2 * b_blk * d_lanes * x_size           # x blocks (double-buffered)
             + 2 * b_blk * Hp * out_size            # out blocks (double-buffered)
             + b_blk * 4 * Hp * 4)                  # gx scratch (f32, single)
    fixed = (d_lanes * 4 * Hp * mm_size             # W_ih (resident, single copy)
             + Hp * 4 * Hp * mm_size                # W_hh (resident, single copy)
             + 4 * Hp * 4                           # bias
             + 2 * (2 * b_blk * Hp * 4 + b_blk * _LANE * 4)  # h0, c0, lengths
             + 2 * 2 * b_blk * Hp * 4               # hN, cN out blocks
             + 2 * b_blk * Hp * 4)                  # h, c scratch
    t_blk = max(1, min(T, max(budget - fixed, per_t) // per_t))
    return int(t_blk), int(fixed + t_blk * per_t)


def lstm_pallas(x, h0, c0, lengths, params, *, hidden_size,
                matmul_dtype=jnp.bfloat16, unroll=8, max_t_block=None):
    """Masked single-layer LSTM.

    x:        [B, T, D]   (batch-first, like nn.LSTM(batch_first=True))
    h0, c0:   [B, H]
    lengths:  [B] int
    params:   (w_ih_t [D, 4Hp], w_hh_t [Hp, 4Hp], b [1, 4Hp])  (Hp = H -> 128)
    returns:  (outputs [B, T, H], h_final [B, H] f32, c_final [B, H] f32)
    """
    w_ih_t, w_hh_t, bias = params
    B, T, D = x.shape
    H = hidden_size
    Hp = w_hh_t.shape[0]
    Bp = _round_up(B, _SUBLANE)
    out_dtype = x.dtype

    # Batch split across the parallel grid axis (uses v7x's 2nd TensorCore
    # when the batch supports two sublane-aligned blocks).
    b_blk = Bp // 2 if Bp % 16 == 0 else Bp
    n_b = Bp // b_blk

    # Size the time chunk against the per-generation VMEM capacity
    # (64 MiB on v7x vs 128 MiB on v5e/v6e) and set the scoped VMEM limit.
    cap = _vmem_capacity_bytes()
    budget = min(int(cap * 0.45), 48 << 20)
    t_blk, vmem_need = _choose_t_block(T, b_blk, D, Hp,
                                       _itemsize(matmul_dtype),
                                       _itemsize(x.dtype),
                                       _itemsize(out_dtype), budget)
    if max_t_block is not None:
        t_blk = max(1, min(t_blk, int(max_t_block)))
    Tp = _round_up(T, t_blk)
    n_t = Tp // t_blk
    vmem_limit = int(min(max(vmem_need * 13 // 10 + (2 << 20), 32 << 20),
                         int(cap * 0.85)))

    # --- Wrapper-side layout plumbing (x is the small stream: D, not 4Hp) ----
    # Present x as one contiguous [t_blk*b_blk, D] slab per (batch, time) block
    # so the kernel needs no in-kernel reshape before the projection matmul.
    x_tm = jnp.transpose(x, (1, 0, 2))                               # [T, B, D]
    x_tm = jnp.pad(x_tm, ((0, Tp - T), (0, Bp - B), (0, 0)))         # [Tp, Bp, D]
    x_g = x_tm.reshape(n_t, t_blk, n_b, b_blk, D)
    x_g = jnp.transpose(x_g, (2, 0, 1, 3, 4)).reshape(n_b, n_t, t_blk * b_blk, D)

    w_ih_m = w_ih_t.astype(matmul_dtype)
    w_hh_m = w_hh_t.astype(matmul_dtype)
    bias_f = bias.astype(jnp.float32)
    h0p = jnp.pad(h0.astype(jnp.float32),
                  ((0, Bp - B), (0, Hp - h0.shape[-1])))
    c0p = jnp.pad(c0.astype(jnp.float32),
                  ((0, Bp - B), (0, Hp - c0.shape[-1])))
    len2d = jnp.pad(lengths.astype(jnp.int32), (0, Bp - B)).reshape(Bp, 1)

    grid_spec = pltpu.PrefetchScalarGridSpec(
        num_scalar_prefetch=0,
        grid=(n_b, n_t),
        in_specs=[
            pl.BlockSpec((1, 1, t_blk * b_blk, D),
                         lambda b, t: (b, t, 0, 0)),                     # x
            pl.BlockSpec(memory_space=pltpu.MemorySpace.VMEM),           # W_ih (resident)
            pl.BlockSpec(memory_space=pltpu.MemorySpace.VMEM),           # W_hh (resident)
            pl.BlockSpec(memory_space=pltpu.MemorySpace.VMEM),           # bias (resident)
            pl.BlockSpec((b_blk, Hp), lambda b, t: (b, 0)),              # h0
            pl.BlockSpec((b_blk, Hp), lambda b, t: (b, 0)),              # c0
            pl.BlockSpec((b_blk, 1), lambda b, t: (b, 0)),               # lengths
        ],
        out_specs=[
            pl.BlockSpec((t_blk, b_blk, Hp), lambda b, t: (t, b, 0)),    # outputs
            pl.BlockSpec((b_blk, Hp), lambda b, t: (b, 0)),              # h_final
            pl.BlockSpec((b_blk, Hp), lambda b, t: (b, 0)),              # c_final
        ],
        scratch_shapes=[
            pltpu.VMEM((t_blk * b_blk, 4 * Hp), jnp.float32),  # gates_x chunk
            pltpu.VMEM((b_blk, Hp), jnp.float32),              # recurrent h
            pltpu.VMEM((b_blk, Hp), jnp.float32),              # recurrent c
        ],
    )

    out_tbh, hN, cN = pl.pallas_call(
        functools.partial(_lstm_chunk_kernel, matmul_dtype=matmul_dtype,
                          unroll=max(1, min(unroll, t_blk))),
        out_shape=(
            jax.ShapeDtypeStruct((Tp, Bp, Hp), out_dtype),
            jax.ShapeDtypeStruct((Bp, Hp), jnp.float32),
            jax.ShapeDtypeStruct((Bp, Hp), jnp.float32),
        ),
        grid_spec=grid_spec,
        compiler_params=pltpu.CompilerParams(
            dimension_semantics=("parallel", "arbitrary"),
            vmem_limit_bytes=vmem_limit),
    )(x_g, w_ih_m, w_hh_m, bias_f, h0p, c0p, len2d)

    # TODO(synk): returning the time-major [T, B, H] slab directly would save
    # this extra HBM pass if downstream consumers accept that layout.
    out = jnp.transpose(out_tbh[:T, :B, :H], (1, 0, 2))
    return out, hN[:B, :H], cN[:B, :H]


# ---------------------------------------------------------------------------
# Parameter construction (PyTorch nn.LSTM style) + lane-dense packing.
# ---------------------------------------------------------------------------
def pack_lstm_params(w_ih, w_hh, b_ih, b_hh, hidden_size):
    """Transpose + zero-pad per-gate so the hidden dim is a multiple of 128.

    Zero padding is exact: padded hidden units stay identically 0 and their
    zero W_hh rows never influence real units.
    """
    H = hidden_size
    Hp = _round_up(H, _LANE)
    pad_h = Hp - H

    def pad_gate_cols(w_t):  # [rows, 4H] -> [rows, 4Hp]
        rows = w_t.shape[0]
        return jnp.pad(w_t.reshape(rows, 4, H),
                       ((0, 0), (0, 0), (0, pad_h))).reshape(rows, 4 * Hp)

    w_ih_t = pad_gate_cols(w_ih.T)                                   # [D, 4Hp]
    w_hh_t = pad_gate_cols(jnp.pad(w_hh.T, ((0, pad_h), (0, 0))))    # [Hp, 4Hp]
    b = pad_gate_cols((b_ih + b_hh).reshape(1, 4 * H))               # [1, 4Hp]
    return w_ih_t, w_hh_t, b


def init_lstm_params(key, input_size, hidden_size):
    k1, k2, k3, k4 = jax.random.split(key, 4)
    scale = 1.0 / jnp.sqrt(hidden_size)
    w_ih = jax.random.uniform(k1, (4 * hidden_size, input_size),
                              minval=-scale, maxval=scale, dtype=jnp.float32)
    w_hh = jax.random.uniform(k2, (4 * hidden_size, hidden_size),
                              minval=-scale, maxval=scale, dtype=jnp.float32)
    b_ih = jax.random.uniform(k3, (4 * hidden_size,),
                              minval=-scale, maxval=scale, dtype=jnp.float32)
    b_hh = jax.random.uniform(k4, (4 * hidden_size,),
                              minval=-scale, maxval=scale, dtype=jnp.float32)
    raw = (w_ih, w_hh, b_ih, b_hh)
    return pack_lstm_params(w_ih, w_hh, b_ih, b_hh, hidden_size), raw


# ---------------------------------------------------------------------------
# Module: base_local_encoder forward
# ---------------------------------------------------------------------------
@functools.partial(jax.jit, static_argnames=("matmul_dtype",))
def base_local_encoder_forward(enc_params, dec_params,
                               embeddings_varying_encoder,
                               embeddings_varying_decoder,
                               static_input_hidden, static_input_cell,
                               encoder_lengths, decoder_lengths,
                               matmul_dtype=jnp.bfloat16):
    H = static_input_hidden.shape[-1]
    h0 = static_input_hidden[0]     # [B, H]  (num_layers = 1)
    c0 = static_input_cell[0]
    lstm_output_encoder, hidden, cell = lstm_pallas(
        embeddings_varying_encoder, h0, c0, encoder_lengths, enc_params,
        hidden_size=H, matmul_dtype=matmul_dtype)
    lstm_output_decoder, _, _ = lstm_pallas(
        embeddings_varying_decoder, hidden, cell, decoder_lengths, dec_params,
        hidden_size=H, matmul_dtype=matmul_dtype)
    return lstm_output_encoder, lstm_output_decoder


# ---------------------------------------------------------------------------
# Pure-JAX reference for validation (uses the raw PyTorch-style params).
# ---------------------------------------------------------------------------
def lstm_ref(x, h0, c0, lengths, raw_params):
    w_ih, w_hh, b_ih, b_hh = raw_params
    B, T, D = x.shape
    H = h0.shape[-1]
    w_ih_t, w_hh_t = w_ih.T, w_hh.T
    b = (b_ih + b_hh).reshape(1, 4 * H)

    def step(carry, inp):
        h, c = carry
        xt, t = inp
        gates = xt @ w_ih_t + h @ w_hh_t + b
        i = jax.nn.sigmoid(gates[:, :H])
        f = jax.nn.sigmoid(gates[:, H:2 * H])
        g = jnp.tanh(gates[:, 2 * H:3 * H])
        o = jax.nn.sigmoid(gates[:, 3 * H:])
        c_new = f * c + i * g
        h_new = o * jnp.tanh(c_new)
        mask = lengths.reshape(B, 1) > t
        c2 = jnp.where(mask, c_new, c)
        h2 = jnp.where(mask, h_new, h)
        return (h2, c2), jnp.where(mask, h_new, 0.0)

    (hN, cN), outs = jax.lax.scan(
        step, (h0, c0), (jnp.transpose(x, (1, 0, 2)), jnp.arange(T)))
    return jnp.transpose(outs, (1, 0, 2)), hN, cN


if __name__ == "__main__":
    # B=16 exercises the 2-way batch-block (parallel) grid axis.
    B, T_ENC, T_DEC, D_IN, H = 16, 8, 8, 16, 32

    key = jax.random.PRNGKey(0)
    k_enc, k_dec, k_xe, k_xd, k_h, k_c, k_le, k_ld = jax.random.split(key, 8)

    enc_params, enc_raw = init_lstm_params(k_enc, D_IN, H)
    dec_params, dec_raw = init_lstm_params(k_dec, D_IN, H)

    embeddings_varying_encoder = jax.random.normal(k_xe, (B, T_ENC, D_IN), jnp.float32)
    embeddings_varying_decoder = jax.random.normal(k_xd, (B, T_DEC, D_IN), jnp.float32)
    static_input_hidden = jax.random.normal(k_h, (1, B, H), jnp.float32)
    static_input_cell = jax.random.normal(k_c, (1, B, H), jnp.float32)
    encoder_lengths = jax.random.randint(k_le, (B,), 3, T_ENC + 1).astype(jnp.int32)
    decoder_lengths = jax.random.randint(k_ld, (B,), 3, T_DEC + 1).astype(jnp.int32)

    # Default path: bf16 matmuls (f32 accumulation / state).
    out_enc, out_dec = base_local_encoder_forward(
        enc_params, dec_params,
        embeddings_varying_encoder, embeddings_varying_decoder,
        static_input_hidden, static_input_cell,
        encoder_lengths, decoder_lengths)
    jax.block_until_ready((out_enc, out_dec))

    # Pure-JAX reference.
    ref_enc, hN_ref, cN_ref = lstm_ref(embeddings_varying_encoder,
                                       static_input_hidden[0],
                                       static_input_cell[0],
                                       encoder_lengths, enc_raw)
    ref_dec, _, _ = lstm_ref(embeddings_varying_decoder, hN_ref, cN_ref,
                             decoder_lengths, dec_raw)
    assert out_enc.shape == (B, T_ENC, H) and out_dec.shape == (B, T_DEC, H)
    assert jnp.allclose(out_enc, ref_enc, atol=5e-2, rtol=5e-2)
    assert jnp.allclose(out_dec, ref_dec, atol=5e-2, rtol=5e-2)

    # f32-matmul path: tight tolerance against the reference.
    out_enc32, out_dec32 = base_local_encoder_forward(
        enc_params, dec_params,
        embeddings_varying_encoder, embeddings_varying_decoder,
        static_input_hidden, static_input_cell,
        encoder_lengths, decoder_lengths, matmul_dtype=jnp.float32)
    jax.block_until_ready((out_enc32, out_dec32))
    assert jnp.allclose(out_enc32, ref_enc, atol=2e-5, rtol=2e-5)
    assert jnp.allclose(out_dec32, ref_dec, atol=2e-5, rtol=2e-5)

    # Force multiple time chunks (state carry across grid steps + final-state
    # gating) and validate the carried hidden/cell as well.
    chunk_fn = jax.jit(functools.partial(
        lstm_pallas, hidden_size=H, matmul_dtype=jnp.float32, max_t_block=4))
    out_c, hN_c, cN_c = chunk_fn(embeddings_varying_encoder,
                                 static_input_hidden[0], static_input_cell[0],
                                 encoder_lengths, enc_params)
    jax.block_until_ready((out_c, hN_c, cN_c))
    assert jnp.allclose(out_c, ref_enc, atol=2e-5, rtol=2e-5)
    assert jnp.allclose(hN_c, hN_ref, atol=2e-5, rtol=2e-5)
    assert jnp.allclose(cN_c, cN_ref, atol=2e-5, rtol=2e-5)

    print("KERNEL_OK")
</pallas_src>

<mosaic_0001>
module attributes {stable_mosaic.version = 11 : i64} {
  func.func @_lstm_chunk_kernel(%arg0: i32, %arg1: i32, %arg2: memref<1x1x64x16xf32, #tpu.memory_space<vmem>>, %arg3: memref<16x512xbf16, #tpu.memory_space<vmem>>, %arg4: memref<128x512xbf16, #tpu.memory_space<vmem>>, %arg5: memref<1x512xf32, #tpu.memory_space<vmem>>, %arg6: memref<8x128xf32, #tpu.memory_space<vmem>>, %arg7: memref<8x128xf32, #tpu.memory_space<vmem>>, %arg8: memref<8x1xi32, #tpu.memory_space<vmem>>, %arg9: memref<8x8x128xf32, #tpu.memory_space<vmem>>, %arg10: memref<8x128xf32, #tpu.memory_space<vmem>>, %arg11: memref<8x128xf32, #tpu.memory_space<vmem>>, %arg12: memref<64x512xf32, #tpu.memory_space<vmem>>, %arg13: memref<8x128xf32, #tpu.memory_space<vmem>>, %arg14: memref<8x128xf32, #tpu.memory_space<vmem>>) attributes {dimension_semantics = [#tpu.dimension_semantics<parallel>, #tpu.dimension_semantics<arbitrary>], iteration_bounds = array<i64: 2, 1>, scalar_prefetch = 0 : i64, scratch_operands = 3 : i64, tpu.core_type = #tpu.core_type<tc>, window_params = [{transform_indices = @transform_0, window_bounds = array<i64: 1, 1, 64, 16>}, {pipeline_mode = #tpu.pipeline_mode<synchronous>, transform_indices = @transform_1, window_bounds = array<i64: 16, 512>}, {pipeline_mode = #tpu.pipeline_mode<synchronous>, transform_indices = @transform_2, window_bounds = array<i64: 128, 512>}, {pipeline_mode = #tpu.pipeline_mode<synchronous>, transform_indices = @transform_3, window_bounds = array<i64: 1, 512>}, {transform_indices = @transform_4, window_bounds = array<i64: 8, 128>}, {transform_indices = @transform_5, window_bounds = array<i64: 8, 128>}, {transform_indices = @transform_6, window_bounds = array<i64: 8, 1>}, {transform_indices = @transform_7, window_bounds = array<i64: 8, 8, 128>}, {transform_indices = @transform_8, window_bounds = array<i64: 8, 128>}, {transform_indices = @transform_9, window_bounds = array<i64: 8, 128>}]} {
    %c0_i32 = arith.constant 0 : i32
    %0 = arith.cmpi eq, %arg1, %c0_i32 : i32
    %1 = arith.extui %0 : i1 to i32
    %c0_i32_0 = arith.constant 0 : i32
    %2 = arith.cmpi ne, %1, %c0_i32_0 : i32
    scf.if %2 {
      %c0_90 = arith.constant 0 : index
      %c0_91 = arith.constant 0 : index
      %390 = vector.load %arg6[%c0_90, %c0_91] : memref<8x128xf32, #tpu.memory_space<vmem>>, vector<8x128xf32>
      %c0_92 = arith.constant 0 : index
      %c0_93 = arith.constant 0 : index
      %391 = vector.load %arg13[%c0_92, %c0_93] : memref<8x128xf32, #tpu.memory_space<vmem>>, vector<8x128xf32>
      tpu.vector_store %arg13[%c0_92, %c0_93], %390 {strides = array<i32>} : memref<8x128xf32, #tpu.memory_space<vmem>>, vector<8x128xf32>,
      %c0_94 = arith.constant 0 : index
      %c0_95 = arith.constant 0 : index
      %392 = vector.load %arg7[%c0_94, %c0_95] : memref<8x128xf32, #tpu.memory_space<vmem>>, vector<8x128xf32>
      %c0_96 = arith.constant 0 : index
      %c0_97 = arith.constant 0 : index
      %393 = vector.load %arg14[%c0_96, %c0_97] : memref<8x128xf32, #tpu.memory_space<vmem>>, vector<8x128xf32>
      tpu.vector_store %arg14[%c0_96, %c0_97], %392 {strides = array<i32>} : memref<8x128xf32, #tpu.memory_space<vmem>>, vector<8x128xf32>,
    } else {
    }
    %c0 = arith.constant 0 : index
    %c0_1 = arith.constant 0 : index
    %c0_2 = arith.constant 0 : index
    %c0_3 = arith.constant 0 : index
    %3 = vector.load %arg2[%c0, %c0_1, %c0_2, %c0_3] : memref<1x1x64x16xf32, #tpu.memory_space<vmem>>, vector<1x1x64x16xf32>
    %4 = vector.shape_cast %3 : vector<1x1x64x16xf32> to vector<64x16xf32>
    %5 = arith.truncf %4 : vector<64x16xf32> to vector<64x16xbf16>
    %c0_4 = arith.constant 0 : index
    %c0_5 = arith.constant 0 : index
    %6 = vector.load %arg3[%c0_4, %c0_5] : memref<16x512xbf16, #tpu.memory_space<vmem>>, vector<16x512xbf16>
    %cst = arith.constant dense<0.000000e+00> : vector<64x512xf32>
    %7 = tpu.matmul %5, %6, %cst {dimension_numbers = #tpu.dot_dimension_numbers<[1], [0], [0], [1], [0, 0, 1, 1], [], []>} : vector<64x16xbf16>, vector<16x512xbf16>, vector<64x512xf32> -> vector<64x512xf32>
    %c0_6 = arith.constant 0 : index
    %c0_7 = arith.constant 0 : index
    %8 = vector.load %arg5[%c0_6, %c0_7] : memref<1x512xf32, #tpu.memory_space<vmem>>, vector<1x512xf32>
    %9 = vector.broadcast %8 : vector<1x512xf32> to vector<64x512xf32>
    %10 = arith.addf %7, %9 : vector<64x512xf32>
    %c0_8 = arith.constant 0 : index
    %c0_9 = arith.constant 0 : index
    %11 = vector.load %arg12[%c0_8, %c0_9] : memref<64x512xf32, #tpu.memory_space<vmem>>, vector<64x512xf32>
    tpu.vector_store %arg12[%c0_8, %c0_9], %10 {strides = array<i32>} : memref<64x512xf32, #tpu.memory_space<vmem>>, vector<64x512xf32>,
    %c0_10 = arith.constant 0 : index
    %c0_11 = arith.constant 0 : index
    %12 = vector.load %arg4[%c0_10, %c0_11] : memref<128x512xbf16, #tpu.memory_space<vmem>>, vector<128x512xbf16>
    %c0_12 = arith.constant 0 : index
    %c0_13 = arith.constant 0 : index
    %13 = vector.load %arg8[%c0_12, %c0_13] : memref<8x1xi32, #tpu.memory_space<vmem>>, vector<8x1xi32>
    %c8_i32 = arith.constant 8 : i32
    %14 = arith.muli %arg1, %c8_i32 : i32
    %c0_14 = arith.constant 0 : index
    %c0_15 = arith.constant 0 : index
    %15 = vector.load %arg13[%c0_14, %c0_15] : memref<8x128xf32, #tpu.memory_space<vmem>>, vector<8x128xf32>
    %c0_16 = arith.constant 0 : index
    %c0_17 = arith.constant 0 : index
    %16 = vector.load %arg14[%c0_16, %c0_17] : memref<8x128xf32, #tpu.memory_space<vmem>>, vector<8x128xf32>
    %c0_i32_18 = arith.constant 0 : i32
    %c8_i32_19 = arith.constant 8 : i32
    %17 = arith.muli %c0_i32_18, %c8_i32_19 : i32
    %18 = tpu.assume_multiple %17, 8 : i32
    %19 = arith.index_cast %18 : i32 to index
    %c0_20 = arith.constant 0 : index
    %20 = vector.load %arg12[%19, %c0_20] : memref<64x512xf32, #tpu.memory_space<vmem>>, vector<8x512xf32>
    %21 = arith.truncf %15 : vector<8x128xf32> to vector<8x128xbf16>
    %cst_21 = arith.constant dense<0.000000e+00> : vector<8x512xf32>
    %22 = tpu.matmul %21, %12, %cst_21 {dimension_numbers = #tpu.dot_dimension_numbers<[1], [0], [0], [1], [0, 0, 1, 1], [], []>} : vector<8x128xbf16>, vector<128x512xbf16>, vector<8x512xf32> -> vector<8x512xf32>
    %23 = arith.addf %20, %22 : vector<8x512xf32>
    %24 = vector.extract_strided_slice %23 {offsets = [0, 0], sizes = [8, 128], strides = [1, 1]} : vector<8x512xf32> to vector<8x128xf32>
    %25 = arith.negf %24 : vector<8x128xf32>
    %26 = math.exp %25 : vector<8x128xf32>
    %cst_22 = arith.constant 1.000000e+00 : f32
    %27 = vector.broadcast %cst_22 : f32 to vector<8x128xf32>
    %28 = arith.addf %27, %26 : vector<8x128xf32>
    %29 = arith.divf %27, %28 : vector<8x128xf32>
    %30 = vector.extract_strided_slice %23 {offsets = [0, 128], sizes = [8, 128], strides = [1, 1]} : vector<8x512xf32> to vector<8x128xf32>
    %31 = arith.negf %30 : vector<8x128xf32>
    %32 = math.exp %31 : vector<8x128xf32>
    %cst_23 = arith.constant 1.000000e+00 : f32
    %33 = vector.broadcast %cst_23 : f32 to vector<8x128xf32>
    %34 = arith.addf %33, %32 : vector<8x128xf32>
    %35 = arith.divf %33, %34 : vector<8x128xf32>
    %36 = vector.extract_strided_slice %23 {offsets = [0, 256], sizes = [8, 128], strides = [1, 1]} : vector<8x512xf32> to vector<8x128xf32>
    %37 = math.tanh %36 : vector<8x128xf32>
    %38 = vector.extract_strided_slice %23 {offsets = [0, 384], sizes = [8, 128], strides = [1, 1]} : vector<8x512xf32> to vector<8x128xf32>
    %39 = arith.negf %38 : vector<8x128xf32>
    %40 = math.exp %39 : vector<8x128xf32>
    %cst_24 = arith.constant 1.000000e+00 : f32
    %41 = vector.broadcast %cst_24 : f32 to vector<8x128xf32>
    %42 = arith.addf %41, %40 : vector<8x128xf32>
    %43 = arith.divf %41, %42 : vector<8x128xf32>
    %44 = arith.mulf %35, %16 : vector<8x128xf32>
    %45 = arith.mulf %29, %37 : vector<8x128xf32>
    %46 = arith.addf %44, %45 : vector<8x128xf32>
    %47 = math.tanh %46 : vector<8x128xf32>
    %48 = arith.mulf %43, %47 : vector<8x128xf32>
    %49 = arith.addi %14, %c0_i32_18 : i32
    %50 = vector.broadcast %49 : i32 to vector<8x1xi32>
    %51 = arith.cmpi sgt, %13, %50 : vector<8x1xi32>
    %52 = vector.shape_cast %51 : vector<8x1xi1> to vector<8x1xi1>
    %53 = vector.broadcast %52 : vector<8x1xi1> to vector<8x128xi1>
    %54 = arith.select %53, %46, %16 : vector<8x128xi1>, vector<8x128xf32>
    %55 = arith.select %53, %48, %15 : vector<8x128xi1>, vector<8x128xf32>
    %56 = arith.extui %53 : vector<8x128xi1> to vector<8x128xi32>
    %57 = arith.sitofp %56 : vector<8x128xi32> to vector<8x128xf32>
    %58 = arith.mulf %48, %57 : vector<8x128xf32>
    %59 = arith.index_cast %c0_i32_18 : i32 to index
    %c0_25 = arith.constant 0 : index
    %c0_26 = arith.constant 0 : index
    %60 = vector.load %arg9[%59, %c0_25, %c0_26] : memref<8x8x128xf32, #tpu.memory_space<vmem>>, vector<1x8x128xf32>
    %61 = vector.shape_cast %60 : vector<1x8x128xf32> to vector<8x128xf32>
    %62 = vector.shape_cast %58 : vector<8x128xf32> to vector<1x8x128xf32>
    tpu.vector_store %arg9[%59, %c0_25, %c0_26], %62 {strides = array<i32>} : memref<8x8x128xf32, #tpu.memory_space<vmem>>, vector<1x8x128xf32>,
    %c1_i32 = arith.constant 1 : i32
    %c8_i32_27 = arith.constant 8 : i32
    %63 = arith.muli %c1_i32, %c8_i32_27 : i32
    %64 = tpu.assume_multiple %63, 8 : i32
    %65 = arith.index_cast %64 : i32 to index
    %c0_28 = arith.constant 0 : index
    %66 = vector.load %arg12[%65, %c0_28] : memref<64x512xf32, #tpu.memory_space<vmem>>, vector<8x512xf32>
    %67 = arith.truncf %55 : vector<8x128xf32> to vector<8x128xbf16>
    %cst_29 = arith.constant dense<0.000000e+00> : vector<8x512xf32>
    %68 = tpu.matmul %67, %12, %cst_29 {dimension_numbers = #tpu.dot_dimension_numbers<[1], [0], [0], [1], [0, 0, 1, 1], [], []>} : vector<8x128xbf16>, vector<128x512xbf16>, vector<8x512xf32> -> vector<8x512xf32>
    %69 = arith.addf %66, %68 : vector<8x512xf32>
    %70 = vector.extract_strided_slice %69 {offsets = [0, 0], sizes = [8, 128], strides = [1, 1]} : vector<8x512xf32> to vector<8x128xf32>
    %71 = arith.negf %70 : vector<8x128xf32>
    %72 = math.exp %71 : vector<8x128xf32>
    %cst_30 = arith.constant 1.000000e+00 : f32
    %73 = vector.broadcast %cst_30 : f32 to vector<8x128xf32>
    %74 = arith.addf %73, %72 : vector<8x128xf32>
    %75 = arith.divf %73, %74 : vector<8x128xf32>
    %76 = vector.extract_strided_slice %69 {offsets = [0, 128], sizes = [8, 128], strides = [1, 1]} : vector<8x512xf32> to vector<8x128xf32>
    %77 = arith.negf %76 : vector<8x128xf32>
    %78 = math.exp %77 : vector<8x128xf32>
    %cst_31 = arith.constant 1.000000e+00 : f32
    %79 = vector.broadcast %cst_31 : f32 to vector<8x128xf32>
    %80 = arith.addf %79, %78 : vector<8x128xf32>
    %81 = arith.divf %79, %80 : vector<8x128xf32>
    %82 = vector.extract_strided_slice %69 {offsets = [0, 256], sizes = [8, 128], strides = [1, 1]} : vector<8x512xf32> to vector<8x128xf32>
    %83 = math.tanh %82 : vector<8x128xf32>
    %84 = vector.extract_strided_slice %69 {offsets = [0, 384], sizes = [8, 128], strides = [1, 1]} : vector<8x512xf32> to vector<8x128xf32>
    %85 = arith.negf %84 : vector<8x128xf32>
    %86 = math.exp %85 : vector<8x128xf32>
    %cst_32 = arith.constant 1.000000e+00 : f32
    %87 = vector.broadcast %cst_32 : f32 to vector<8x128xf32>
    %88 = arith.addf %87, %86 : vector<8x128xf32>
    %89 = arith.divf %87, %88 : vector<8x128xf32>
    %90 = arith.mulf %81, %54 : vector<8x128xf32>
    %91 = arith.mulf %75, %83 : vector<8x128xf32>
    %92 = arith.addf %90, %91 : vector<8x128xf32>
    %93 = math.tanh %92 : vector<8x128xf32>
    %94 = arith.mulf %89, %93 : vector<8x128xf32>
    %95 = arith.addi %14, %c1_i32 : i32
    %96 = vector.broadcast %95 : i32 to vector<8x1xi32>
    %97 = arith.cmpi sgt, %13, %96 : vector<8x1xi32>
    %98 = vector.shape_cast %97 : vector<8x1xi1> to vector<8x1xi1>
    %99 = vector.broadcast %98 : vector<8x1xi1> to vector<8x128xi1>
    %100 = arith.select %99, %92, %54 : vector<8x128xi1>, vector<8x128xf32>
    %101 = arith.select %99, %94, %55 : vector<8x128xi1>, vector<8x128xf32>
    %102 = arith.extui %99 : vector<8x128xi1> to vector<8x128xi32>
    %103 = arith.sitofp %102 : vector<8x128xi32> to vector<8x128xf32>
    %104 = arith.mulf %94, %103 : vector<8x128xf32>
    %105 = arith.index_cast %c1_i32 : i32 to index
    %c0_33 = arith.constant 0 : index
    %c0_34 = arith.constant 0 : index
    %106 = vector.load %arg9[%105, %c0_33, %c0_34] : memref<8x8x128xf32, #tpu.memory_space<vmem>>, vector<1x8x128xf32>
    %107 = vector.shape_cast %106 : vector<1x8x128xf32> to vector<8x128xf32>
    %108 = vector.shape_cast %104 : vector<8x128xf32> to vector<1x8x128xf32>
    tpu.vector_store %arg9[%105, %c0_33, %c0_34], %108 {strides = array<i32>} : memref<8x8x128xf32, #tpu.memory_space<vmem>>, vector<1x8x128xf32>,
    %c2_i32 = arith.constant 2 : i32
    %c8_i32_35 = arith.constant 8 : i32
    %109 = arith.muli %c2_i32, %c8_i32_35 : i32
    %110 = tpu.assume_multiple %109, 8 : i32
    %111 = arith.index_cast %110 : i32 to index
    %c0_36 = arith.constant 0 : index
    %112 = vector.load %arg12[%111, %c0_36] : memref<64x512xf32, #tpu.memory_space<vmem>>, vector<8x512xf32>
    %113 = arith.truncf %101 : vector<8x128xf32> to vector<8x128xbf16>
    %cst_37 = arith.constant dense<0.000000e+00> : vector<8x512xf32>
    %114 = tpu.matmul %113, %12, %cst_37 {dimension_numbers = #tpu.dot_dimension_numbers<[1], [0], [0], [1], [0, 0, 1, 1], [], []>} : vector<8x128xbf16>, vector<128x512xbf16>, vector<8x512xf32> -> vector<8x512xf32>
    %115 = arith.addf %112, %114 : vector<8x512xf32>
    %116 = vector.extract_strided_slice %115 {offsets = [0, 0], sizes = [8, 128], strides = [1, 1]} : vector<8x512xf32> to vector<8x128xf32>
    %117 = arith.negf %116 : vector<8x128xf32>
    %118 = math.exp %117 : vector<8x128xf32>
    %cst_38 = arith.constant 1.000000e+00 : f32
    %119 = vector.broadcast %cst_38 : f32 to vector<8x128xf32>
    %120 = arith.addf %119, %118 : vector<8x128xf32>
    %121 = arith.divf %119, %120 : vector<8x128xf32>
    %122 = vector.extract_strided_slice %115 {offsets = [0, 128], sizes = [8, 128], strides = [1, 1]} : vector<8x512xf32> to vector<8x128xf32>
    %123 = arith.negf %122 : vector<8x128xf32>
    %124 = math.exp %123 : vector<8x128xf32>
    %cst_39 = arith.constant 1.000000e+00 : f32
    %125 = vector.broadcast %cst_39 : f32 to vector<8x128xf32>
    %126 = arith.addf %125, %124 : vector<8x128xf32>
    %127 = arith.divf %125, %126 : vector<8x128xf32>
    %128 = vector.extract_strided_slice %115 {offsets = [0, 256], sizes = [8, 128], strides = [1, 1]} : vector<8x512xf32> to vector<8x128xf32>
    %129 = math.tanh %128 : vector<8x128xf32>
    %130 = vector.extract_strided_slice %115 {offsets = [0, 384], sizes = [8, 128], strides = [1, 1]} : vector<8x512xf32> to vector<8x128xf32>
    %131 = arith.negf %130 : vector<8x128xf32>
    %132 = math.exp %131 : vector<8x128xf32>
    %cst_40 = arith.constant 1.000000e+00 : f32
    %133 = vector.broadcast %cst_40 : f32 to vector<8x128xf32>
    %134 = arith.addf %133, %132 : vector<8x128xf32>
    %135 = arith.divf %133, %134 : vector<8x128xf32>
    %136 = arith.mulf %127, %100 : vector<8x128xf32>
    %137 = arith.mulf %121, %129 : vector<8x128xf32>
    %138 = arith.addf %136, %137 : vector<8x128xf32>
    %139 = math.tanh %138 : vector<8x128xf32>
    %140 = arith.mulf %135, %139 : vector<8x128xf32>
    %141 = arith.addi %14, %c2_i32 : i32
    %142 = vector.broadcast %141 : i32 to vector<8x1xi32>
    %143 = arith.cmpi sgt, %13, %142 : vector<8x1xi32>
    %144 = vector.shape_cast %143 : vector<8x1xi1> to vector<8x1xi1>
    %145 = vector.broadcast %144 : vector<8x1xi1> to vector<8x128xi1>
    %146 = arith.select %145, %138, %100 : vector<8x128xi1>, vector<8x128xf32>
    %147 = arith.select %145, %140, %101 : vector<8x128xi1>, vector<8x128xf32>
    %148 = arith.extui %145 : vector<8x128xi1> to vector<8x128xi32>
    %149 = arith.sitofp %148 : vector<8x128xi32> to vector<8x128xf32>
    %150 = arith.mulf %140, %149 : vector<8x128xf32>
    %151 = arith.index_cast %c2_i32 : i32 to index
    %c0_41 = arith.constant 0 : index
    %c0_42 = arith.constant 0 : index
    %152 = vector.load %arg9[%151, %c0_41, %c0_42] : memref<8x8x128xf32, #tpu.memory_space<vmem>>, vector<1x8x128xf32>
    %153 = vector.shape_cast %152 : vector<1x8x128xf32> to vector<8x128xf32>
    %154 = vector.shape_cast %150 : vector<8x128xf32> to vector<1x8x128xf32>
    tpu.vector_store %arg9[%151, %c0_41, %c0_42], %154 {strides = array<i32>} : memref<8x8x128xf32, #tpu.memory_space<vmem>>, vector<1x8x128xf32>,
    %c3_i32 = arith.constant 3 : i32
    %c8_i32_43 = arith.constant 8 : i32
    %155 = arith.muli %c3_i32, %c8_i32_43 : i32
    %156 = tpu.assume_multiple %155, 8 : i32
    %157 = arith.index_cast %156 : i32 to index
    %c0_44 = arith.constant 0 : index
    %158 = vector.load %arg12[%157, %c0_44] : memref<64x512xf32, #tpu.memory_space<vmem>>, vector<8x512xf32>
    %159 = arith.truncf %147 : vector<8x128xf32> to vector<8x128xbf16>
    %cst_45 = arith.constant dense<0.000000e+00> : vector<8x512xf32>
    %160 = tpu.matmul %159, %12, %cst_45 {dimension_numbers = #tpu.dot_dimension_numbers<[1], [0], [0], [1], [0, 0, 1, 1], [], []>} : vector<8x128xbf16>, vector<128x512xbf16>, vector<8x512xf32> -> vector<8x512xf32>
    %161 = arith.addf %158, %160 : vector<8x512xf32>
    %162 = vector.extract_strided_slice %161 {offsets = [0, 0], sizes = [8, 128], strides = [1, 1]} : vector<8x512xf32> to vector<8x128xf32>
    %163 = arith.negf %162 : vector<8x128xf32>
    %164 = math.exp %163 : vector<8x128xf32>
    %cst_46 = arith.constant 1.000000e+00 : f32
    %165 = vector.broadcast %cst_46 : f32 to vector<8x128xf32>
    %166 = arith.addf %165, %164 : vector<8x128xf32>
    %167 = arith.divf %165, %166 : vector<8x128xf32>
    %168 = vector.extract_strided_slice %161 {offsets = [0, 128], sizes = [8, 128], strides = [1, 1]} : vector<8x512xf32> to vector<8x128xf32>
    %169 = arith.negf %168 : vector<8x128xf32>
    %170 = math.exp %169 : vector<8x128xf32>
    %cst_47 = arith.constant 1.000000e+00 : f32
    %171 = vector.broadcast %cst_47 : f32 to vector<8x128xf32>
    %172 = arith.addf %171, %170 : vector<8x128xf32>
    %173 = arith.divf %171, %172 : vector<8x128xf32>
    %174 = vector.extract_strided_slice %161 {offsets = [0, 256], sizes = [8, 128], strides = [1, 1]} : vector<8x512xf32> to vector<8x128xf32>
    %175 = math.tanh %174 : vector<8x128xf32>
    %176 = vector.extract_strided_slice %161 {offsets = [0, 384], sizes = [8, 128], strides = [1, 1]} : vector<8x512xf32> to vector<8x128xf32>
    %177 = arith.negf %176 : vector<8x128xf32>
    %178 = math.exp %177 : vector<8x128xf32>
    %cst_48 = arith.constant 1.000000e+00 : f32
    %179 = vector.broadcast %cst_48 : f32 to vector<8x128xf32>
    %180 = arith.addf %179, %178 : vector<8x128xf32>
    %181 = arith.divf %179, %180 : vector<8x128xf32>
    %182 = arith.mulf %173, %146 : vector<8x128xf32>
    %183 = arith.mulf %167, %175 : vector<8x128xf32>
    %184 = arith.addf %182, %183 : vector<8x128xf32>
    %185 = math.tanh %184 : vector<8x128xf32>
    %186 = arith.mulf %181, %185 : vector<8x128xf32>
    %187 = arith.addi %14, %c3_i32 : i32
    %188 = vector.broadcast %187 : i32 to vector<8x1xi32>
    %189 = arith.cmpi sgt, %13, %188 : vector<8x1xi32>
    %190 = vector.shape_cast %189 : vector<8x1xi1> to vector<8x1xi1>
    %191 = vector.broadcast %190 : vector<8x1xi1> to vector<8x128xi1>
    %192 = arith.select %191, %184, %146 : vector<8x128xi1>, vector<8x128xf32>
    %193 = arith.select %191, %186, %147 : vector<8x128xi1>, vector<8x128xf32>
    %194 = arith.extui %191 : vector<8x128xi1> to vector<8x128xi32>
    %195 = arith.sitofp %194 : vector<8x128xi32> to vector<8x128xf32>
    %196 = arith.mulf %186, %195 : vector<8x128xf32>
    %197 = arith.index_cast %c3_i32 : i32 to index
    %c0_49 = arith.constant 0 : index
    %c0_50 = arith.constant 0 : index
    %198 = vector.load %arg9[%197, %c0_49, %c0_50] : memref<8x8x128xf32, #tpu.memory_space<vmem>>, vector<1x8x128xf32>
    %199 = vector.shape_cast %198 : vector<1x8x128xf32> to vector<8x128xf32>
    %200 = vector.shape_cast %196 : vector<8x128xf32> to vector<1x8x128xf32>
    tpu.vector_store %arg9[%197, %c0_49, %c0_50], %200 {strides = array<i32>} : memref<8x8x128xf32, #tpu.memory_space<vmem>>, vector<1x8x128xf32>,
    %c4_i32 = arith.constant 4 : i32
    %c8_i32_51 = arith.constant 8 : i32
    %201 = arith.muli %c4_i32, %c8_i32_51 : i32
    %202 = tpu.assume_multiple %201, 8 : i32
    %203 = arith.index_cast %202 : i32 to index
    %c0_52 = arith.constant 0 : index
    %204 = vector.load %arg12[%203, %c0_52] : memref<64x512xf32, #tpu.memory_space<vmem>>, vector<8x512xf32>
    %205 = arith.truncf %193 : vector<8x128xf32> to vector<8x128xbf16>
    %cst_53 = arith.constant dense<0.000000e+00> : vector<8x512xf32>
    %206 = tpu.matmul %205, %12, %cst_53 {dimension_numbers = #tpu.dot_dimension_numbers<[1], [0], [0], [1], [0, 0, 1, 1], [], []>} : vector<8x128xbf16>, vector<128x512xbf16>, vector<8x512xf32> -> vector<8x512xf32>
    %207 = arith.addf %204, %206 : vector<8x512xf32>
    %208 = vector.extract_strided_slice %207 {offsets = [0, 0], sizes = [8, 128], strides = [1, 1]} : vector<8x512xf32> to vector<8x128xf32>
    %209 = arith.negf %208 : vector<8x128xf32>
    %210 = math.exp %209 : vector<8x128xf32>
    %cst_54 = arith.constant 1.000000e+00 : f32
    %211 = vector.broadcast %cst_54 : f32 to vector<8x128xf32>
    %212 = arith.addf %211, %210 : vector<8x128xf32>
    %213 = arith.divf %211, %212 : vector<8x128xf32>
    %214 = vector.extract_strided_slice %207 {offsets = [0, 128], sizes = [8, 128], strides = [1, 1]} : vector<8x512xf32> to vector<8x128xf32>
    %215 = arith.negf %214 : vector<8x128xf32>
    %216 = math.exp %215 : vector<8x128xf32>
    %cst_55 = arith.constant 1.000000e+00 : f32
    %217 = vector.broadcast %cst_55 : f32 to vector<8x128xf32>
    %218 = arith.addf %217, %216 : vector<8x128xf32>
    %219 = arith.divf %217, %218 : vector<8x128xf32>
    %220 = vector.extract_strided_slice %207 {offsets = [0, 256], sizes = [8, 128], strides = [1, 1]} : vector<8x512xf32> to vector<8x128xf32>
    %221 = math.tanh %220 : vector<8x128xf32>
    %222 = vector.extract_strided_slice %207 {offsets = [0, 384], sizes = [8, 128], strides = [1, 1]} : vector<8x512xf32> to vector<8x128xf32>
    %223 = arith.negf %222 : vector<8x128xf32>
    %224 = math.exp %223 : vector<8x128xf32>
    %cst_56 = arith.constant 1.000000e+00 : f32
    %225 = vector.broadcast %cst_56 : f32 to vector<8x128xf32>
    %226 = arith.addf %225, %224 : vector<8x128xf32>
    %227 = arith.divf %225, %226 : vector<8x128xf32>
    %228 = arith.mulf %219, %192 : vector<8x128xf32>
    %229 = arith.mulf %213, %221 : vector<8x128xf32>
    %230 = arith.addf %228, %229 : vector<8x128xf32>
    %231 = math.tanh %230 : vector<8x128xf32>
    %232 = arith.mulf %227, %231 : vector<8x128xf32>
    %233 = arith.addi %14, %c4_i32 : i32
    %234 = vector.broadcast %233 : i32 to vector<8x1xi32>
    %235 = arith.cmpi sgt, %13, %234 : vector<8x1xi32>
    %236 = vector.shape_cast %235 : vector<8x1xi1> to vector<8x1xi1>
    %237 = vector.broadcast %236 : vector<8x1xi1> to vector<8x128xi1>
    %238 = arith.select %237, %230, %192 : vector<8x128xi1>, vector<8x128xf32>
    %239 = arith.select %237, %232, %193 : vector<8x128xi1>, vector<8x128xf32>
    %240 = arith.extui %237 : vector<8x128xi1> to vector<8x128xi32>
    %241 = arith.sitofp %240 : vector<8x128xi32> to vector<8x128xf32>
    %242 = arith.mulf %232, %241 : vector<8x128xf32>
    %243 = arith.index_cast %c4_i32 : i32 to index
    %c0_57 = arith.constant 0 : index
    %c0_58 = arith.constant 0 : index
    %244 = vector.load %arg9[%243, %c0_57, %c0_58] : memref<8x8x128xf32, #tpu.memory_space<vmem>>, vector<1x8x128xf32>
    %245 = vector.shape_cast %244 : vector<1x8x128xf32> to vector<8x128xf32>
    %246 = vector.shape_cast %242 : vector<8x128xf32> to vector<1x8x128xf32>
    tpu.vector_store %arg9[%243, %c0_57, %c0_58], %246 {strides = array<i32>} : memref<8x8x128xf32, #tpu.memory_space<vmem>>, vector<1x8x128xf32>,
    %c5_i32 = arith.constant 5 : i32
    %c8_i32_59 = arith.constant 8 : i32
    %247 = arith.muli %c5_i32, %c8_i32_59 : i32
    %248 = tpu.assume_multiple %247, 8 : i32
    %249 = arith.index_cast %248 : i32 to index
    %c0_60 = arith.constant 0 : index
    %250 = vector.load %arg12[%249, %c0_60] : memref<64x512xf32, #tpu.memory_space<vmem>>, vector<8x512xf32>
    %251 = arith.truncf %239 : vector<8x128xf32> to vector<8x128xbf16>
    %cst_61 = arith.constant dense<0.000000e+00> : vector<8x512xf32>
    %252 = tpu.matmul %251, %12, %cst_61 {dimension_numbers = #tpu.dot_dimension_numbers<[1], [0], [0], [1], [0, 0, 1, 1], [], []>} : vector<8x128xbf16>, vector<128x512xbf16>, vector<8x512xf32> -> vector<8x512xf32>
    %253 = arith.addf %250, %252 : vector<8x512xf32>
    %254 = vector.extract_strided_slice %253 {offsets = [0, 0], sizes = [8, 128], strides = [1, 1]} : vector<8x512xf32> to vector<8x128xf32>
    %255 = arith.negf %254 : vector<8x128xf32>
    %256 = math.exp %255 : vector<8x128xf32>
    %cst_62 = arith.constant 1.000000e+00 : f32
    %257 = vector.broadcast %cst_62 : f32 to vector<8x128xf32>
    %258 = arith.addf %257, %256 : vector<8x128xf32>
    %259 = arith.divf %257, %258 : vector<8x128xf32>
    %260 = vector.extract_strided_slice %253 {offsets = [0, 128], sizes = [8, 128], strides = [1, 1]} : vector<8x512xf32> to vector<8x128xf32>
    %261 = arith.negf %260 : vector<8x128xf32>
    %262 = math.exp %261 : vector<8x128xf32>
    %cst_63 = arith.constant 1.000000e+00 : f32
    %263 = vector.broadcast %cst_63 : f32 to vector<8x128xf32>
    %264 = arith.addf %263, %262 : vector<8x128xf32>
    %265 = arith.divf %263, %264 : vector<8x128xf32>
    %266 = vector.extract_strided_slice %253 {offsets = [0, 256], sizes = [8, 128], strides = [1, 1]} : vector<8x512xf32> to vector<8x128xf32>
    %267 = math.tanh %266 : vector<8x128xf32>
    %268 = vector.extract_strided_slice %253 {offsets = [0, 384], sizes = [8, 128], strides = [1, 1]} : vector<8x512xf32> to vector<8x128xf32>
    %269 = arith.negf %268 : vector<8x128xf32>
    %270 = math.exp %269 : vector<8x128xf32>
    %cst_64 = arith.constant 1.000000e+00 : f32
    %271 = vector.broadcast %cst_64 : f32 to vector<8x128xf32>
    %272 = arith.addf %271, %270 : vector<8x128xf32>
    %273 = arith.divf %271, %272 : vector<8x128xf32>
    %274 = arith.mulf %265, %238 : vector<8x128xf32>
    %275 = arith.mulf %259, %267 : vector<8x128xf32>
    %276 = arith.addf %274, %275 : vector<8x128xf32>
    %277 = math.tanh %276 : vector<8x128xf32>
    %278 = arith.mulf %273, %277 : vector<8x128xf32>
    %279 = arith.addi %14, %c5_i32 : i32
    %280 = vector.broadcast %279 : i32 to vector<8x1xi32>
    %281 = arith.cmpi sgt, %13, %280 : vector<8x1xi32>
    %282 = vector.shape_cast %281 : vector<8x1xi1> to vector<8x1xi1>
    %283 = vector.broadcast %282 : vector<8x1xi1> to vector<8x128xi1>
    %284 = arith.select %283, %276, %238 : vector<8x128xi1>, vector<8x128xf32>
    %285 = arith.select %283, %278, %239 : vector<8x128xi1>, vector<8x128xf32>
    %286 = arith.extui %283 : vector<8x128xi1> to vector<8x128xi32>
    %287 = arith.sitofp %286 : vector<8x128xi32> to vector<8x128xf32>
    %288 = arith.mulf %278, %287 : vector<8x128xf32>
    %289 = arith.index_cast %c5_i32 : i32 to index
    %c0_65 = arith.constant 0 : index
    %c0_66 = arith.constant 0 : index
    %290 = vector.load %arg9[%289, %c0_65, %c0_66] : memref<8x8x128xf32, #tpu.memory_space<vmem>>, vector<1x8x128xf32>
    %291 = vector.shape_cast %290 : vector<1x8x128xf32> to vector<8x128xf32>
    %292 = vector.shape_cast %288 : vector<8x128xf32> to vector<1x8x128xf32>
    tpu.vector_store %arg9[%289, %c0_65, %c0_66], %292 {strides = array<i32>} : memref<8x8x128xf32, #tpu.memory_space<vmem>>, vector<1x8x128xf32>,
    %c6_i32 = arith.constant 6 : i32
    %c8_i32_67 = arith.constant 8 : i32
    %293 = arith.muli %c6_i32, %c8_i32_67 : i32
    %294 = tpu.assume_multiple %293, 8 : i32
    %295 = arith.index_cast %294 : i32 to index
    %c0_68 = arith.constant 0 : index
    %296 = vector.load %arg12[%295, %c0_68] : memref<64x512xf32, #tpu.memory_space<vmem>>, vector<8x512xf32>
    %297 = arith.truncf %285 : vector<8x128xf32> to vector<8x128xbf16>
    %cst_69 = arith.constant dense<0.000000e+00> : vector<8x512xf32>
    %298 = tpu.matmul %297, %12, %cst_69 {dimension_numbers = #tpu.dot_dimension_numbers<[1], [0], [0], [1], [0, 0, 1, 1], [], []>} : vector<8x128xbf16>, vector<128x512xbf16>, vector<8x512xf32> -> vector<8x512xf32>
    %299 = arith.addf %296, %298 : vector<8x512xf32>
    %300 = vector.extract_strided_slice %299 {offsets = [0, 0], sizes = [8, 128], strides = [1, 1]} : vector<8x512xf32> to vector<8x128xf32>
    %301 = arith.negf %300 : vector<8x128xf32>
    %302 = math.exp %301 : vector<8x128xf32>
    %cst_70 = arith.constant 1.000000e+00 : f32
    %303 = vector.broadcast %cst_70 : f32 to vector<8x128xf32>
    %304 = arith.addf %303, %302 : vector<8x128xf32>
    %305 = arith.divf %303, %304 : vector<8x128xf32>
    %306 = vector.extract_strided_slice %299 {offsets = [0, 128], sizes = [8, 128], strides = [1, 1]} : vector<8x512xf32> to vector<8x128xf32>
    %307 = arith.negf %306 : vector<8x128xf32>
    %308 = math.exp %307 : vector<8x128xf32>
    %cst_71 = arith.constant 1.000000e+00 : f32
    %309 = vector.broadcast %cst_71 : f32 to vector<8x128xf32>
    %310 = arith.addf %309, %308 : vector<8x128xf32>
    %311 = arith.divf %309, %310 : vector<8x128xf32>
    %312 = vector.extract_strided_slice %299 {offsets = [0, 256], sizes = [8, 128], strides = [1, 1]} : vector<8x512xf32> to vector<8x128xf32>
    %313 = math.tanh %312 : vector<8x128xf32>
    %314 = vector.extract_strided_slice %299 {offsets = [0, 384], sizes = [8, 128], strides = [1, 1]} : vector<8x512xf32> to vector<8x128xf32>
    %315 = arith.negf %314 : vector<8x128xf32>
    %316 = math.exp %315 : vector<8x128xf32>
    %cst_72 = arith.constant 1.000000e+00 : f32
    %317 = vector.broadcast %cst_72 : f32 to vector<8x128xf32>
    %318 = arith.addf %317, %316 : vector<8x128xf32>
    %319 = arith.divf %317, %318 : vector<8x128xf32>
    %320 = arith.mulf %311, %284 : vector<8x128xf32>
    %321 = arith.mulf %305, %313 : vector<8x128xf32>
    %322 = arith.addf %320, %321 : vector<8x128xf32>
    %323 = math.tanh %322 : vector<8x128xf32>
    %324 = arith.mulf %319, %323 : vector<8x128xf32>
    %325 = arith.addi %14, %c6_i32 : i32
    %326 = vector.broadcast %325 : i32 to vector<8x1xi32>
    %327 = arith.cmpi sgt, %13, %326 : vector<8x1xi32>
    %328 = vector.shape_cast %327 : vector<8x1xi1> to vector<8x1xi1>
    %329 = vector.broadcast %328 : vector<8x1xi1> to vector<8x128xi1>
    %330 = arith.select %329, %322, %284 : vector<8x128xi1>, vector<8x128xf32>
    %331 = arith.select %329, %324, %285 : vector<8x128xi1>, vector<8x128xf32>
    %332 = arith.extui %329 : vector<8x128xi1> to vector<8x128xi32>
    %333 = arith.sitofp %332 : vector<8x128xi32> to vector<8x128xf32>
    %334 = arith.mulf %324, %333 : vector<8x128xf32>
    %335 = arith.index_cast %c6_i32 : i32 to index
    %c0_73 = arith.constant 0 : index
    %c0_74 = arith.constant 0 : index
    %336 = vector.load %arg9[%335, %c0_73, %c0_74] : memref<8x8x128xf32, #tpu.memory_space<vmem>>, vector<1x8x128xf32>
    %337 = vector.shape_cast %336 : vector<1x8x128xf32> to vector<8x128xf32>
    %338 = vector.shape_cast %334 : vector<8x128xf32> to vector<1x8x128xf32>
    tpu.vector_store %arg9[%335, %c0_73, %c0_74], %338 {strides = array<i32>} : memref<8x8x128xf32, #tpu.memory_space<vmem>>, vector<1x8x128xf32>,
    %c7_i32 = arith.constant 7 : i32
    %c8_i32_75 = arith.constant 8 : i32
    %339 = arith.muli %c7_i32, %c8_i32_75 : i32
    %340 = tpu.assume_multiple %339, 8 : i32
    %341 = arith.index_cast %340 : i32 to index
    %c0_76 = arith.constant 0 : index
    %342 = vector.load %arg12[%341, %c0_76] : memref<64x512xf32, #tpu.memory_space<vmem>>, vector<8x512xf32>
    %343 = arith.truncf %331 : vector<8x128xf32> to vector<8x128xbf16>
    %cst_77 = arith.constant dense<0.000000e+00> : vector<8x512xf32>
    %344 = tpu.matmul %343, %12, %cst_77 {dimension_numbers = #tpu.dot_dimension_numbers<[1], [0], [0], [1], [0, 0, 1, 1], [], []>} : vector<8x128xbf16>, vector<128x512xbf16>, vector<8x512xf32> -> vector<8x512xf32>
    %345 = arith.addf %342, %344 : vector<8x512xf32>
    %346 = vector.extract_strided_slice %345 {offsets = [0, 0], sizes = [8, 128], strides = [1, 1]} : vector<8x512xf32> to vector<8x128xf32>
    %347 = arith.negf %346 : vector<8x128xf32>
    %348 = math.exp %347 : vector<8x128xf32>
    %cst_78 = arith.constant 1.000000e+00 : f32
    %349 = vector.broadcast %cst_78 : f32 to vector<8x128xf32>
    %350 = arith.addf %349, %348 : vector<8x128xf32>
    %351 = arith.divf %349, %350 : vector<8x128xf32>
    %352 = vector.extract_strided_slice %345 {offsets = [0, 128], sizes = [8, 128], strides = [1, 1]} : vector<8x512xf32> to vector<8x128xf32>
    %353 = arith.negf %352 : vector<8x128xf32>
    %354 = math.exp %353 : vector<8x128xf32>
    %cst_79 = arith.constant 1.000000e+00 : f32
    %355 = vector.broadcast %cst_79 : f32 to vector<8x128xf32>
    %356 = arith.addf %355, %354 : vector<8x128xf32>
    %357 = arith.divf %355, %356 : vector<8x128xf32>
    %358 = vector.extract_strided_slice %345 {offsets = [0, 256], sizes = [8, 128], strides = [1, 1]} : vector<8x512xf32> to vector<8x128xf32>
    %359 = math.tanh %358 : vector<8x128xf32>
    %360 = vector.extract_strided_slice %345 {offsets = [0, 384], sizes = [8, 128], strides = [1, 1]} : vector<8x512xf32> to vector<8x128xf32>
    %361 = arith.negf %360 : vector<8x128xf32>
    %362 = math.exp %361 : vector<8x128xf32>
    %cst_80 = arith.constant 1.000000e+00 : f32
    %363 = vector.broadcast %cst_80 : f32 to vector<8x128xf32>
    %364 = arith.addf %363, %362 : vector<8x128xf32>
    %365 = arith.divf %363, %364 : vector<8x128xf32>
    %366 = arith.mulf %357, %330 : vector<8x128xf32>
    %367 = arith.mulf %351, %359 : vector<8x128xf32>
    %368 = arith.addf %366, %367 : vector<8x128xf32>
    %369 = math.tanh %368 : vector<8x128xf32>
    %370 = arith.mulf %365, %369 : vector<8x128xf32>
    %371 = arith.addi %14, %c7_i32 : i32
    %372 = vector.broadcast %371 : i32 to vector<8x1xi32>
    %373 = arith.cmpi sgt, %13, %372 : vector<8x1xi32>
    %374 = vector.shape_cast %373 : vector<8x1xi1> to vector<8x1xi1>
    %375 = vector.broadcast %374 : vector<8x1xi1> to vector<8x128xi1>
    %376 = arith.select %375, %368, %330 : vector<8x128xi1>, vector<8x128xf32>
    %377 = arith.select %375, %370, %331 : vector<8x128xi1>, vector<8x128xf32>
    %378 = arith.extui %375 : vector<8x128xi1> to vector<8x128xi32>
    %379 = arith.sitofp %378 : vector<8x128xi32> to vector<8x128xf32>
    %380 = arith.mulf %370, %379 : vector<8x128xf32>
    %381 = arith.index_cast %c7_i32 : i32 to index
    %c0_81 = arith.constant 0 : index
    %c0_82 = arith.constant 0 : index
    %382 = vector.load %arg9[%381, %c0_81, %c0_82] : memref<8x8x128xf32, #tpu.memory_space<vmem>>, vector<1x8x128xf32>
    %383 = vector.shape_cast %382 : vector<1x8x128xf32> to vector<8x128xf32>
    %384 = vector.shape_cast %380 : vector<8x128xf32> to vector<1x8x128xf32>
    tpu.vector_store %arg9[%381, %c0_81, %c0_82], %384 {strides = array<i32>} : memref<8x8x128xf32, #tpu.memory_space<vmem>>, vector<1x8x128xf32>,
    %c8_i32_83 = arith.constant 8 : i32
    %c0_84 = arith.constant 0 : index
    %c0_85 = arith.constant 0 : index
    %385 = vector.load %arg13[%c0_84, %c0_85] : memref<8x128xf32, #tpu.memory_space<vmem>>, vector<8x128xf32>
    tpu.vector_store %arg13[%c0_84, %c0_85], %377 {strides = array<i32>} : memref<8x128xf32, #tpu.memory_space<vmem>>, vector<8x128xf32>,
    %c0_86 = arith.constant 0 : index
    %c0_87 = arith.constant 0 : index
    %386 = vector.load %arg14[%c0_86, %c0_87] : memref<8x128xf32, #tpu.memory_space<vmem>>, vector<8x128xf32>
    tpu.vector_store %arg14[%c0_86, %c0_87], %376 {strides = array<i32>} : memref<8x128xf32, #tpu.memory_space<vmem>>, vector<8x128xf32>,
    %c0_i32_88 = arith.constant 0 : i32
    %387 = arith.cmpi eq, %arg1, %c0_i32_88 : i32
    %388 = arith.extui %387 : i1 to i32
    %c0_i32_89 = arith.constant 0 : i32
    %389 = arith.cmpi ne, %388, %c0_i32_89 : i32
    scf.if %389 {
      %c0_90 = arith.constant 0 : index
      %c0_91 = arith.constant 0 : index
      %390 = vector.load %arg10[%c0_90, %c0_91] : memref<8x128xf32, #tpu.memory_space<vmem>>, vector<8x128xf32>
      tpu.vector_store %arg10[%c0_90, %c0_91], %377 {strides = array<i32>} : memref<8x128xf32, #tpu.memory_space<vmem>>, vector<8x128xf32>,
      %c0_92 = arith.constant 0 : index
      %c0_93 = arith.constant 0 : index
      %391 = vector.load %arg11[%c0_92, %c0_93] : memref<8x128xf32, #tpu.memory_space<vmem>>, vector<8x128xf32>
      tpu.vector_store %arg11[%c0_92, %c0_93], %376 {strides = array<i32>} : memref<8x128xf32, #tpu.memory_space<vmem>>, vector<8x128xf32>,
    } else {
    }
    return
  }
  func.func @transform_0(%arg0: i32, %arg1: i32) -> (i32, i32, i32, i32) {
    %c0_i32 = arith.constant 0 : i32
    %c0_i32_0 = arith.constant 0 : i32
    %c0_i32_1 = arith.constant 0 : i32
    return %arg0, %arg1, %c0_i32, %c0_i32_0 : i32, i32, i32, i32
  }
  func.func @transform_1(%arg0: i32, %arg1: i32) -> (i32, i32) {
    %c0_i32 = arith.constant 0 : i32
    %c0_i32_0 = arith.constant 0 : i32
    %c0_i32_1 = arith.constant 0 : i32
    return %c0_i32, %c0_i32_0 : i32, i32
  }
  func.func @transform_2(%arg0: i32, %arg1: i32) -> (i32, i32) {
    %c0_i32 = arith.constant 0 : i32
    %c0_i32_0 = arith.constant 0 : i32
    %c0_i32_1 = arith.constant 0 : i32
    return %c0_i32, %c0_i32_0 : i32, i32
  }
  func.func @transform_3(%arg0: i32, %arg1: i32) -> (i32, i32) {
    %c0_i32 = arith.constant 0 : i32
    %c0_i32_0 = arith.constant 0 : i32
    %c0_i32_1 = arith.constant 0 : i32
    return %c0_i32, %c0_i32_0 : i32, i32
  }
  func.func @transform_4(%arg0: i32, %arg1: i32) -> (i32, i32) {
    %c0_i32 = arith.constant 0 : i32
    %c0_i32_0 = arith.constant 0 : i32
    return %arg0, %c0_i32 : i32, i32
  }
  func.func @transform_5(%arg0: i32, %arg1: i32) -> (i32, i32) {
    %c0_i32 = arith.constant 0 : i32
    %c0_i32_0 = arith.constant 0 : i32
    return %arg0, %c0_i32 : i32, i32
  }
  func.func @transform_6(%arg0: i32, %arg1: i32) -> (i32, i32) {
    %c0_i32 = arith.constant 0 : i32
    %c0_i32_0 = arith.constant 0 : i32
    return %arg0, %c0_i32 : i32, i32
  }
  func.func @transform_7(%arg0: i32, %arg1: i32) -> (i32, i32, i32) {
    %c0_i32 = arith.constant 0 : i32
    %c0_i32_0 = arith.constant 0 : i32
    return %arg1, %arg0, %c0_i32 : i32, i32, i32
  }
  func.func @transform_8(%arg0: i32, %arg1: i32) -> (i32, i32) {
    %c0_i32 = arith.constant 0 : i32
    %c0_i32_0 = arith.constant 0 : i32
    return %arg0, %c0_i32 : i32, i32
  }
  func.func @transform_9(%arg0: i32, %arg1: i32) -> (i32, i32) {
    %c0_i32 = arith.constant 0 : i32
    %c0_i32_0 = arith.constant 0 : i32
    return %arg0, %c0_i32 : i32, i32
  }
}

module attributes {stable_mosaic.version = 11 : i64} {
  func.func @_lstm_chunk_kernel(%arg0: i32, %arg1: i32, %arg2: memref<1x1x64x16xf32, #tpu.memory_space<vmem>>, %arg3: memref<16x512xbf16, #tpu.memory_space<vmem>>, %arg4: memref<128x512xbf16, #tpu.memory_space<vmem>>, %arg5: memref<1x512xf32, #tpu.memory_space<vmem>>, %arg6: memref<8x128xf32, #tpu.memory_space<vmem>>, %arg7: memref<8x128xf32, #tpu.memory_space<vmem>>, %arg8: memref<8x1xi32, #tpu.memory_space<vmem>>, %arg9: memref<8x8x128xf32, #tpu.memory_space<vmem>>, %arg10: memref<8x128xf32, #tpu.memory_space<vmem>>, %arg11: memref<8x128xf32, #tpu.memory_space<vmem>>, %arg12: memref<64x512xf32, #tpu.memory_space<vmem>>, %arg13: memref<8x128xf32, #tpu.memory_space<vmem>>, %arg14: memref<8x128xf32, #tpu.memory_space<vmem>>) attributes {dimension_semantics = [#tpu.dimension_semantics<parallel>, #tpu.dimension_semantics<arbitrary>], iteration_bounds = array<i64: 2, 1>, scalar_prefetch = 0 : i64, scratch_operands = 3 : i64, tpu.core_type = #tpu.core_type<tc>, window_params = [{transform_indices = @transform_0, window_bounds = array<i64: 1, 1, 64, 16>}, {pipeline_mode = #tpu.pipeline_mode<synchronous>, transform_indices = @transform_1, window_bounds = array<i64: 16, 512>}, {pipeline_mode = #tpu.pipeline_mode<synchronous>, transform_indices = @transform_2, window_bounds = array<i64: 128, 512>}, {pipeline_mode = #tpu.pipeline_mode<synchronous>, transform_indices = @transform_3, window_bounds = array<i64: 1, 512>}, {transform_indices = @transform_4, window_bounds = array<i64: 8, 128>}, {transform_indices = @transform_5, window_bounds = array<i64: 8, 128>}, {transform_indices = @transform_6, window_bounds = array<i64: 8, 1>}, {transform_indices = @transform_7, window_bounds = array<i64: 8, 8, 128>}, {transform_indices = @transform_8, window_bounds = array<i64: 8, 128>}, {transform_indices = @transform_9, window_bounds = array<i64: 8, 128>}]} {
    %c0_i32 = arith.constant 0 : i32
    %0 = arith.cmpi eq, %arg1, %c0_i32 : i32
    %1 = arith.extui %0 : i1 to i32
    %c0_i32_0 = arith.constant 0 : i32
    %2 = arith.cmpi ne, %1, %c0_i32_0 : i32
    scf.if %2 {
      %c0_90 = arith.constant 0 : index
      %c0_91 = arith.constant 0 : index
      %390 = vector.load %arg6[%c0_90, %c0_91] : memref<8x128xf32, #tpu.memory_space<vmem>>, vector<8x128xf32>
      %c0_92 = arith.constant 0 : index
      %c0_93 = arith.constant 0 : index
      %391 = vector.load %arg13[%c0_92, %c0_93] : memref<8x128xf32, #tpu.memory_space<vmem>>, vector<8x128xf32>
      tpu.vector_store %arg13[%c0_92, %c0_93], %390 {strides = array<i32>} : memref<8x128xf32, #tpu.memory_space<vmem>>, vector<8x128xf32>,
      %c0_94 = arith.constant 0 : index
      %c0_95 = arith.constant 0 : index
      %392 = vector.load %arg7[%c0_94, %c0_95] : memref<8x128xf32, #tpu.memory_space<vmem>>, vector<8x128xf32>
      %c0_96 = arith.constant 0 : index
      %c0_97 = arith.constant 0 : index
      %393 = vector.load %arg14[%c0_96, %c0_97] : memref<8x128xf32, #tpu.memory_space<vmem>>, vector<8x128xf32>
      tpu.vector_store %arg14[%c0_96, %c0_97], %392 {strides = array<i32>} : memref<8x128xf32, #tpu.memory_space<vmem>>, vector<8x128xf32>,
    } else {
    }
    %c0 = arith.constant 0 : index
    %c0_1 = arith.constant 0 : index
    %c0_2 = arith.constant 0 : index
    %c0_3 = arith.constant 0 : index
    %3 = vector.load %arg2[%c0, %c0_1, %c0_2, %c0_3] : memref<1x1x64x16xf32, #tpu.memory_space<vmem>>, vector<1x1x64x16xf32>
    %4 = vector.shape_cast %3 : vector<1x1x64x16xf32> to vector<64x16xf32>
    %5 = arith.truncf %4 : vector<64x16xf32> to vector<64x16xbf16>
    %c0_4 = arith.constant 0 : index
    %c0_5 = arith.constant 0 : index
    %6 = vector.load %arg3[%c0_4, %c0_5] : memref<16x512xbf16, #tpu.memory_space<vmem>>, vector<16x512xbf16>
    %cst = arith.constant dense<0.000000e+00> : vector<64x512xf32>
    %7 = tpu.matmul %5, %6, %cst {dimension_numbers = #tpu.dot_dimension_numbers<[1], [0], [0], [1], [0, 0, 1, 1], [], []>} : vector<64x16xbf16>, vector<16x512xbf16>, vector<64x512xf32> -> vector<64x512xf32>
    %c0_6 = arith.constant 0 : index
    %c0_7 = arith.constant 0 : index
    %8 = vector.load %arg5[%c0_6, %c0_7] : memref<1x512xf32, #tpu.memory_space<vmem>>, vector<1x512xf32>
    %9 = vector.broadcast %8 : vector<1x512xf32> to vector<64x512xf32>
    %10 = arith.addf %7, %9 : vector<64x512xf32>
    %c0_8 = arith.constant 0 : index
    %c0_9 = arith.constant 0 : index
    %11 = vector.load %arg12[%c0_8, %c0_9] : memref<64x512xf32, #tpu.memory_space<vmem>>, vector<64x512xf32>
    tpu.vector_store %arg12[%c0_8, %c0_9], %10 {strides = array<i32>} : memref<64x512xf32, #tpu.memory_space<vmem>>, vector<64x512xf32>,
    %c0_10 = arith.constant 0 : index
    %c0_11 = arith.constant 0 : index
    %12 = vector.load %arg4[%c0_10, %c0_11] : memref<128x512xbf16, #tpu.memory_space<vmem>>, vector<128x512xbf16>
    %c0_12 = arith.constant 0 : index
    %c0_13 = arith.constant 0 : index
    %13 = vector.load %arg8[%c0_12, %c0_13] : memref<8x1xi32, #tpu.memory_space<vmem>>, vector<8x1xi32>
    %c8_i32 = arith.constant 8 : i32
    %14 = arith.muli %arg1, %c8_i32 : i32
    %c0_14 = arith.constant 0 : index
    %c0_15 = arith.constant 0 : index
    %15 = vector.load %arg13[%c0_14, %c0_15] : memref<8x128xf32, #tpu.memory_space<vmem>>, vector<8x128xf32>
    %c0_16 = arith.constant 0 : index
    %c0_17 = arith.constant 0 : index
    %16 = vector.load %arg14[%c0_16, %c0_17] : memref<8x128xf32, #tpu.memory_space<vmem>>, vector<8x128xf32>
    %c0_i32_18 = arith.constant 0 : i32
    %c8_i32_19 = arith.constant 8 : i32
    %17 = arith.muli %c0_i32_18, %c8_i32_19 : i32
    %18 = tpu.assume_multiple %17, 8 : i32
    %19 = arith.index_cast %18 : i32 to index
    %c0_20 = arith.constant 0 : index
    %20 = vector.load %arg12[%19, %c0_20] : memref<64x512xf32, #tpu.memory_space<vmem>>, vector<8x512xf32>
    %21 = arith.truncf %15 : vector<8x128xf32> to vector<8x128xbf16>
    %cst_21 = arith.constant dense<0.000000e+00> : vector<8x512xf32>
    %22 = tpu.matmul %21, %12, %cst_21 {dimension_numbers = #tpu.dot_dimension_numbers<[1], [0], [0], [1], [0, 0, 1, 1], [], []>} : vector<8x128xbf16>, vector<128x512xbf16>, vector<8x512xf32> -> vector<8x512xf32>
    %23 = arith.addf %20, %22 : vector<8x512xf32>
    %24 = vector.extract_strided_slice %23 {offsets = [0, 0], sizes = [8, 128], strides = [1, 1]} : vector<8x512xf32> to vector<8x128xf32>
    %25 = arith.negf %24 : vector<8x128xf32>
    %26 = math.exp %25 : vector<8x128xf32>
    %cst_22 = arith.constant 1.000000e+00 : f32
    %27 = vector.broadcast %cst_22 : f32 to vector<8x128xf32>
    %28 = arith.addf %27, %26 : vector<8x128xf32>
    %29 = arith.divf %27, %28 : vector<8x128xf32>
    %30 = vector.extract_strided_slice %23 {offsets = [0, 128], sizes = [8, 128], strides = [1, 1]} : vector<8x512xf32> to vector<8x128xf32>
    %31 = arith.negf %30 : vector<8x128xf32>
    %32 = math.exp %31 : vector<8x128xf32>
    %cst_23 = arith.constant 1.000000e+00 : f32
    %33 = vector.broadcast %cst_23 : f32 to vector<8x128xf32>
    %34 = arith.addf %33, %32 : vector<8x128xf32>
    %35 = arith.divf %33, %34 : vector<8x128xf32>
    %36 = vector.extract_strided_slice %23 {offsets = [0, 256], sizes = [8, 128], strides = [1, 1]} : vector<8x512xf32> to vector<8x128xf32>
    %37 = math.tanh %36 : vector<8x128xf32>
    %38 = vector.extract_strided_slice %23 {offsets = [0, 384], sizes = [8, 128], strides = [1, 1]} : vector<8x512xf32> to vector<8x128xf32>
    %39 = arith.negf %38 : vector<8x128xf32>
    %40 = math.exp %39 : vector<8x128xf32>
    %cst_24 = arith.constant 1.000000e+00 : f32
    %41 = vector.broadcast %cst_24 : f32 to vector<8x128xf32>
    %42 = arith.addf %41, %40 : vector<8x128xf32>
    %43 = arith.divf %41, %42 : vector<8x128xf32>
    %44 = arith.mulf %35, %16 : vector<8x128xf32>
    %45 = arith.mulf %29, %37 : vector<8x128xf32>
    %46 = arith.addf %44, %45 : vector<8x128xf32>
    %47 = math.tanh %46 : vector<8x128xf32>
    %48 = arith.mulf %43, %47 : vector<8x128xf32>
    %49 = arith.addi %14, %c0_i32_18 : i32
    %50 = vector.broadcast %49 : i32 to vector<8x1xi32>
    %51 = arith.cmpi sgt, %13, %50 : vector<8x1xi32>
    %52 = vector.shape_cast %51 : vector<8x1xi1> to vector<8x1xi1>
    %53 = vector.broadcast %52 : vector<8x1xi1> to vector<8x128xi1>
    %54 = arith.select %53, %46, %16 : vector<8x128xi1>, vector<8x128xf32>
    %55 = arith.select %53, %48, %15 : vector<8x128xi1>, vector<8x128xf32>
    %56 = arith.extui %53 : vector<8x128xi1> to vector<8x128xi32>
    %57 = arith.sitofp %56 : vector<8x128xi32> to vector<8x128xf32>
    %58 = arith.mulf %48, %57 : vector<8x128xf32>
    %59 = arith.index_cast %c0_i32_18 : i32 to index
    %c0_25 = arith.constant 0 : index
    %c0_26 = arith.constant 0 : index
    %60 = vector.load %arg9[%59, %c0_25, %c0_26] : memref<8x8x128xf32, #tpu.memory_space<vmem>>, vector<1x8x128xf32>
    %61 = vector.shape_cast %60 : vector<1x8x128xf32> to vector<8x128xf32>
    %62 = vector.shape_cast %58 : vector<8x128xf32> to vector<1x8x128xf32>
    tpu.vector_store %arg9[%59, %c0_25, %c0_26], %62 {strides = array<i32>} : memref<8x8x128xf32, #tpu.memory_space<vmem>>, vector<1x8x128xf32>,
    %c1_i32 = arith.constant 1 : i32
    %c8_i32_27 = arith.constant 8 : i32
    %63 = arith.muli %c1_i32, %c8_i32_27 : i32
    %64 = tpu.assume_multiple %63, 8 : i32
    %65 = arith.index_cast %64 : i32 to index
    %c0_28 = arith.constant 0 : index
    %66 = vector.load %arg12[%65, %c0_28] : memref<64x512xf32, #tpu.memory_space<vmem>>, vector<8x512xf32>
    %67 = arith.truncf %55 : vector<8x128xf32> to vector<8x128xbf16>
    %cst_29 = arith.constant dense<0.000000e+00> : vector<8x512xf32>
    %68 = tpu.matmul %67, %12, %cst_29 {dimension_numbers = #tpu.dot_dimension_numbers<[1], [0], [0], [1], [0, 0, 1, 1], [], []>} : vector<8x128xbf16>, vector<128x512xbf16>, vector<8x512xf32> -> vector<8x512xf32>
    %69 = arith.addf %66, %68 : vector<8x512xf32>
    %70 = vector.extract_strided_slice %69 {offsets = [0, 0], sizes = [8, 128], strides = [1, 1]} : vector<8x512xf32> to vector<8x128xf32>
    %71 = arith.negf %70 : vector<8x128xf32>
    %72 = math.exp %71 : vector<8x128xf32>
    %cst_30 = arith.constant 1.000000e+00 : f32
    %73 = vector.broadcast %cst_30 : f32 to vector<8x128xf32>
    %74 = arith.addf %73, %72 : vector<8x128xf32>
    %75 = arith.divf %73, %74 : vector<8x128xf32>
    %76 = vector.extract_strided_slice %69 {offsets = [0, 128], sizes = [8, 128], strides = [1, 1]} : vector<8x512xf32> to vector<8x128xf32>
    %77 = arith.negf %76 : vector<8x128xf32>
    %78 = math.exp %77 : vector<8x128xf32>
    %cst_31 = arith.constant 1.000000e+00 : f32
    %79 = vector.broadcast %cst_31 : f32 to vector<8x128xf32>
    %80 = arith.addf %79, %78 : vector<8x128xf32>
    %81 = arith.divf %79, %80 : vector<8x128xf32>
    %82 = vector.extract_strided_slice %69 {offsets = [0, 256], sizes = [8, 128], strides = [1, 1]} : vector<8x512xf32> to vector<8x128xf32>
    %83 = math.tanh %82 : vector<8x128xf32>
    %84 = vector.extract_strided_slice %69 {offsets = [0, 384], sizes = [8, 128], strides = [1, 1]} : vector<8x512xf32> to vector<8x128xf32>
    %85 = arith.negf %84 : vector<8x128xf32>
    %86 = math.exp %85 : vector<8x128xf32>
    %cst_32 = arith.constant 1.000000e+00 : f32
    %87 = vector.broadcast %cst_32 : f32 to vector<8x128xf32>
    %88 = arith.addf %87, %86 : vector<8x128xf32>
    %89 = arith.divf %87, %88 : vector<8x128xf32>
    %90 = arith.mulf %81, %54 : vector<8x128xf32>
    %91 = arith.mulf %75, %83 : vector<8x128xf32>
    %92 = arith.addf %90, %91 : vector<8x128xf32>
    %93 = math.tanh %92 : vector<8x128xf32>
    %94 = arith.mulf %89, %93 : vector<8x128xf32>
    %95 = arith.addi %14, %c1_i32 : i32
    %96 = vector.broadcast %95 : i32 to vector<8x1xi32>
    %97 = arith.cmpi sgt, %13, %96 : vector<8x1xi32>
    %98 = vector.shape_cast %97 : vector<8x1xi1> to vector<8x1xi1>
    %99 = vector.broadcast %98 : vector<8x1xi1> to vector<8x128xi1>
    %100 = arith.select %99, %92, %54 : vector<8x128xi1>, vector<8x128xf32>
    %101 = arith.select %99, %94, %55 : vector<8x128xi1>, vector<8x128xf32>
    %102 = arith.extui %99 : vector<8x128xi1> to vector<8x128xi32>
    %103 = arith.sitofp %102 : vector<8x128xi32> to vector<8x128xf32>
    %104 = arith.mulf %94, %103 : vector<8x128xf32>
    %105 = arith.index_cast %c1_i32 : i32 to index
    %c0_33 = arith.constant 0 : index
    %c0_34 = arith.constant 0 : index
    %106 = vector.load %arg9[%105, %c0_33, %c0_34] : memref<8x8x128xf32, #tpu.memory_space<vmem>>, vector<1x8x128xf32>
    %107 = vector.shape_cast %106 : vector<1x8x128xf32> to vector<8x128xf32>
    %108 = vector.shape_cast %104 : vector<8x128xf32> to vector<1x8x128xf32>
    tpu.vector_store %arg9[%105, %c0_33, %c0_34], %108 {strides = array<i32>} : memref<8x8x128xf32, #tpu.memory_space<vmem>>, vector<1x8x128xf32>,
    %c2_i32 = arith.constant 2 : i32
    %c8_i32_35 = arith.constant 8 : i32
    %109 = arith.muli %c2_i32, %c8_i32_35 : i32
    %110 = tpu.assume_multiple %109, 8 : i32
    %111 = arith.index_cast %110 : i32 to index
    %c0_36 = arith.constant 0 : index
    %112 = vector.load %arg12[%111, %c0_36] : memref<64x512xf32, #tpu.memory_space<vmem>>, vector<8x512xf32>
    %113 = arith.truncf %101 : vector<8x128xf32> to vector<8x128xbf16>
    %cst_37 = arith.constant dense<0.000000e+00> : vector<8x512xf32>
    %114 = tpu.matmul %113, %12, %cst_37 {dimension_numbers = #tpu.dot_dimension_numbers<[1], [0], [0], [1], [0, 0, 1, 1], [], []>} : vector<8x128xbf16>, vector<128x512xbf16>, vector<8x512xf32> -> vector<8x512xf32>
    %115 = arith.addf %112, %114 : vector<8x512xf32>
    %116 = vector.extract_strided_slice %115 {offsets = [0, 0], sizes = [8, 128], strides = [1, 1]} : vector<8x512xf32> to vector<8x128xf32>
    %117 = arith.negf %116 : vector<8x128xf32>
    %118 = math.exp %117 : vector<8x128xf32>
    %cst_38 = arith.constant 1.000000e+00 : f32
    %119 = vector.broadcast %cst_38 : f32 to vector<8x128xf32>
    %120 = arith.addf %119, %118 : vector<8x128xf32>
    %121 = arith.divf %119, %120 : vector<8x128xf32>
    %122 = vector.extract_strided_slice %115 {offsets = [0, 128], sizes = [8, 128], strides = [1, 1]} : vector<8x512xf32> to vector<8x128xf32>
    %123 = arith.negf %122 : vector<8x128xf32>
    %124 = math.exp %123 : vector<8x128xf32>
    %cst_39 = arith.constant 1.000000e+00 : f32
    %125 = vector.broadcast %cst_39 : f32 to vector<8x128xf32>
    %126 = arith.addf %125, %124 : vector<8x128xf32>
    %127 = arith.divf %125, %126 : vector<8x128xf32>
    %128 = vector.extract_strided_slice %115 {offsets = [0, 256], sizes = [8, 128], strides = [1, 1]} : vector<8x512xf32> to vector<8x128xf32>
    %129 = math.tanh %128 : vector<8x128xf32>
    %130 = vector.extract_strided_slice %115 {offsets = [0, 384], sizes = [8, 128], strides = [1, 1]} : vector<8x512xf32> to vector<8x128xf32>
    %131 = arith.negf %130 : vector<8x128xf32>
    %132 = math.exp %131 : vector<8x128xf32>
    %cst_40 = arith.constant 1.000000e+00 : f32
    %133 = vector.broadcast %cst_40 : f32 to vector<8x128xf32>
    %134 = arith.addf %133, %132 : vector<8x128xf32>
    %135 = arith.divf %133, %134 : vector<8x128xf32>
    %136 = arith.mulf %127, %100 : vector<8x128xf32>
    %137 = arith.mulf %121, %129 : vector<8x128xf32>
    %138 = arith.addf %136, %137 : vector<8x128xf32>
    %139 = math.tanh %138 : vector<8x128xf32>
    %140 = arith.mulf %135, %139 : vector<8x128xf32>
    %141 = arith.addi %14, %c2_i32 : i32
    %142 = vector.broadcast %141 : i32 to vector<8x1xi32>
    %143 = arith.cmpi sgt, %13, %142 : vector<8x1xi32>
    %144 = vector.shape_cast %143 : vector<8x1xi1> to vector<8x1xi1>
    %145 = vector.broadcast %144 : vector<8x1xi1> to vector<8x128xi1>
    %146 = arith.select %145, %138, %100 : vector<8x128xi1>, vector<8x128xf32>
    %147 = arith.select %145, %140, %101 : vector<8x128xi1>, vector<8x128xf32>
    %148 = arith.extui %145 : vector<8x128xi1> to vector<8x128xi32>
    %149 = arith.sitofp %148 : vector<8x128xi32> to vector<8x128xf32>
    %150 = arith.mulf %140, %149 : vector<8x128xf32>
    %151 = arith.index_cast %c2_i32 : i32 to index
    %c0_41 = arith.constant 0 : index
    %c0_42 = arith.constant 0 : index
    %152 = vector.load %arg9[%151, %c0_41, %c0_42] : memref<8x8x128xf32, #tpu.memory_space<vmem>>, vector<1x8x128xf32>
    %153 = vector.shape_cast %152 : vector<1x8x128xf32> to vector<8x128xf32>
    %154 = vector.shape_cast %150 : vector<8x128xf32> to vector<1x8x128xf32>
    tpu.vector_store %arg9[%151, %c0_41, %c0_42], %154 {strides = array<i32>} : memref<8x8x128xf32, #tpu.memory_space<vmem>>, vector<1x8x128xf32>,
    %c3_i32 = arith.constant 3 : i32
    %c8_i32_43 = arith.constant 8 : i32
    %155 = arith.muli %c3_i32, %c8_i32_43 : i32
    %156 = tpu.assume_multiple %155, 8 : i32
    %157 = arith.index_cast %156 : i32 to index
    %c0_44 = arith.constant 0 : index
    %158 = vector.load %arg12[%157, %c0_44] : memref<64x512xf32, #tpu.memory_space<vmem>>, vector<8x512xf32>
    %159 = arith.truncf %147 : vector<8x128xf32> to vector<8x128xbf16>
    %cst_45 = arith.constant dense<0.000000e+00> : vector<8x512xf32>
    %160 = tpu.matmul %159, %12, %cst_45 {dimension_numbers = #tpu.dot_dimension_numbers<[1], [0], [0], [1], [0, 0, 1, 1], [], []>} : vector<8x128xbf16>, vector<128x512xbf16>, vector<8x512xf32> -> vector<8x512xf32>
    %161 = arith.addf %158, %160 : vector<8x512xf32>
    %162 = vector.extract_strided_slice %161 {offsets = [0, 0], sizes = [8, 128], strides = [1, 1]} : vector<8x512xf32> to vector<8x128xf32>
    %163 = arith.negf %162 : vector<8x128xf32>
    %164 = math.exp %163 : vector<8x128xf32>
    %cst_46 = arith.constant 1.000000e+00 : f32
    %165 = vector.broadcast %cst_46 : f32 to vector<8x128xf32>
    %166 = arith.addf %165, %164 : vector<8x128xf32>
    %167 = arith.divf %165, %166 : vector<8x128xf32>
    %168 = vector.extract_strided_slice %161 {offsets = [0, 128], sizes = [8, 128], strides = [1, 1]} : vector<8x512xf32> to vector<8x128xf32>
    %169 = arith.negf %168 : vector<8x128xf32>
    %170 = math.exp %169 : vector<8x128xf32>
    %cst_47 = arith.constant 1.000000e+00 : f32
    %171 = vector.broadcast %cst_47 : f32 to vector<8x128xf32>
    %172 = arith.addf %171, %170 : vector<8x128xf32>
    %173 = arith.divf %171, %172 : vector<8x128xf32>
    %174 = vector.extract_strided_slice %161 {offsets = [0, 256], sizes = [8, 128], strides = [1, 1]} : vector<8x512xf32> to vector<8x128xf32>
    %175 = math.tanh %174 : vector<8x128xf32>
    %176 = vector.extract_strided_slice %161 {offsets = [0, 384], sizes = [8, 128], strides = [1, 1]} : vector<8x512xf32> to vector<8x128xf32>
    %177 = arith.negf %176 : vector<8x128xf32>
    %178 = math.exp %177 : vector<8x128xf32>
    %cst_48 = arith.constant 1.000000e+00 : f32
    %179 = vector.broadcast %cst_48 : f32 to vector<8x128xf32>
    %180 = arith.addf %179, %178 : vector<8x128xf32>
    %181 = arith.divf %179, %180 : vector<8x128xf32>
    %182 = arith.mulf %173, %146 : vector<8x128xf32>
    %183 = arith.mulf %167, %175 : vector<8x128xf32>
    %184 = arith.addf %182, %183 : vector<8x128xf32>
    %185 = math.tanh %184 : vector<8x128xf32>
    %186 = arith.mulf %181, %185 : vector<8x128xf32>
    %187 = arith.addi %14, %c3_i32 : i32
    %188 = vector.broadcast %187 : i32 to vector<8x1xi32>
    %189 = arith.cmpi sgt, %13, %188 : vector<8x1xi32>
    %190 = vector.shape_cast %189 : vector<8x1xi1> to vector<8x1xi1>
    %191 = vector.broadcast %190 : vector<8x1xi1> to vector<8x128xi1>
    %192 = arith.select %191, %184, %146 : vector<8x128xi1>, vector<8x128xf32>
    %193 = arith.select %191, %186, %147 : vector<8x128xi1>, vector<8x128xf32>
    %194 = arith.extui %191 : vector<8x128xi1> to vector<8x128xi32>
    %195 = arith.sitofp %194 : vector<8x128xi32> to vector<8x128xf32>
    %196 = arith.mulf %186, %195 : vector<8x128xf32>
    %197 = arith.index_cast %c3_i32 : i32 to index
    %c0_49 = arith.constant 0 : index
    %c0_50 = arith.constant 0 : index
    %198 = vector.load %arg9[%197, %c0_49, %c0_50] : memref<8x8x128xf32, #tpu.memory_space<vmem>>, vector<1x8x128xf32>
    %199 = vector.shape_cast %198 : vector<1x8x128xf32> to vector<8x128xf32>
    %200 = vector.shape_cast %196 : vector<8x128xf32> to vector<1x8x128xf32>
    tpu.vector_store %arg9[%197, %c0_49, %c0_50], %200 {strides = array<i32>} : memref<8x8x128xf32, #tpu.memory_space<vmem>>, vector<1x8x128xf32>,
    %c4_i32 = arith.constant 4 : i32
    %c8_i32_51 = arith.constant 8 : i32
    %201 = arith.muli %c4_i32, %c8_i32_51 : i32
    %202 = tpu.assume_multiple %201, 8 : i32
    %203 = arith.index_cast %202 : i32 to index
    %c0_52 = arith.constant 0 : index
    %204 = vector.load %arg12[%203, %c0_52] : memref<64x512xf32, #tpu.memory_space<vmem>>, vector<8x512xf32>
    %205 = arith.truncf %193 : vector<8x128xf32> to vector<8x128xbf16>
    %cst_53 = arith.constant dense<0.000000e+00> : vector<8x512xf32>
    %206 = tpu.matmul %205, %12, %cst_53 {dimension_numbers = #tpu.dot_dimension_numbers<[1], [0], [0], [1], [0, 0, 1, 1], [], []>} : vector<8x128xbf16>, vector<128x512xbf16>, vector<8x512xf32> -> vector<8x512xf32>
    %207 = arith.addf %204, %206 : vector<8x512xf32>
    %208 = vector.extract_strided_slice %207 {offsets = [0, 0], sizes = [8, 128], strides = [1, 1]} : vector<8x512xf32> to vector<8x128xf32>
    %209 = arith.negf %208 : vector<8x128xf32>
    %210 = math.exp %209 : vector<8x128xf32>
    %cst_54 = arith.constant 1.000000e+00 : f32
    %211 = vector.broadcast %cst_54 : f32 to vector<8x128xf32>
    %212 = arith.addf %211, %210 : vector<8x128xf32>
    %213 = arith.divf %211, %212 : vector<8x128xf32>
    %214 = vector.extract_strided_slice %207 {offsets = [0, 128], sizes = [8, 128], strides = [1, 1]} : vector<8x512xf32> to vector<8x128xf32>
    %215 = arith.negf %214 : vector<8x128xf32>
    %216 = math.exp %215 : vector<8x128xf32>
    %cst_55 = arith.constant 1.000000e+00 : f32
    %217 = vector.broadcast %cst_55 : f32 to vector<8x128xf32>
    %218 = arith.addf %217, %216 : vector<8x128xf32>
    %219 = arith.divf %217, %218 : vector<8x128xf32>
    %220 = vector.extract_strided_slice %207 {offsets = [0, 256], sizes = [8, 128], strides = [1, 1]} : vector<8x512xf32> to vector<8x128xf32>
    %221 = math.tanh %220 : vector<8x128xf32>
    %222 = vector.extract_strided_slice %207 {offsets = [0, 384], sizes = [8, 128], strides = [1, 1]} : vector<8x512xf32> to vector<8x128xf32>
    %223 = arith.negf %222 : vector<8x128xf32>
    %224 = math.exp %223 : vector<8x128xf32>
    %cst_56 = arith.constant 1.000000e+00 : f32
    %225 = vector.broadcast %cst_56 : f32 to vector<8x128xf32>
    %226 = arith.addf %225, %224 : vector<8x128xf32>
    %227 = arith.divf %225, %226 : vector<8x128xf32>
    %228 = arith.mulf %219, %192 : vector<8x128xf32>
    %229 = arith.mulf %213, %221 : vector<8x128xf32>
    %230 = arith.addf %228, %229 : vector<8x128xf32>
    %231 = math.tanh %230 : vector<8x128xf32>
    %232 = arith.mulf %227, %231 : vector<8x128xf32>
    %233 = arith.addi %14, %c4_i32 : i32
    %234 = vector.broadcast %233 : i32 to vector<8x1xi32>
    %235 = arith.cmpi sgt, %13, %234 : vector<8x1xi32>
    %236 = vector.shape_cast %235 : vector<8x1xi1> to vector<8x1xi1>
    %237 = vector.broadcast %236 : vector<8x1xi1> to vector<8x128xi1>
    %238 = arith.select %237, %230, %192 : vector<8x128xi1>, vector<8x128xf32>
    %239 = arith.select %237, %232, %193 : vector<8x128xi1>, vector<8x128xf32>
    %240 = arith.extui %237 : vector<8x128xi1> to vector<8x128xi32>
    %241 = arith.sitofp %240 : vector<8x128xi32> to vector<8x128xf32>
    %242 = arith.mulf %232, %241 : vector<8x128xf32>
    %243 = arith.index_cast %c4_i32 : i32 to index
    %c0_57 = arith.constant 0 : index
    %c0_58 = arith.constant 0 : index
    %244 = vector.load %arg9[%243, %c0_57, %c0_58] : memref<8x8x128xf32, #tpu.memory_space<vmem>>, vector<1x8x128xf32>
    %245 = vector.shape_cast %244 : vector<1x8x128xf32> to vector<8x128xf32>
    %246 = vector.shape_cast %242 : vector<8x128xf32> to vector<1x8x128xf32>
    tpu.vector_store %arg9[%243, %c0_57, %c0_58], %246 {strides = array<i32>} : memref<8x8x128xf32, #tpu.memory_space<vmem>>, vector<1x8x128xf32>,
    %c5_i32 = arith.constant 5 : i32
    %c8_i32_59 = arith.constant 8 : i32
    %247 = arith.muli %c5_i32, %c8_i32_59 : i32
    %248 = tpu.assume_multiple %247, 8 : i32
    %249 = arith.index_cast %248 : i32 to index
    %c0_60 = arith.constant 0 : index
    %250 = vector.load %arg12[%249, %c0_60] : memref<64x512xf32, #tpu.memory_space<vmem>>, vector<8x512xf32>
    %251 = arith.truncf %239 : vector<8x128xf32> to vector<8x128xbf16>
    %cst_61 = arith.constant dense<0.000000e+00> : vector<8x512xf32>
    %252 = tpu.matmul %251, %12, %cst_61 {dimension_numbers = #tpu.dot_dimension_numbers<[1], [0], [0], [1], [0, 0, 1, 1], [], []>} : vector<8x128xbf16>, vector<128x512xbf16>, vector<8x512xf32> -> vector<8x512xf32>
    %253 = arith.addf %250, %252 : vector<8x512xf32>
    %254 = vector.extract_strided_slice %253 {offsets = [0, 0], sizes = [8, 128], strides = [1, 1]} : vector<8x512xf32> to vector<8x128xf32>
    %255 = arith.negf %254 : vector<8x128xf32>
    %256 = math.exp %255 : vector<8x128xf32>
    %cst_62 = arith.constant 1.000000e+00 : f32
    %257 = vector.broadcast %cst_62 : f32 to vector<8x128xf32>
    %258 = arith.addf %257, %256 : vector<8x128xf32>
    %259 = arith.divf %257, %258 : vector<8x128xf32>
    %260 = vector.extract_strided_slice %253 {offsets = [0, 128], sizes = [8, 128], strides = [1, 1]} : vector<8x512xf32> to vector<8x128xf32>
    %261 = arith.negf %260 : vector<8x128xf32>
    %262 = math.exp %261 : vector<8x128xf32>
    %cst_63 = arith.constant 1.000000e+00 : f32
    %263 = vector.broadcast %cst_63 : f32 to vector<8x128xf32>
    %264 = arith.addf %263, %262 : vector<8x128xf32>
    %265 = arith.divf %263, %264 : vector<8x128xf32>
    %266 = vector.extract_strided_slice %253 {offsets = [0, 256], sizes = [8, 128], strides = [1, 1]} : vector<8x512xf32> to vector<8x128xf32>
    %267 = math.tanh %266 : vector<8x128xf32>
    %268 = vector.extract_strided_slice %253 {offsets = [0, 384], sizes = [8, 128], strides = [1, 1]} : vector<8x512xf32> to vector<8x128xf32>
    %269 = arith.negf %268 : vector<8x128xf32>
    %270 = math.exp %269 : vector<8x128xf32>
    %cst_64 = arith.constant 1.000000e+00 : f32
    %271 = vector.broadcast %cst_64 : f32 to vector<8x128xf32>
    %272 = arith.addf %271, %270 : vector<8x128xf32>
    %273 = arith.divf %271, %272 : vector<8x128xf32>
    %274 = arith.mulf %265, %238 : vector<8x128xf32>
    %275 = arith.mulf %259, %267 : vector<8x128xf32>
    %276 = arith.addf %274, %275 : vector<8x128xf32>
    %277 = math.tanh %276 : vector<8x128xf32>
    %278 = arith.mulf %273, %277 : vector<8x128xf32>
    %279 = arith.addi %14, %c5_i32 : i32
    %280 = vector.broadcast %279 : i32 to vector<8x1xi32>
    %281 = arith.cmpi sgt, %13, %280 : vector<8x1xi32>
    %282 = vector.shape_cast %281 : vector<8x1xi1> to vector<8x1xi1>
    %283 = vector.broadcast %282 : vector<8x1xi1> to vector<8x128xi1>
    %284 = arith.select %283, %276, %238 : vector<8x128xi1>, vector<8x128xf32>
    %285 = arith.select %283, %278, %239 : vector<8x128xi1>, vector<8x128xf32>
    %286 = arith.extui %283 : vector<8x128xi1> to vector<8x128xi32>
    %287 = arith.sitofp %286 : vector<8x128xi32> to vector<8x128xf32>
    %288 = arith.mulf %278, %287 : vector<8x128xf32>
    %289 = arith.index_cast %c5_i32 : i32 to index
    %c0_65 = arith.constant 0 : index
    %c0_66 = arith.constant 0 : index
    %290 = vector.load %arg9[%289, %c0_65, %c0_66] : memref<8x8x128xf32, #tpu.memory_space<vmem>>, vector<1x8x128xf32>
    %291 = vector.shape_cast %290 : vector<1x8x128xf32> to vector<8x128xf32>
    %292 = vector.shape_cast %288 : vector<8x128xf32> to vector<1x8x128xf32>
    tpu.vector_store %arg9[%289, %c0_65, %c0_66], %292 {strides = array<i32>} : memref<8x8x128xf32, #tpu.memory_space<vmem>>, vector<1x8x128xf32>,
    %c6_i32 = arith.constant 6 : i32
    %c8_i32_67 = arith.constant 8 : i32
    %293 = arith.muli %c6_i32, %c8_i32_67 : i32
    %294 = tpu.assume_multiple %293, 8 : i32
    %295 = arith.index_cast %294 : i32 to index
    %c0_68 = arith.constant 0 : index
    %296 = vector.load %arg12[%295, %c0_68] : memref<64x512xf32, #tpu.memory_space<vmem>>, vector<8x512xf32>
    %297 = arith.truncf %285 : vector<8x128xf32> to vector<8x128xbf16>
    %cst_69 = arith.constant dense<0.000000e+00> : vector<8x512xf32>
    %298 = tpu.matmul %297, %12, %cst_69 {dimension_numbers = #tpu.dot_dimension_numbers<[1], [0], [0], [1], [0, 0, 1, 1], [], []>} : vector<8x128xbf16>, vector<128x512xbf16>, vector<8x512xf32> -> vector<8x512xf32>
    %299 = arith.addf %296, %298 : vector<8x512xf32>
    %300 = vector.extract_strided_slice %299 {offsets = [0, 0], sizes = [8, 128], strides = [1, 1]} : vector<8x512xf32> to vector<8x128xf32>
    %301 = arith.negf %300 : vector<8x128xf32>
    %302 = math.exp %301 : vector<8x128xf32>
    %cst_70 = arith.constant 1.000000e+00 : f32
    %303 = vector.broadcast %cst_70 : f32 to vector<8x128xf32>
    %304 = arith.addf %303, %302 : vector<8x128xf32>
    %305 = arith.divf %303, %304 : vector<8x128xf32>
    %306 = vector.extract_strided_slice %299 {offsets = [0, 128], sizes = [8, 128], strides = [1, 1]} : vector<8x512xf32> to vector<8x128xf32>
    %307 = arith.negf %306 : vector<8x128xf32>
    %308 = math.exp %307 : vector<8x128xf32>
    %cst_71 = arith.constant 1.000000e+00 : f32
    %309 = vector.broadcast %cst_71 : f32 to vector<8x128xf32>
    %310 = arith.addf %309, %308 : vector<8x128xf32>
    %311 = arith.divf %309, %310 : vector<8x128xf32>
    %312 = vector.extract_strided_slice %299 {offsets = [0, 256], sizes = [8, 128], strides = [1, 1]} : vector<8x512xf32> to vector<8x128xf32>
    %313 = math.tanh %312 : vector<8x128xf32>
    %314 = vector.extract_strided_slice %299 {offsets = [0, 384], sizes = [8, 128], strides = [1, 1]} : vector<8x512xf32> to vector<8x128xf32>
    %315 = arith.negf %314 : vector<8x128xf32>
    %316 = math.exp %315 : vector<8x128xf32>
    %cst_72 = arith.constant 1.000000e+00 : f32
    %317 = vector.broadcast %cst_72 : f32 to vector<8x128xf32>
    %318 = arith.addf %317, %316 : vector<8x128xf32>
    %319 = arith.divf %317, %318 : vector<8x128xf32>
    %320 = arith.mulf %311, %284 : vector<8x128xf32>
    %321 = arith.mulf %305, %313 : vector<8x128xf32>
    %322 = arith.addf %320, %321 : vector<8x128xf32>
    %323 = math.tanh %322 : vector<8x128xf32>
    %324 = arith.mulf %319, %323 : vector<8x128xf32>
    %325 = arith.addi %14, %c6_i32 : i32
    %326 = vector.broadcast %325 : i32 to vector<8x1xi32>
    %327 = arith.cmpi sgt, %13, %326 : vector<8x1xi32>
    %328 = vector.shape_cast %327 : vector<8x1xi1> to vector<8x1xi1>
    %329 = vector.broadcast %328 : vector<8x1xi1> to vector<8x128xi1>
    %330 = arith.select %329, %322, %284 : vector<8x128xi1>, vector<8x128xf32>
    %331 = arith.select %329, %324, %285 : vector<8x128xi1>, vector<8x128xf32>
    %332 = arith.extui %329 : vector<8x128xi1> to vector<8x128xi32>
    %333 = arith.sitofp %332 : vector<8x128xi32> to vector<8x128xf32>
    %334 = arith.mulf %324, %333 : vector<8x128xf32>
    %335 = arith.index_cast %c6_i32 : i32 to index
    %c0_73 = arith.constant 0 : index
    %c0_74 = arith.constant 0 : index
    %336 = vector.load %arg9[%335, %c0_73, %c0_74] : memref<8x8x128xf32, #tpu.memory_space<vmem>>, vector<1x8x128xf32>
    %337 = vector.shape_cast %336 : vector<1x8x128xf32> to vector<8x128xf32>
    %338 = vector.shape_cast %334 : vector<8x128xf32> to vector<1x8x128xf32>
    tpu.vector_store %arg9[%335, %c0_73, %c0_74], %338 {strides = array<i32>} : memref<8x8x128xf32, #tpu.memory_space<vmem>>, vector<1x8x128xf32>,
    %c7_i32 = arith.constant 7 : i32
    %c8_i32_75 = arith.constant 8 : i32
    %339 = arith.muli %c7_i32, %c8_i32_75 : i32
    %340 = tpu.assume_multiple %339, 8 : i32
    %341 = arith.index_cast %340 : i32 to index
    %c0_76 = arith.constant 0 : index
    %342 = vector.load %arg12[%341, %c0_76] : memref<64x512xf32, #tpu.memory_space<vmem>>, vector<8x512xf32>
    %343 = arith.truncf %331 : vector<8x128xf32> to vector<8x128xbf16>
    %cst_77 = arith.constant dense<0.000000e+00> : vector<8x512xf32>
    %344 = tpu.matmul %343, %12, %cst_77 {dimension_numbers = #tpu.dot_dimension_numbers<[1], [0], [0], [1], [0, 0, 1, 1], [], []>} : vector<8x128xbf16>, vector<128x512xbf16>, vector<8x512xf32> -> vector<8x512xf32>
    %345 = arith.addf %342, %344 : vector<8x512xf32>
    %346 = vector.extract_strided_slice %345 {offsets = [0, 0], sizes = [8, 128], strides = [1, 1]} : vector<8x512xf32> to vector<8x128xf32>
    %347 = arith.negf %346 : vector<8x128xf32>
    %348 = math.exp %347 : vector<8x128xf32>
    %cst_78 = arith.constant 1.000000e+00 : f32
    %349 = vector.broadcast %cst_78 : f32 to vector<8x128xf32>
    %350 = arith.addf %349, %348 : vector<8x128xf32>
    %351 = arith.divf %349, %350 : vector<8x128xf32>
    %352 = vector.extract_strided_slice %345 {offsets = [0, 128], sizes = [8, 128], strides = [1, 1]} : vector<8x512xf32> to vector<8x128xf32>
    %353 = arith.negf %352 : vector<8x128xf32>
    %354 = math.exp %353 : vector<8x128xf32>
    %cst_79 = arith.constant 1.000000e+00 : f32
    %355 = vector.broadcast %cst_79 : f32 to vector<8x128xf32>
    %356 = arith.addf %355, %354 : vector<8x128xf32>
    %357 = arith.divf %355, %356 : vector<8x128xf32>
    %358 = vector.extract_strided_slice %345 {offsets = [0, 256], sizes = [8, 128], strides = [1, 1]} : vector<8x512xf32> to vector<8x128xf32>
    %359 = math.tanh %358 : vector<8x128xf32>
    %360 = vector.extract_strided_slice %345 {offsets = [0, 384], sizes = [8, 128], strides = [1, 1]} : vector<8x512xf32> to vector<8x128xf32>
    %361 = arith.negf %360 : vector<8x128xf32>
    %362 = math.exp %361 : vector<8x128xf32>
    %cst_80 = arith.constant 1.000000e+00 : f32
    %363 = vector.broadcast %cst_80 : f32 to vector<8x128xf32>
    %364 = arith.addf %363, %362 : vector<8x128xf32>
    %365 = arith.divf %363, %364 : vector<8x128xf32>
    %366 = arith.mulf %357, %330 : vector<8x128xf32>
    %367 = arith.mulf %351, %359 : vector<8x128xf32>
    %368 = arith.addf %366, %367 : vector<8x128xf32>
    %369 = math.tanh %368 : vector<8x128xf32>
    %370 = arith.mulf %365, %369 : vector<8x128xf32>
    %371 = arith.addi %14, %c7_i32 : i32
    %372 = vector.broadcast %371 : i32 to vector<8x1xi32>
    %373 = arith.cmpi sgt, %13, %372 : vector<8x1xi32>
    %374 = vector.shape_cast %373 : vector<8x1xi1> to vector<8x1xi1>
    %375 = vector.broadcast %374 : vector<8x1xi1> to vector<8x128xi1>
    %376 = arith.select %375, %368, %330 : vector<8x128xi1>, vector<8x128xf32>
    %377 = arith.select %375, %370, %331 : vector<8x128xi1>, vector<8x128xf32>
    %378 = arith.extui %375 : vector<8x128xi1> to vector<8x128xi32>
    %379 = arith.sitofp %378 : vector<8x128xi32> to vector<8x128xf32>
    %380 = arith.mulf %370, %379 : vector<8x128xf32>
    %381 = arith.index_cast %c7_i32 : i32 to index
    %c0_81 = arith.constant 0 : index
    %c0_82 = arith.constant 0 : index
    %382 = vector.load %arg9[%381, %c0_81, %c0_82] : memref<8x8x128xf32, #tpu.memory_space<vmem>>, vector<1x8x128xf32>
    %383 = vector.shape_cast %382 : vector<1x8x128xf32> to vector<8x128xf32>
    %384 = vector.shape_cast %380 : vector<8x128xf32> to vector<1x8x128xf32>
    tpu.vector_store %arg9[%381, %c0_81, %c0_82], %384 {strides = array<i32>} : memref<8x8x128xf32, #tpu.memory_space<vmem>>, vector<1x8x128xf32>,
    %c8_i32_83 = arith.constant 8 : i32
    %c0_84 = arith.constant 0 : index
    %c0_85 = arith.constant 0 : index
    %385 = vector.load %arg13[%c0_84, %c0_85] : memref<8x128xf32, #tpu.memory_space<vmem>>, vector<8x128xf32>
    tpu.vector_store %arg13[%c0_84, %c0_85], %377 {strides = array<i32>} : memref<8x128xf32, #tpu.memory_space<vmem>>, vector<8x128xf32>,
    %c0_86 = arith.constant 0 : index
    %c0_87 = arith.constant 0 : index
    %386 = vector.load %arg14[%c0_86, %c0_87] : memref<8x128xf32, #tpu.memory_space<vmem>>, vector<8x128xf32>
    tpu.vector_store %arg14[%c0_86, %c0_87], %376 {strides = array<i32>} : memref<8x128xf32, #tpu.memory_space<vmem>>, vector<8x128xf32>,
    %c0_i32_88 = arith.constant 0 : i32
    %387 = arith.cmpi eq, %arg1, %c0_i32_88 : i32
    %388 = arith.extui %387 : i1 to i32
    %c0_i32_89 = arith.constant 0 : i32
    %389 = arith.cmpi ne, %388, %c0_i32_89 : i32
    scf.if %389 {
      %c0_90 = arith.constant 0 : index
      %c0_91 = arith.constant 0 : index
      %390 = vector.load %arg10[%c0_90, %c0_91] : memref<8x128xf32, #tpu.memory_space<vmem>>, vector<8x128xf32>
      tpu.vector_store %arg10[%c0_90, %c0_91], %377 {strides = array<i32>} : memref<8x128xf32, #tpu.memory_space<vmem>>, vector<8x128xf32>,
      %c0_92 = arith.constant 0 : index
      %c0_93 = arith.constant 0 : index
      %391 = vector.load %arg11[%c0_92, %c0_93] : memref<8x128xf32, #tpu.memory_space<vmem>>, vector<8x128xf32>
      tpu.vector_store %arg11[%c0_92, %c0_93], %376 {strides = array<i32>} : memref<8x128xf32, #tpu.memory_space<vmem>>, vector<8x128xf32>,
    } else {
    }
    return
  }
  func.func @transform_0(%arg0: i32, %arg1: i32) -> (i32, i32, i32, i32) {
    %c0_i32 = arith.constant 0 : i32
    %c0_i32_0 = arith.constant 0 : i32
    %c0_i32_1 = arith.constant 0 : i32
    return %arg0, %arg1, %c0_i32, %c0_i32_0 : i32, i32, i32, i32
  }
  func.func @transform_1(%arg0: i32, %arg1: i32) -> (i32, i32) {
    %c0_i32 = arith.constant 0 : i32
    %c0_i32_0 = arith.constant 0 : i32
    %c0_i32_1 = arith.constant 0 : i32
    return %c0_i32, %c0_i32_0 : i32, i32
  }
  func.func @transform_2(%arg0: i32, %arg1: i32) -> (i32, i32) {
    %c0_i32 = arith.constant 0 : i32
    %c0_i32_0 = arith.constant 0 : i32
    %c0_i32_1 = arith.constant 0 : i32
    return %c0_i32, %c0_i32_0 : i32, i32
  }
  func.func @transform_3(%arg0: i32, %arg1: i32) -> (i32, i32) {
    %c0_i32 = arith.constant 0 : i32
    %c0_i32_0 = arith.constant 0 : i32
    %c0_i32_1 = arith.constant 0 : i32
    return %c0_i32, %c0_i32_0 : i32, i32
  }
  func.func @transform_4(%arg0: i32, %arg1: i32) -> (i32, i32) {
    %c0_i32 = arith.constant 0 : i32
    %c0_i32_0 = arith.constant 0 : i32
    return %arg0, %c0_i32 : i32, i32
  }
  func.func @transform_5(%arg0: i32, %arg1: i32) -> (i32, i32) {
    %c0_i32 = arith.constant 0 : i32
    %c0_i32_0 = arith.constant 0 : i32
    return %arg0, %c0_i32 : i32, i32
  }
  func.func @transform_6(%arg0: i32, %arg1: i32) -> (i32, i32) {
    %c0_i32 = arith.constant 0 : i32
    %c0_i32_0 = arith.constant 0 : i32
    return %arg0, %c0_i32 : i32, i32
  }
  func.func @transform_7(%arg0: i32, %arg1: i32) -> (i32, i32, i32) {
    %c0_i32 = arith.constant 0 : i32
    %c0_i32_0 = arith.constant 0 : i32
    return %arg1, %arg0, %c0_i32 : i32, i32, i32
  }
  func.func @transform_8(%arg0: i32, %arg1: i32) -> (i32, i32) {
    %c0_i32 = arith.constant 0 : i32
    %c0_i32_0 = arith.constant 0 : i32
    return %arg0, %c0_i32 : i32, i32
  }
  func.func @transform_9(%arg0: i32, %arg1: i32) -> (i32, i32) {
    %c0_i32 = arith.constant 0 : i32
    %c0_i32_0 = arith.constant 0 : i32
    return %arg0, %c0_i32 : i32, i32
  }
}

</mosaic_0001>

<llo_original>
// kernel: base_local_encoder_forward.3
$region0: #{base_local_encoder_forward.3}
  #allocation0 [shape = 'u32[]', space=smem, size = 0x4, offset = 0x4, fixed_abs, tag = 'smem constant byte address 0x4 - core index']
  #allocation1 [shape = 'u32[72,128]{1,0:T(1,128)}', space=vmem, size = 0x9000, scoped, tag = 'internal scratch']
  #allocation2 [shape = 'f32[64,512]{1,0:T(8,128)}', space=vmem, size = 0x20000, scoped, tag = 'scratch operand']
  #allocation3 [shape = 'f32[8,128]{1,0:T(8,128)}', space=vmem, size = 0x1000, scoped, tag = 'scratch operand']
  #allocation4 [shape = 'f32[8,128]{1,0:T(8,128)}', space=vmem, size = 0x1000, scoped, tag = 'scratch operand']
  %s0 = inlined_call_operand.vmem [shape: f32[2,1,64,16], index: 0, kind: input, shape index: {}]
  %s1 = inlined_call_operand.vmem [shape: bf16[16,512], index: 1, kind: input, shape index: {}]
  %s2 = inlined_call_operand.vmem [shape: bf16[128,512], index: 2, kind: input, shape index: {}]
  %s3 = inlined_call_operand.vmem [shape: f32[1,512], index: 3, kind: input, shape index: {}]
  %s4 = inlined_call_operand.vmem [shape: f32[16,128], index: 4, kind: input, shape index: {}]
  %s5 = inlined_call_operand.vmem [shape: f32[16,128], index: 5, kind: input, shape index: {}]
  %s6 = inlined_call_operand.vmem [shape: s32[16,1], index: 6, kind: input, shape index: {}]
  %s7 = inlined_call_operand.vmem [shape: f32[8,16,128], index: 7, kind: output, shape index: {0}]
  %s8 = inlined_call_operand.hbm [shape: f32[16,128], index: 8, kind: output, shape index: {1}]
  %s9 = inlined_call_operand.hbm [shape: f32[16,128], index: 9, kind: output, shape index: {2}]
  %10 = xla_tuple %s7, %s8, %s9
  %s11 = sld [smem:[#allocation0]]
  $region119: #{base_local_encoder_forward.3} parent=0
    _
  %s13 = ssub.s32 1, %s11
  %s14 = scalar_select 0, %s13, %s11
  $region1: #{base_local_encoder_forward.3} parent=0
    #allocation5 [shape = 'u8[65536]{0}', space=vmem, size = 0x10000, scoped, tag = 'output window, operand 0']
    #allocation6 [shape = 'u8[8192]{0}', space=vmem, size = 0x2000, scoped, tag = 'output window, operand 1']
    #allocation7 [shape = 's32[2]{0}', space=sflag, size = 0x8, scoped, tag = 'scoped memory for base_local_encoder_forward.3']
    #allocation8 [shape = 'u8[8192]{0}', space=vmem, size = 0x2000, scoped, tag = 'output window, operand 2']
    #allocation9 [shape = 's32[2]{0}', space=sflag, size = 0x8, scoped, tag = 'scoped memory for base_local_encoder_forward.3']
    %15 = vsyncpa [#allocation7], 0
    %s16 = scalar_lea.sflag [#allocation7], 1
    %17 = vsyncpa %s16, 0
    %18 = vsyncpa [#allocation9], 0
    %s19 = scalar_lea.sflag [#allocation9], 1
    %20 = vsyncpa %s19, 0
    loop: start=0, step=1, limit=4
    $region2: #{base_local_encoder_forward.3} parent=1 // loop_pre_header
      _
    $region3: #{base_local_encoder_forward.3} parent=1 // loop_header
      %s22 = sphi 0, %s26
      %p23 = scmp.ge.s32.totalorder %s22, 4
      %s29 = sphi 0, %s41
      %s30 = sphi 0, %s37
      %s31 = sphi 0, %s29
      %s32 = sphi 0, %s30
      %s33 = sphi 0, %s31
      %s34 = sphi 0, %s32
      %s46 = sphi 0, %s48
      %s49 = sphi 0, %s46
      %s50 = sphi 0, %s49
      %s66 = sphi 0, %s50
      %s70 = sphi 0, %s70
      %s72 = sphi 0, %s70
      %s73 = sphi 0, %s72
      %s87 = sphi 0, %s73
      %s91 = sphi 0, %s91
      %s93 = sphi 0, %s91
      %s94 = sphi 0, %s93
      %s108 = sphi 0, %s94
      %s112 = sphi 0, %s112
      %s114 = sphi 0, %s112
      %s115 = sphi 0, %s114
      %s129 = sphi 0, %s115
      %s135 = sphi 0, %s137
      %s138 = sphi 0, %s135
      %s139 = sphi 0, %s138
      %s155 = sphi 0, %s139
      %s161 = sphi 0, %s163
      %s164 = sphi 0, %s161
      %s165 = sphi 0, %s164
      %s181 = sphi 0, %s165
      %s187 = sphi 0, %s189
      %s190 = sphi 0, %s187
      %s191 = sphi 0, %s190
      %s207 = sphi 0, %s191
      %s215 = sphi 0, %s217
      %s218 = sphi 0, %s215
      %s219 = sphi 0, %s218
      %s235 = sphi 0, %s219
      %s241 = sphi 0, %s243
      %s244 = sphi 0, %s241
      %s245 = sphi 0, %s244
      %s261 = sphi 0, %s245
      %s267 = sphi 0, %s269
      %s270 = sphi 0, %s267
      %s271 = sphi 0, %s270
      %s287 = sphi 0, %s271
    $region4: #{base_local_encoder_forward.3} parent=1 // loop_header_branch
      %25 = sbr.rel (%p23) target = $region8
    $region5: #{base_local_encoder_forward.3} parent=1 // loop_body
      %s27 = ssub.s32 %s22, 1
      %s28 = ssub.s32 %s22, 2
      %s35 = sadd.s32 1, %s30
      %p36 = scmp.ge.s32.totalorder %s35, 1
      %s37 = scalar_select %p36, 0, %s35
      %s38 = sadd.s32 1, %s29
      %s39 = scalar_select %p36, %s38, %s29
      %p40 = scmp.ge.s32.totalorder %s39, 2
      %s41 = scalar_select %p40, 0, %s39
      %s42 = ssub.s32 %s29, %s41
      %s43 = ssub.s32 %s30, %s37
      %s44 = sor.u32 %s42, %s43
      %p45 = scmp.eq.s32.totalorder %s44, 0
      %s47 = sadd.s32 %s46, 1
      %s48 = scalar_select %p45, %s46, %s47
      %p51 = pneg %p45
      %p52 = scmp.eq.s32.totalorder %s22, 1
      %p53 = por %p51, %p52
      %p54 = scmp.ne.s32.totalorder %s46, %s49
      %p55 = scmp.eq.s32.totalorder %s22, 0
      %p56 = por %p54, %p55
      %p57 = scmp.ne.s32.totalorder %s46, %s49
      %p58 = scmp.eq.s32.totalorder %s27, 1
      %p59 = por %p57, %p58
      %p60 = scmp.ne.s32.totalorder %s49, %s50
      %p61 = scmp.eq.s32.totalorder %s27, 0
      %p62 = por %p60, %p61
      %p63 = scmp.ne.s32.totalorder %s49, %s50
      %p64 = scmp.eq.s32.totalorder %s28, 1
      %p65 = por %p63, %p64
      %p67 = scmp.ne.s32.totalorder %s50, %s66
      %p68 = scmp.eq.s32.totalorder %s28, 0
      %p69 = por %p67, %p68
      %s71 = sadd.s32 %s70, 1
      %p74 = scmp.eq.s32.totalorder %s22, 1
      %p75 = scmp.ne.s32.totalorder %s70, %s72
      %p76 = scmp.eq.s32.totalorder %s22, 0
      %p77 = por %p75, %p76
      %p78 = scmp.ne.s32.totalorder %s70, %s72
      %p79 = scmp.eq.s32.totalorder %s27, 1
      %p80 = por %p78, %p79
      %p81 = scmp.ne.s32.totalorder %s72, %s73
      %p82 = scmp.eq.s32.totalorder %s27, 0
      %p83 = por %p81, %p82
      %p84 = scmp.ne.s32.totalorder %s72, %s73
      %p85 = scmp.eq.s32.totalorder %s28, 1
      %p86 = por %p84, %p85
      %p88 = scmp.ne.s32.totalorder %s73, %s87
      %p89 = scmp.eq.s32.totalorder %s28, 0
      %p90 = por %p88, %p89
      %s92 = sadd.s32 %s91, 1
      %p95 = scmp.eq.s32.totalorder %s22, 1
      %p96 = scmp.ne.s32.totalorder %s91, %s93
      %p97 = scmp.eq.s32.totalorder %s22, 0
      %p98 = por %p96, %p97
      %p99 = scmp.ne.s32.totalorder %s91, %s93
      %p100 = scmp.eq.s32.totalorder %s27, 1
      %p101 = por %p99, %p100
      %p102 = scmp.ne.s32.totalorder %s93, %s94
      %p103 = scmp.eq.s32.totalorder %s27, 0
      %p104 = por %p102, %p103
      %p105 = scmp.ne.s32.totalorder %s93, %s94
      %p106 = scmp.eq.s32.totalorder %s28, 1
      %p107 = por %p105, %p106
      %p109 = scmp.ne.s32.totalorder %s94, %s108
      %p110 = scmp.eq.s32.totalorder %s28, 0
      %p111 = por %p109, %p110
      %s113 = sadd.s32 %s112, 1
      %p116 = scmp.eq.s32.totalorder %s22, 1
      %p117 = scmp.ne.s32.totalorder %s112, %s114
      %p118 = scmp.eq.s32.totalorder %s22, 0
      %p119 = por %p117, %p118
      %p120 = scmp.ne.s32.totalorder %s112, %s114
      %p121 = scmp.eq.s32.totalorder %s27, 1
      %p122 = por %p120, %p121
      %p123 = scmp.ne.s32.totalorder %s114, %s115
      %p124 = scmp.eq.s32.totalorder %s27, 0
      %p125 = por %p123, %p124
      %p126 = scmp.ne.s32.totalorder %s114, %s115
      %p127 = scmp.eq.s32.totalorder %s28, 1
      %p128 = por %p126, %p127
      %p130 = scmp.ne.s32.totalorder %s115, %s129
      %p131 = scmp.eq.s32.totalorder %s28, 0
      %p132 = por %p130, %p131
      %s133 = ssub.s32 %s29, %s41
      %p134 = scmp.eq.s32.totalorder %s133, 0
      %s136 = sadd.s32 %s135, 1
      %s137 = scalar_select %p134, %s135, %s136
      %p140 = pneg %p134
      %p141 = scmp.eq.s32.totalorder %s22, 1
      %p142 = por %p140, %p141
      %p143 = scmp.ne.s32.totalorder %s135, %s138
      %p144 = scmp.eq.s32.totalorder %s22, 0
      %p145 = por %p143, %p144
      %p146 = scmp.ne.s32.totalorder %s135, %s138
      %p147 = scmp.eq.s32.totalorder %s27, 1
      %p148 = por %p146, %p147
      %p149 = scmp.ne.s32.totalorder %s138, %s139
      %p150 = scmp.eq.s32.totalorder %s27, 0
      %p151 = por %p149, %p150
      %p152 = scmp.ne.s32.totalorder %s138, %s139
      %p153 = scmp.eq.s32.totalorder %s28, 1
      %p154 = por %p152, %p153
      %p156 = scmp.ne.s32.totalorder %s139, %s155
      %p157 = scmp.eq.s32.totalorder %s28, 0
      %p158 = por %p156, %p157
      %s159 = ssub.s32 %s29, %s41
      %p160 = scmp.eq.s32.totalorder %s159, 0
      %s162 = sadd.s32 %s161, 1
      %s163 = scalar_select %p160, %s161, %s162
      %p166 = pneg %p160
      %p167 = scmp.eq.s32.totalorder %s22, 1
      %p168 = por %p166, %p167
      %p169 = scmp.ne.s32.totalorder %s161, %s164
      %p170 = scmp.eq.s32.totalorder %s22, 0
      %p171 = por %p169, %p170
      %p172 = scmp.ne.s32.totalorder %s161, %s164
      %p173 = scmp.eq.s32.totalorder %s27, 1
      %p174 = por %p172, %p173
      %p175 = scmp.ne.s32.totalorder %s164, %s165
      %p176 = scmp.eq.s32.totalorder %s27, 0
      %p177 = por %p175, %p176
      %p178 = scmp.ne.s32.totalorder %s164, %s165
      %p179 = scmp.eq.s32.totalorder %s28, 1
      %p180 = por %p178, %p179
      %p182 = scmp.ne.s32.totalorder %s165, %s181
      %p183 = scmp.eq.s32.totalorder %s28, 0
      %p184 = por %p182, %p183
      %s185 = ssub.s32 %s29, %s41
      %p186 = scmp.eq.s32.totalorder %s185, 0
      %s188 = sadd.s32 %s187, 1
      %s189 = scalar_select %p186, %s187, %s188
      %p192 = pneg %p186
      %p193 = scmp.eq.s32.totalorder %s22, 1
      %p194 = por %p192, %p193
      %p195 = scmp.ne.s32.totalorder %s187, %s190
      %p196 = scmp.eq.s32.totalorder %s22, 0
      %p197 = por %p195, %p196
      %p198 = scmp.ne.s32.totalorder %s187, %s190
      %p199 = scmp.eq.s32.totalorder %s27, 1
      %p200 = por %p198, %p199
      %p201 = scmp.ne.s32.totalorder %s190, %s191
      %p202 = scmp.eq.s32.totalorder %s27, 0
      %p203 = por %p201, %p202
      %p204 = scmp.ne.s32.totalorder %s190, %s191
      %p205 = scmp.eq.s32.totalorder %s28, 1
      %p206 = por %p204, %p205
      %p208 = scmp.ne.s32.totalorder %s191, %s207
      %p209 = scmp.eq.s32.totalorder %s28, 0
      %p210 = por %p208, %p209
      %s211 = ssub.s32 %s30, %s37
      %s212 = ssub.s32 %s29, %s41
      %s213 = sor.u32 %s211, %s212
      %p214 = scmp.eq.s32.totalorder %s213, 0
      %s216 = sadd.s32 %s215, 1
      %s217 = scalar_select %p214, %s215, %s216
      %p220 = pneg %p214
      %p221 = scmp.eq.s32.totalorder %s22, 1
      %p222 = por %p220, %p221
      %p223 = scmp.ne.s32.totalorder %s215, %s218
      %p224 = scmp.eq.s32.totalorder %s22, 0
      %p225 = por %p223, %p224
      %p226 = scmp.ne.s32.totalorder %s215, %s218
      %p227 = scmp.eq.s32.totalorder %s27, 1
      %p228 = por %p226, %p227
      %p229 = scmp.ne.s32.totalorder %s218, %s219
      %p230 = scmp.eq.s32.totalorder %s27, 0
      %p231 = por %p229, %p230
      %p232 = scmp.ne.s32.totalorder %s218, %s219
      %p233 = scmp.eq.s32.totalorder %s28, 1
      %p234 = por %p232, %p233
      %p236 = scmp.ne.s32.totalorder %s219, %s235
      %p237 = scmp.eq.s32.totalorder %s28, 0
      %p238 = por %p236, %p237
      %s239 = ssub.s32 %s29, %s41
      %p240 = scmp.eq.s32.totalorder %s239, 0
      %s242 = sadd.s32 %s241, 1
      %s243 = scalar_select %p240, %s241, %s242
      %p246 = pneg %p240
      %p247 = scmp.eq.s32.totalorder %s22, 1
      %p248 = por %p246, %p247
      %p249 = scmp.ne.s32.totalorder %s241, %s244
      %p250 = scmp.eq.s32.totalorder %s22, 0
      %p251 = por %p249, %p250
      %p252 = scmp.ne.s32.totalorder %s241, %s244
      %p253 = scmp.eq.s32.totalorder %s27, 1
      %p254 = por %p252, %p253
      %p255 = scmp.ne.s32.totalorder %s244, %s245
      %p256 = scmp.eq.s32.totalorder %s27, 0
      %p257 = por %p255, %p256
      %p258 = scmp.ne.s32.totalorder %s244, %s245
      %p259 = scmp.eq.s32.totalorder %s28, 1
      %p260 = por %p258, %p259
      %p262 = scmp.ne.s32.totalorder %s245, %s261
      %p263 = scmp.eq.s32.totalorder %s28, 0
      %p264 = por %p262, %p263
      %s265 = ssub.s32 %s29, %s41
      %p266 = scmp.eq.s32.totalorder %s265, 0
      %s268 = sadd.s32 %s267, 1
      %s269 = scalar_select %p266, %s267, %s268
      %p272 = pneg %p266
      %p273 = scmp.eq.s32.totalorder %s22, 1
      %p274 = por %p272, %p273
      %p275 = scmp.ne.s32.totalorder %s267, %s270
      %p276 = scmp.eq.s32.totalorder %s22, 0
      %p277 = por %p275, %p276
      %p278 = scmp.ne.s32.totalorder %s267, %s270
      %p279 = scmp.eq.s32.totalorder %s27, 1
      %p280 = por %p278, %p279
      %p281 = scmp.ne.s32.totalorder %s270, %s271
      %p282 = scmp.eq.s32.totalorder %s27, 0
      %p283 = por %p281, %p282
      %p284 = scmp.ne.s32.totalorder %s270, %s271
      %p285 = scmp.eq.s32.totalorder %s28, 1
      %p286 = por %p284, %p285
      %p288 = scmp.ne.s32.totalorder %s271, %s287
      %p289 = scmp.eq.s32.totalorder %s28, 0
      %p290 = por %p288, %p289
      %p291 = scmp.le.s32.totalorder 1, %s22
      %p292 = scmp.lt.s32.totalorder %s22, 3
      %p293 = pnand %p291, %p292
      %p294 = pneg %p293
      // Predicated region
      $region9: #{base_local_encoder_forward.3} parent=5 // pred_check
        _
      $region10: #{base_local_encoder_forward.3} parent=5 // pred_check_branch
        %296 = sbr.rel (%p293) target = $region12
      $region11: #{base_local_encoder_forward.3} parent=5 // pred_region
        %s297 = ssub.s32 %s22, 1
        // Predicated region
        $region13: #{base_local_encoder_forward.3} parent=11 // pred_check
          %p298 = pneg %p83
        $region14: #{base_local_encoder_forward.3} parent=11 // pred_check_branch
          %300 = sbr.rel (%p298) target = $region16
        $region15: #{base_local_encoder_forward.3} parent=11 // pred_region
          _
        $region16: #{base_local_encoder_forward.3} parent=11 // pred_fallthru
          _
        // Predicated region
        $region17: #{base_local_encoder_forward.3} parent=11 // pred_check
          %p301 = pneg %p104
        $region18: #{base_local_encoder_forward.3} parent=11 // pred_check_branch
          %303 = sbr.rel (%p301) target = $region20
        $region19: #{base_local_encoder_forward.3} parent=11 // pred_region
          _
        $region20: #{base_local_encoder_forward.3} parent=11 // pred_fallthru
          _
        // Predicated region
        $region21: #{base_local_encoder_forward.3} parent=11 // pred_check
          %p304 = pneg %p125
        $region22: #{base_local_encoder_forward.3} parent=11 // pred_check_branch
          %306 = sbr.rel (%p304) target = $region24
        $region23: #{base_local_encoder_forward.3} parent=11 // pred_region
          _
        $region24: #{base_local_encoder_forward.3} parent=11 // pred_fallthru
          _
      $region12: #{base_local_encoder_forward.3} parent=5 // pred_fallthru
        _
      %p307 = scmp.lt.s32.totalorder %s22, 2
      // Predicated region
      $region25: #{base_local_encoder_forward.3} parent=5 // pred_check
        %p308 = pneg %p307
      $region26: #{base_local_encoder_forward.3} parent=5 // pred_check_branch
        %310 = sbr.rel (%p308) target = $region28
      $region27: #{base_local_encoder_forward.3} parent=5 // pred_region
        // Predicated region
        $region29: #{base_local_encoder_forward.3} parent=27 // pred_check
          %p311 = pneg %p56
        $region30: #{base_local_encoder_forward.3} parent=27 // pred_check_branch
          %313 = sbr.rel (%p311) target = $region32
        $region31: #{base_local_encoder_forward.3} parent=27 // pred_region
          %p314 = scmp.lt.s32.totalorder %s29, 1
          %s315 = scalar_select %p314, %s29, 1
          %p316 = scmp.lt.s32.totalorder %s30, 0
          %s317 = scalar_select %p316, %s30, 0
          %s318 = smul.addr %s317, 8
          %s319 = smul.addr %s315, 8
          %s320 = sadd.s32 %s318, %s319
          %s321 = smul.addr %s320, 8
          %s322 = scalar_lea.vmem %s0, %s321
        $region32: #{base_local_encoder_forward.3} parent=27 // pred_fallthru
          _
        // Predicated region
        $region33: #{base_local_encoder_forward.3} parent=27 // pred_check
          %p323 = pneg %p145
        $region34: #{base_local_encoder_forward.3} parent=27 // pred_check_branch
          %325 = sbr.rel (%p323) target = $region36
        $region35: #{base_local_encoder_forward.3} parent=27 // pred_region
          %p326 = scmp.lt.s32.totalorder %s29, 1
          %s327 = scalar_select %p326, %s29, 1
          %s328 = smul.addr %s327, 8
          %s329 = scalar_lea.vmem %s4, %s328
        $region36: #{base_local_encoder_forward.3} parent=27 // pred_fallthru
          _
        // Predicated region
        $region37: #{base_local_encoder_forward.3} parent=27 // pred_check
          %p330 = pneg %p171
        $region38: #{base_local_encoder_forward.3} parent=27 // pred_check_branch
          %332 = sbr.rel (%p330) target = $region40
        $region39: #{base_local_encoder_forward.3} parent=27 // pred_region
          %p333 = scmp.lt.s32.totalorder %s29, 1
          %s334 = scalar_select %p333, %s29, 1
          %s335 = smul.addr %s334, 8
          %s336 = scalar_lea.vmem %s5, %s335
        $region40: #{base_local_encoder_forward.3} parent=27 // pred_fallthru
          _
        // Predicated region
        $region41: #{base_local_encoder_forward.3} parent=27 // pred_check
          %p337 = pneg %p197
        $region42: #{base_local_encoder_forward.3} parent=27 // pred_check_branch
          %339 = sbr.rel (%p337) target = $region44
        $region43: #{base_local_encoder_forward.3} parent=27 // pred_region
          %p340 = scmp.lt.s32.totalorder %s29, 1
          %s341 = scalar_select %p340, %s29, 1
          %s342 = smul.addr %s341, 8
          %s343 = scalar_lea.vmem %s6, %s342
        $region44: #{base_local_encoder_forward.3} parent=27 // pred_fallthru
          _
      $region28: #{base_local_encoder_forward.3} parent=5 // pred_fallthru
        _
      %p344 = scmp.le.s32.totalorder 1, %s22
      %p345 = scmp.lt.s32.totalorder %s22, 3
      %p346 = pnand %p344, %p345
      %p347 = pneg %p346
      // Predicated region
      $region45: #{base_local_encoder_forward.3} parent=5 // pred_check
        _
      $region46: #{base_local_encoder_forward.3} parent=5 // pred_check_branch
        %349 = sbr.rel (%p346) target = $region48
      $region47: #{base_local_encoder_forward.3} parent=5 // pred_region
        %s350 = ssub.s32 %s22, 1
        %p351 = scmp.lt.s32.totalorder %s31, 1
        %s352 = scalar_select %p351, %s31, 1
        %p353 = scmp.lt.s32.totalorder %s32, 0
        %s354 = scalar_select %p353, %s32, 0
        %s355 = smul.addr %s354, 8
        %s356 = smul.addr %s352, 8
        %s357 = sadd.s32 %s355, %s356
        %s358 = smul.addr %s357, 8
        %s359 = scalar_lea.vmem %s0, %s358
        %p360 = pneg %p62
        %p361 = pneg %p59
        %p362 = pneg %p83
        %p363 = pneg %p80
        %p364 = pneg %p104
        %p365 = pneg %p101
        %p366 = pneg %p125
        %p367 = pneg %p122
        %p368 = scmp.lt.s32.totalorder %s31, 1
        %s369 = scalar_select %p368, %s31, 1
        %s370 = smul.addr %s369, 8
        %s371 = scalar_lea.vmem %s4, %s370
        %p372 = pneg %p151
        %p373 = pneg %p148
        %p374 = scmp.lt.s32.totalorder %s31, 1
        %s375 = scalar_select %p374, %s31, 1
        %s376 = smul.addr %s375, 8
        %s377 = scalar_lea.vmem %s5, %s376
        %p378 = pneg %p177
        %p379 = pneg %p174
        %p380 = scmp.lt.s32.totalorder %s31, 1
        %s381 = scalar_select %p380, %s31, 1
        %s382 = smul.addr %s381, 8
        %s383 = scalar_lea.vmem %s6, %s382
        %p384 = pneg %p203
        %p385 = pneg %p200
        %p386 = pneg %p231
        %p387 = pneg %p228
        %s388 = sand.u32 %s218, 1
        %s389 = sand.u32 %s218, 1
        %s390 = smul.addr %s389, 64
        %s391 = scalar_lea.vmem [#allocation5], %s390
        %p392 = pneg %p257
        %p393 = pneg %p254
        %s394 = sand.u32 %s244, 1
        %s395 = scalar_lea.sflag [#allocation7], %s394
        %s396 = sand.u32 %s244, 1
        %s397 = smul.addr %s396, 8
        %s398 = scalar_lea.vmem [#allocation6], %s397
        %p399 = pneg %p283
        %p400 = pneg %p280
        %s401 = sand.u32 %s270, 1
        %s402 = scalar_lea.sflag [#allocation9], %s401
        %s403 = sand.u32 %s270, 1
        %s404 = smul.addr %s403, 8
        %s405 = scalar_lea.vmem [#allocation8], %s404
        %p406 = scmp.lt.s32.totalorder %s31, 1
        %s407 = scalar_select %p406, %s31, 1
        %p408 = scmp.lt.s32.totalorder %s32, 0
        %s409 = scalar_select %p408, %s32, 0
        %s410 = smul.addr %s409, 8
        %s411 = smul.addr %s407, 8
        %s412 = sadd.s32 %s410, %s411
        %s413 = smul.addr %s412, 8
        %s414 = scalar_lea.vmem %s0, %s413
        %p415 = scmp.lt.s32.totalorder %s31, 1
        %s416 = scalar_select %p415, %s31, 1
        %s417 = smul.addr %s416, 8
        %s418 = scalar_lea.vmem %s4, %s417
        %p419 = scmp.lt.s32.totalorder %s31, 1
        %s420 = scalar_select %p419, %s31, 1
        %s421 = smul.addr %s420, 8
        %s422 = scalar_lea.vmem %s5, %s421
        %p423 = scmp.lt.s32.totalorder %s31, 1
        %s424 = scalar_select %p423, %s31, 1
        %s425 = smul.addr %s424, 8
        %s426 = scalar_lea.vmem %s6, %s425
        %s427 = smul.u32 8, %s32
        %p429 = scmp.eq.s32.totalorder %s32, 0
        // Predicated region
        $region49: #{base_local_encoder_forward.3} parent=47 // pred_check
          %p430 = pneg %p429
        $region50: #{base_local_encoder_forward.3} parent=47 // pred_check_branch
          %432 = sbr.rel (%p430) target = $region52
        $region51: #{base_local_encoder_forward.3} parent=47 // pred_region
          %v433 = vld [vmem:[%s418] sm:$0xff]
          %434 = vst [vmem:[#allocation3] sm:$0xff] %v433
          %v435 = vld [vmem:[%s422] sm:$0xff]
          %436 = vst [vmem:[#allocation4] sm:$0xff] %v435
        $region52: #{base_local_encoder_forward.3} parent=47 // pred_fallthru
          _
        %v437 = vld [vmem:[%s414] sm:$0xff]
        %v438 = vld [vmem:[%s414 + $0x8] sm:$0xff]
        %v439 = vld [vmem:[%s414 + $0x10] sm:$0xff]
        %v440 = vld [vmem:[%s414 + $0x18] sm:$0xff]
        %v441 = vld [vmem:[%s414 + $0x20] sm:$0xff]
        %v442 = vld [vmem:[%s414 + $0x28] sm:$0xff]
        %v443 = vld [vmem:[%s414 + $0x30] sm:$0xff]
        %v444 = vld [vmem:[%s414 + $0x38] sm:$0xff]
        %v445 = vpack.c.bf16 %v438, %v437
        %v446 = vpack.c.bf16 %v440, %v439
        %v447 = vpack.c.bf16 %v442, %v441
        %v448 = vpack.c.bf16 %v444, %v443
        %v449 = vld [vmem:[%s1] sm:$0xff]
        %v450 = vld [vmem:[%s1 + $0x8] sm:$0xff]
        %v451 = vld [vmem:[%s1 + $0x10] sm:$0xff]
        %v452 = vld [vmem:[%s1 + $0x18] sm:$0xff]
        %v453 = vld [vmem:[%s3] sm:$0xf]
        %v455 = vperm.slane %v453, 0
        %v456 = vperm.slane %v453, 1
        %v457 = vperm.slane %v453, 2
        %v458 = vperm.slane %v453, 3
        %v467 = vunpack.c.l.b16 %v449
        %v468 = vunpack.c.h.b16 %v449
        %v469 = vunpack.c.l.b16 %v450
        %v470 = vunpack.c.h.b16 %v450
        %v471 = vunpack.c.l.b16 %v451
        %v472 = vunpack.c.h.b16 %v451
        %v473 = vunpack.c.l.b16 %v452
        %v474 = vunpack.c.h.b16 %v452
        %v475 = vpack.c.b16 %v471, %v467
        %v476 = vpack.c.b16 %v472, %v468
        %v477 = vpack.c.b16 %v473, %v469
        %v478 = vpack.c.b16 %v474, %v470
        %vm483 = vcmask 130048
        %v485 = vsel %vm483, %v445, 0
        %v488 = vsel %vm483, %v446, 0
        %v491 = vsel %vm483, %v447, 0
        %v494 = vsel %vm483, %v448, 0
        %496 = vmatpush.bf16.msra.mxu0 0
        %497 = vmatpush.bf16.msra.mxu0 0
        %498 = vmatpush.bf16.msra.mxu0 0
        %499 = vmatpush.bf16.msra.mxu0 0
        %500 = vmatpush.bf16.msra.mxu0 0
        %501 = vmatpush.bf16.msra.mxu0 0
        %502 = vmatpush.bf16.msra.mxu0 0
        %503 = vmatpush.bf16.msra.mxu0 %v475
        %504 = vmatmul.bf16.gmra.mxu0 %v485
        %v505 = vpop.f32.mrf.mxu0
        %v506 = vadd.f32 %v455, %v505
        %v507 = vpop.f32.mrf.mxu0
        %v508 = vadd.f32 %v455, %v507
        %509 = vmatmul.bf16.gmra.mxu0 %v488
        %v510 = vpop.f32.mrf.mxu0
        %v511 = vadd.f32 %v455, %v510
        %v512 = vpop.f32.mrf.mxu0
        %v513 = vadd.f32 %v455, %v512
        %514 = vmatmul.bf16.gmra.mxu0 %v491
        %v515 = vpop.f32.mrf.mxu0
        %v516 = vadd.f32 %v455, %v515
        %v517 = vpop.f32.mrf.mxu0
        %v518 = vadd.f32 %v455, %v517
        %519 = vmatmul.bf16.gmra.mxu0 %v494
        %v520 = vpop.f32.mrf.mxu0
        %v521 = vadd.f32 %v455, %v520
        %v522 = vpop.f32.mrf.mxu0
        %v523 = vadd.f32 %v455, %v522
        %524 = vdwg.mxu0
        %525 = vmatpush.bf16.msra.mxu0 0
        %526 = vmatpush.bf16.msra.mxu0 0
        %527 = vmatpush.bf16.msra.mxu0 0
        %528 = vmatpush.bf16.msra.mxu0 0
        %529 = vmatpush.bf16.msra.mxu0 0
        %530 = vmatpush.bf16.msra.mxu0 0
        %531 = vmatpush.bf16.msra.mxu0 0
        %532 = vmatpush.bf16.msra.mxu0 %v476
        %533 = vmatmul.bf16.gmra.mxu0 %v485
        %v534 = vpop.f32.mrf.mxu0
        %v535 = vadd.f32 %v456, %v534
        %v536 = vpop.f32.mrf.mxu0
        %v537 = vadd.f32 %v456, %v536
        %538 = vmatmul.bf16.gmra.mxu0 %v488
        %v539 = vpop.f32.mrf.mxu0
        %v540 = vadd.f32 %v456, %v539
        %v541 = vpop.f32.mrf.mxu0
        %v542 = vadd.f32 %v456, %v541
        %543 = vmatmul.bf16.gmra.mxu0 %v491
        %v544 = vpop.f32.mrf.mxu0
        %v545 = vadd.f32 %v456, %v544
        %v546 = vpop.f32.mrf.mxu0
        %v547 = vadd.f32 %v456, %v546
        %548 = vmatmul.bf16.gmra.mxu0 %v494
        %v549 = vpop.f32.mrf.mxu0
        %v550 = vadd.f32 %v456, %v549
        %v551 = vpop.f32.mrf.mxu0
        %v552 = vadd.f32 %v456, %v551
        %553 = vdwg.mxu0
        %554 = vmatpush.bf16.msra.mxu0 0
        %555 = vmatpush.bf16.msra.mxu0 0
        %556 = vmatpush.bf16.msra.mxu0 0
        %557 = vmatpush.bf16.msra.mxu0 0
        %558 = vmatpush.bf16.msra.mxu0 0
        %559 = vmatpush.bf16.msra.mxu0 0
        %560 = vmatpush.bf16.msra.mxu0 0
        %561 = vmatpush.bf16.msra.mxu0 %v477
        %562 = vmatmul.bf16.gmra.mxu0 %v485
        %v563 = vpop.f32.mrf.mxu0
        %v564 = vadd.f32 %v457, %v563
        %v565 = vpop.f32.mrf.mxu0
        %v566 = vadd.f32 %v457, %v565
        %567 = vmatmul.bf16.gmra.mxu0 %v488
        %v568 = vpop.f32.mrf.mxu0
        %v569 = vadd.f32 %v457, %v568
        %v570 = vpop.f32.mrf.mxu0
        %v571 = vadd.f32 %v457, %v570
        %572 = vmatmul.bf16.gmra.mxu0 %v491
        %v573 = vpop.f32.mrf.mxu0
        %v574 = vadd.f32 %v457, %v573
        %v575 = vpop.f32.mrf.mxu0
        %v576 = vadd.f32 %v457, %v575
        %577 = vmatmul.bf16.gmra.mxu0 %v494
        %v578 = vpop.f32.mrf.mxu0
        %v579 = vadd.f32 %v457, %v578
        %v580 = vpop.f32.mrf.mxu0
        %v581 = vadd.f32 %v457, %v580
        %582 = vdwg.mxu0
        %583 = vmatpush.bf16.msra.mxu0 0
        %584 = vmatpush.bf16.msra.mxu0 0
        %585 = vmatpush.bf16.msra.mxu0 0
        %586 = vmatpush.bf16.msra.mxu0 0
        %587 = vmatpush.bf16.msra.mxu0 0
        %588 = vmatpush.bf16.msra.mxu0 0
        %589 = vmatpush.bf16.msra.mxu0 0
        %590 = vmatpush.bf16.msra.mxu0 %v478
        %591 = vmatmul.bf16.gmra.mxu0 %v485
        %v592 = vpop.f32.mrf.mxu0
        %v593 = vadd.f32 %v458, %v592
        %v594 = vpop.f32.mrf.mxu0
        %v595 = vadd.f32 %v458, %v594
        %596 = vmatmul.bf16.gmra.mxu0 %v488
        %v597 = vpop.f32.mrf.mxu0
        %v598 = vadd.f32 %v458, %v597
        %v599 = vpop.f32.mrf.mxu0
        %v600 = vadd.f32 %v458, %v599
        %601 = vmatmul.bf16.gmra.mxu0 %v491
        %v602 = vpop.f32.mrf.mxu0
        %v603 = vadd.f32 %v458, %v602
        %v604 = vpop.f32.mrf.mxu0
        %v605 = vadd.f32 %v458, %v604
        %606 = vmatmul.bf16.gmra.mxu0 %v494
        %v607 = vpop.f32.mrf.mxu0
        %v608 = vadd.f32 %v458, %v607
        %v609 = vpop.f32.mrf.mxu0
        %v610 = vadd.f32 %v458, %v609
        %611 = vdwg.mxu0
        %612 = vst [vmem:[#allocation2] sm:$0xff] %v506
        %613 = vst [vmem:[#allocation2 + $0x8] sm:$0xff] %v535
        %614 = vst [vmem:[#allocation2 + $0x10] sm:$0xff] %v564
        %615 = vst [vmem:[#allocation2 + $0x18] sm:$0xff] %v593
        %616 = vst [vmem:[#allocation2 + $0x20] sm:$0xff] %v508
        %617 = vst [vmem:[#allocation2 + $0x28] sm:$0xff] %v537
        %618 = vst [vmem:[#allocation2 + $0x30] sm:$0xff] %v566
        %619 = vst [vmem:[#allocation2 + $0x38] sm:$0xff] %v595
        %620 = vst [vmem:[#allocation2 + $0x40] sm:$0xff] %v511
        %621 = vst [vmem:[#allocation2 + $0x48] sm:$0xff] %v540
        %622 = vst [vmem:[#allocation2 + $0x50] sm:$0xff] %v569
        %623 = vst [vmem:[#allocation2 + $0x58] sm:$0xff] %v598
        %624 = vst [vmem:[#allocation2 + $0x60] sm:$0xff] %v513
        %625 = vst [vmem:[#allocation2 + $0x68] sm:$0xff] %v542
        %626 = vst [vmem:[#allocation2 + $0x70] sm:$0xff] %v571
        %627 = vst [vmem:[#allocation2 + $0x78] sm:$0xff] %v600
        %628 = vst [vmem:[#allocation2 + $0x80] sm:$0xff] %v516
        %629 = vst [vmem:[#allocation2 + $0x88] sm:$0xff] %v545
        %630 = vst [vmem:[#allocation2 + $0x90] sm:$0xff] %v574
        %631 = vst [vmem:[#allocation2 + $0x98] sm:$0xff] %v603
        %632 = vst [vmem:[#allocation2 + $0xa0] sm:$0xff] %v518
        %633 = vst [vmem:[#allocation2 + $0xa8] sm:$0xff] %v547
        %634 = vst [vmem:[#allocation2 + $0xb0] sm:$0xff] %v576
        %635 = vst [vmem:[#allocation2 + $0xb8] sm:$0xff] %v605
        %636 = vst [vmem:[#allocation2 + $0xc0] sm:$0xff] %v521
        %637 = vst [vmem:[#allocation2 + $0xc8] sm:$0xff] %v550
        %638 = vst [vmem:[#allocation2 + $0xd0] sm:$0xff] %v579
        %639 = vst [vmem:[#allocation2 + $0xd8] sm:$0xff] %v608
        %640 = vst [vmem:[#allocation2 + $0xe0] sm:$0xff] %v523
        %641 = vst [vmem:[#allocation2 + $0xe8] sm:$0xff] %v552
        %642 = vst [vmem:[#allocation2 + $0xf0] sm:$0xff] %v581
        %643 = vst [vmem:[#allocation2 + $0xf8] sm:$0xff] %v610
        %v644 = vld [vmem:[%s2] sm:$0xff]
        %v645 = vld [vmem:[%s2 + $0x8] sm:$0xff]
        %v646 = vld [vmem:[%s2 + $0x10] sm:$0xff]
        %v647 = vld [vmem:[%s2 + $0x18] sm:$0xff]
        %v648 = vld [vmem:[%s2 + $0x20] sm:$0xff]
        %v649 = vld [vmem:[%s2 + $0x28] sm:$0xff]
        %v650 = vld [vmem:[%s2 + $0x30] sm:$0xff]
        %v651 = vld [vmem:[%s2 + $0x38] sm:$0xff]
        %v652 = vld [vmem:[%s2 + $0x40] sm:$0xff]
        %v653 = vld [vmem:[%s2 + $0x48] sm:$0xff]
        %v654 = vld [vmem:[%s2 + $0x50] sm:$0xff]
        %v655 = vld [vmem:[%s2 + $0x58] sm:$0xff]
        %v656 = vld [vmem:[%s2 + $0x60] sm:$0xff]
        %v657 = vld [vmem:[%s2 + $0x68] sm:$0xff]
        %v658 = vld [vmem:[%s2 + $0x70] sm:$0xff]
        %v659 = vld [vmem:[%s2 + $0x78] sm:$0xff]
        %v660 = vld [vmem:[%s2 + $0x80] sm:$0xff]
        %v661 = vld [vmem:[%s2 + $0x88] sm:$0xff]
        %v662 = vld [vmem:[%s2 + $0x90] sm:$0xff]
        %v663 = vld [vmem:[%s2 + $0x98] sm:$0xff]
        %v664 = vld [vmem:[%s2 + $0xa0] sm:$0xff]
        %v665 = vld [vmem:[%s2 + $0xa8] sm:$0xff]
        %v666 = vld [vmem:[%s2 + $0xb0] sm:$0xff]
        %v667 = vld [vmem:[%s2 + $0xb8] sm:$0xff]
        %v668 = vld [vmem:[%s2 + $0xc0] sm:$0xff]
        %v669 = vld [vmem:[%s2 + $0xc8] sm:$0xff]
        %v670 = vld [vmem:[%s2 + $0xd0] sm:$0xff]
        %v671 = vld [vmem:[%s2 + $0xd8] sm:$0xff]
        %v672 = vld [vmem:[%s2 + $0xe0] sm:$0xff]
        %v673 = vld [vmem:[%s2 + $0xe8] sm:$0xff]
        %v674 = vld [vmem:[%s2 + $0xf0] sm:$0xff]
        %v675 = vld [vmem:[%s2 + $0xf8] sm:$0xff]
        %v676 = vld [vmem:[%s426] sm:$0xff]
        %s677 = smul.u32 %s32, 8
        %v678 = vld [vmem:[#allocation3] sm:$0xff]
        %v679 = vld [vmem:[#allocation4] sm:$0xff]
        %s680 = smul.u32 0, 4
        %s681 = smul.addr %s680, 8
        %s682 = scalar_lea.vmem [#allocation2], %s681
        %v683 = vld [vmem:[%s682] sm:$0xff]
        %v684 = vld [vmem:[%s682 + $0x8] sm:$0xff]
        %v685 = vld [vmem:[%s682 + $0x10] sm:$0xff]
        %v686 = vld [vmem:[%s682 + $0x18] sm:$0xff]
        %v687 = vpack.c.bf16 %v678, %v678
        %v720 = vunpack.c.l.b16 %v644
        %v721 = vunpack.c.h.b16 %v644
        %v722 = vunpack.c.l.b16 %v645
        %v723 = vunpack.c.h.b16 %v645
        %v724 = vunpack.c.l.b16 %v646
        %v725 = vunpack.c.h.b16 %v646
        %v726 = vunpack.c.l.b16 %v647
        %v727 = vunpack.c.h.b16 %v647
        %v728 = vunpack.c.l.b16 %v648
        %v729 = vunpack.c.h.b16 %v648
        %v730 = vunpack.c.l.b16 %v649
        %v731 = vunpack.c.h.b16 %v649
        %v732 = vunpack.c.l.b16 %v650
        %v733 = vunpack.c.h.b16 %v650
        %v734 = vunpack.c.l.b16 %v651
        %v735 = vunpack.c.h.b16 %v651
        %v736 = vunpack.c.l.b16 %v652
        %v737 = vunpack.c.h.b16 %v652
        %v738 = vunpack.c.l.b16 %v653
        %v739 = vunpack.c.h.b16 %v653
        %v740 = vunpack.c.l.b16 %v654
        %v741 = vunpack.c.h.b16 %v654
        %v742 = vunpack.c.l.b16 %v655
        %v743 = vunpack.c.h.b16 %v655
        %v744 = vunpack.c.l.b16 %v656
        %v745 = vunpack.c.h.b16 %v656
        %v746 = vunpack.c.l.b16 %v657
        %v747 = vunpack.c.h.b16 %v657
        %v748 = vunpack.c.l.b16 %v658
        %v749 = vunpack.c.h.b16 %v658
        %v750 = vunpack.c.l.b16 %v659
        %v751 = vunpack.c.h.b16 %v659
        %v752 = vunpack.c.l.b16 %v660
        %v753 = vunpack.c.h.b16 %v660
        %v754 = vunpack.c.l.b16 %v661
        %v755 = vunpack.c.h.b16 %v661
        %v756 = vunpack.c.l.b16 %v662
        %v757 = vunpack.c.h.b16 %v662
        %v758 = vunpack.c.l.b16 %v663
        %v759 = vunpack.c.h.b16 %v663
        %v760 = vunpack.c.l.b16 %v664
        %v761 = vunpack.c.h.b16 %v664
        %v762 = vunpack.c.l.b16 %v665
        %v763 = vunpack.c.h.b16 %v665
        %v764 = vunpack.c.l.b16 %v666
        %v765 = vunpack.c.h.b16 %v666
        %v766 = vunpack.c.l.b16 %v667
        %v767 = vunpack.c.h.b16 %v667
        %v768 = vunpack.c.l.b16 %v668
        %v769 = vunpack.c.h.b16 %v668
        %v770 = vunpack.c.l.b16 %v669
        %v771 = vunpack.c.h.b16 %v669
        %v772 = vunpack.c.l.b16 %v670
        %v773 = vunpack.c.h.b16 %v670
        %v774 = vunpack.c.l.b16 %v671
        %v775 = vunpack.c.h.b16 %v671
        %v776 = vunpack.c.l.b16 %v672
        %v777 = vunpack.c.h.b16 %v672
        %v778 = vunpack.c.l.b16 %v673
        %v779 = vunpack.c.h.b16 %v673
        %v780 = vunpack.c.l.b16 %v674
        %v781 = vunpack.c.h.b16 %v674
        %v782 = vunpack.c.l.b16 %v675
        %v783 = vunpack.c.h.b16 %v675
        %v784 = vpack.c.b16 %v724, %v720
        %v785 = vpack.c.b16 %v725, %v721
        %v786 = vpack.c.b16 %v726, %v722
        %v787 = vpack.c.b16 %v727, %v723
        %v788 = vpack.c.b16 %v732, %v728
        %v789 = vpack.c.b16 %v733, %v729
        %v790 = vpack.c.b16 %v734, %v730
        %v791 = vpack.c.b16 %v735, %v731
        %v792 = vpack.c.b16 %v740, %v736
        %v793 = vpack.c.b16 %v741, %v737
        %v794 = vpack.c.b16 %v742, %v738
        %v795 = vpack.c.b16 %v743, %v739
        %v796 = vpack.c.b16 %v748, %v744
        %v797 = vpack.c.b16 %v749, %v745
        %v798 = vpack.c.b16 %v750, %v746
        %v799 = vpack.c.b16 %v751, %v747
        %v800 = vpack.c.b16 %v756, %v752
        %v801 = vpack.c.b16 %v757, %v753
        %v802 = vpack.c.b16 %v758, %v754
        %v803 = vpack.c.b16 %v759, %v755
        %v804 = vpack.c.b16 %v764, %v760
        %v805 = vpack.c.b16 %v765, %v761
        %v806 = vpack.c.b16 %v766, %v762
        %v807 = vpack.c.b16 %v767, %v763
        %v808 = vpack.c.b16 %v772, %v768
        %v809 = vpack.c.b16 %v773, %v769
        %v810 = vpack.c.b16 %v774, %v770
        %v811 = vpack.c.b16 %v775, %v771
        %v812 = vpack.c.b16 %v780, %v776
        %v813 = vpack.c.b16 %v781, %v777
        %v814 = vpack.c.b16 %v782, %v778
        %v815 = vpack.c.b16 %v783, %v779
        %848 = vmatpush.bf16.msra.mxu0 %v812
        %849 = vmatpush.bf16.msra.mxu0 %v808
        %850 = vmatpush.bf16.msra.mxu0 %v804
        %851 = vmatpush.bf16.msra.mxu0 %v800
        %852 = vmatpush.bf16.msra.mxu0 %v796
        %853 = vmatpush.bf16.msra.mxu0 %v792
        %854 = vmatpush.bf16.msra.mxu0 %v788
        %855 = vmatpush.bf16.msra.mxu0 %v784
        %856 = vmatmul.bf16.gmra.mxu0 %v687
        %v857 = vpop.f32.mrf.mxu0
        %v858 = vadd.f32 0.0, %v857
        %v859 = vpop.f32.mrf.mxu0
        %860 = vdwg.mxu0
        %861 = vmatpush.bf16.msra.mxu0 %v813
        %862 = vmatpush.bf16.msra.mxu0 %v809
        %863 = vmatpush.bf16.msra.mxu0 %v805
        %864 = vmatpush.bf16.msra.mxu0 %v801
        %865 = vmatpush.bf16.msra.mxu0 %v797
        %866 = vmatpush.bf16.msra.mxu0 %v793
        %867 = vmatpush.bf16.msra.mxu0 %v789
        %868 = vmatpush.bf16.msra.mxu0 %v785
        %869 = vmatmul.bf16.gmra.mxu0 %v687
        %v870 = vpop.f32.mrf.mxu0
        %v871 = vadd.f32 0.0, %v870
        %v872 = vpop.f32.mrf.mxu0
        %873 = vdwg.mxu0
        %874 = vmatpush.bf16.msra.mxu0 %v814
        %875 = vmatpush.bf16.msra.mxu0 %v810
        %876 = vmatpush.bf16.msra.mxu0 %v806
        %877 = vmatpush.bf16.msra.mxu0 %v802
        %878 = vmatpush.bf16.msra.mxu0 %v798
        %879 = vmatpush.bf16.msra.mxu0 %v794
        %880 = vmatpush.bf16.msra.mxu0 %v790
        %881 = vmatpush.bf16.msra.mxu0 %v786
        %882 = vmatmul.bf16.gmra.mxu0 %v687
        %v883 = vpop.f32.mrf.mxu0
        %v884 = vadd.f32 0.0, %v883
        %v885 = vpop.f32.mrf.mxu0
        %886 = vdwg.mxu0
        %887 = vmatpush.bf16.msra.mxu0 %v815
        %888 = vmatpush.bf16.msra.mxu0 %v811
        %889 = vmatpush.bf16.msra.mxu0 %v807
        %890 = vmatpush.bf16.msra.mxu0 %v803
        %891 = vmatpush.bf16.msra.mxu0 %v799
        %892 = vmatpush.bf16.msra.mxu0 %v795
        %893 = vmatpush.bf16.msra.mxu0 %v791
        %894 = vmatpush.bf16.msra.mxu0 %v787
        %895 = vmatmul.bf16.gmra.mxu0 %v687
        %v896 = vpop.f32.mrf.mxu0
        %v897 = vadd.f32 0.0, %v896
        %v898 = vpop.f32.mrf.mxu0
        %899 = vdwg.mxu0
        %v900 = vadd.f32 %v683, %v858
        %v901 = vadd.f32 %v684, %v871
        %v902 = vadd.f32 %v685, %v884
        %v903 = vadd.f32 %v686, %v897
        %v904 = vxor.u32 %v900, 2147483648
        %v905 = vmul.f32 %v904, 1.442695
        %v906 = vpow.pop %v905
        %v907 = vadd.f32 %v906, 1.0
        %v908 = vrcp.pop %v907
        %v909 = vmul.f32 %v907, %v908
        %v910 = vsub.f32 1.0, %v909
        %v911 = vmul.f32 %v908, %v910
        %v912 = vadd.f32 %v908, %v911
        %vm913 = vweird.f32 %v907
        %vm914 = vweird.f32 %v908
        %vm915 = vmor %vm913, %vm914
        %v916 = vsel %vm915, %v908, %v912
        %v917 = vand.u32 2147483647, %v907
        %vm918 = vcmp.eq.f32.partialorder %v917, 8.507059e+37
        %v919 = vand.u32 %v907, 2147483648
        %v920 = vor.u32 1.1754944e-38, %v919
        %v921 = vsel %vm918, %v920, %v916
        %v922 = vmul.f32 1.0, %v921
        %v923 = vxor.u32 %v901, 2147483648
        %v924 = vmul.f32 %v923, 1.442695
        %v925 = vpow.pop %v924
        %v926 = vadd.f32 %v925, 1.0
        %v927 = vrcp.pop %v926
        %v928 = vmul.f32 %v926, %v927
        %v929 = vsub.f32 1.0, %v928
        %v930 = vmul.f32 %v927, %v929
        %v931 = vadd.f32 %v927, %v930
        %vm932 = vweird.f32 %v926
        %vm933 = vweird.f32 %v927
        %vm934 = vmor %vm932, %vm933
        %v935 = vsel %vm934, %v927, %v931
        %v936 = vand.u32 2147483647, %v926
        %vm937 = vcmp.eq.f32.partialorder %v936, 8.507059e+37
        %v938 = vand.u32 %v926, 2147483648
        %v939 = vor.u32 1.1754944e-38, %v938
        %v940 = vsel %vm937, %v939, %v935
        %v941 = vmul.f32 1.0, %v940
        %v942 = vtanh.pop %v902
        %v943 = vxor.u32 %v903, 2147483648
        %v944 = vmul.f32 %v943, 1.442695
        %v945 = vpow.pop %v944
        %v946 = vadd.f32 %v945, 1.0
        %v947 = vrcp.pop %v946
        %v948 = vmul.f32 %v946, %v947
        %v949 = vsub.f32 1.0, %v948
        %v950 = vmul.f32 %v947, %v949
        %v951 = vadd.f32 %v947, %v950
        %vm952 = vweird.f32 %v946
        %vm953 = vweird.f32 %v947
        %vm954 = vmor %vm952, %vm953
        %v955 = vsel %vm954, %v947, %v951
        %v956 = vand.u32 2147483647, %v946
        %vm957 = vcmp.eq.f32.partialorder %v956, 8.507059e+37
        %v958 = vand.u32 %v946, 2147483648
        %v959 = vor.u32 1.1754944e-38, %v958
        %v960 = vsel %vm957, %v959, %v955
        %v961 = vmul.f32 1.0, %v960
        %v962 = vmul.f32 %v941, %v679
        %v963 = vmul.f32 %v922, %v942
        %v964 = vadd.f32 %v962, %v963
        %v965 = vtanh.pop %v964
        %v966 = vmul.f32 %v961, %v965
        %v967 = vstv %s677
        %vm968 = vcmp.gt.s32.totalorder %v676, %v967
        %v969 = vsel %vm968, 1, 0
        %970 = vset.pattern.permute.xlu0 0
        %971 = vperm.xlu0 %970, %v969
        %v972 = vpop.permute.xlu0 %971
        %vm973 = vcmp.eq.s32.totalorder %v972, 1
        %v974 = vsel %vm973, %v964, %v679
        %v975 = vsel %vm973, %v966, %v678
        %v976 = vsel %vm973, 1, 0
        %v977 = vcvt.s32.f32 %v976
        %v978 = vmul.f32 %v966, %v977
        %979 = vst [vmem:[%s391] sm:$0xff] %v978
        %s980 = smul.u32 1, 4
        %s981 = smul.addr %s980, 8
        %s982 = scalar_lea.vmem [#allocation2], %s981
        %v983 = vld [vmem:[%s982] sm:$0xff]
        %v984 = vld [vmem:[%s982 + $0x8] sm:$0xff]
        %v985 = vld [vmem:[%s982 + $0x10] sm:$0xff]
        %v986 = vld [vmem:[%s982 + $0x18] sm:$0xff]
        %v987 = vpack.c.bf16 %v975, %v975
        %988 = vmatpush.bf16.msra.mxu0 %v812
        %989 = vmatpush.bf16.msra.mxu0 %v808
        %990 = vmatpush.bf16.msra.mxu0 %v804
        %991 = vmatpush.bf16.msra.mxu0 %v800
        %992 = vmatpush.bf16.msra.mxu0 %v796
        %993 = vmatpush.bf16.msra.mxu0 %v792
        %994 = vmatpush.bf16.msra.mxu0 %v788
        %995 = vmatpush.bf16.msra.mxu0 %v784
        %996 = vmatmul.bf16.gmra.mxu0 %v987
        %v997 = vpop.f32.mrf.mxu0
        %v998 = vadd.f32 0.0, %v997
        %v999 = vpop.f32.mrf.mxu0
        %1000 = vdwg.mxu0
        %1001 = vmatpush.bf16.msra.mxu0 %v813
        %1002 = vmatpush.bf16.msra.mxu0 %v809
        %1003 = vmatpush.bf16.msra.mxu0 %v805
        %1004 = vmatpush.bf16.msra.mxu0 %v801
        %1005 = vmatpush.bf16.msra.mxu0 %v797
        %1006 = vmatpush.bf16.msra.mxu0 %v793
        %1007 = vmatpush.bf16.msra.mxu0 %v789
        %1008 = vmatpush.bf16.msra.mxu0 %v785
        %1009 = vmatmul.bf16.gmra.mxu0 %v987
        %v1010 = vpop.f32.mrf.mxu0
        %v1011 = vadd.f32 0.0, %v1010
        %v1012 = vpop.f32.mrf.mxu0
        %1013 = vdwg.mxu0
        %1014 = vmatpush.bf16.msra.mxu0 %v814
        %1015 = vmatpush.bf16.msra.mxu0 %v810
        %1016 = vmatpush.bf16.msra.mxu0 %v806
        %1017 = vmatpush.bf16.msra.mxu0 %v802
        %1018 = vmatpush.bf16.msra.mxu0 %v798
        %1019 = vmatpush.bf16.msra.mxu0 %v794
        %1020 = vmatpush.bf16.msra.mxu0 %v790
        %1021 = vmatpush.bf16.msra.mxu0 %v786
        %1022 = vmatmul.bf16.gmra.mxu0 %v987
        %v1023 = vpop.f32.mrf.mxu0
        %v1024 = vadd.f32 0.0, %v1023
        %v1025 = vpop.f32.mrf.mxu0
        %1026 = vdwg.mxu0
        %1027 = vmatpush.bf16.msra.mxu0 %v815
        %1028 = vmatpush.bf16.msra.mxu0 %v811
        %1029 = vmatpush.bf16.msra.mxu0 %v807
        %1030 = vmatpush.bf16.msra.mxu0 %v803
        %1031 = vmatpush.bf16.msra.mxu0 %v799
        %1032 = vmatpush.bf16.msra.mxu0 %v795
        %1033 = vmatpush.bf16.msra.mxu0 %v791
        %1034 = vmatpush.bf16.msra.mxu0 %v787
        %1035 = vmatmul.bf16.gmra.mxu0 %v987
        %v1036 = vpop.f32.mrf.mxu0
        %v1037 = vadd.f32 0.0, %v1036
        %v1038 = vpop.f32.mrf.mxu0
        %1039 = vdwg.mxu0
        %v1040 = vadd.f32 %v983, %v998
        %v1041 = vadd.f32 %v984, %v1011
        %v1042 = vadd.f32 %v985, %v1024
        %v1043 = vadd.f32 %v986, %v1037
        %v1044 = vxor.u32 %v1040, 2147483648
        %v1045 = vmul.f32 %v1044, 1.442695
        %v1046 = vpow.pop %v1045
        %v1047 = vadd.f32 %v1046, 1.0
        %v1048 = vrcp.pop %v1047
        %v1049 = vmul.f32 %v1047, %v1048
        %v1050 = vsub.f32 1.0, %v1049
        %v1051 = vmul.f32 %v1048, %v1050
        %v1052 = vadd.f32 %v1048, %v1051
        %vm1053 = vweird.f32 %v1047
        %vm1054 = vweird.f32 %v1048
        %vm1055 = vmor %vm1053, %vm1054
        %v1056 = vsel %vm1055, %v1048, %v1052
        %v1057 = vand.u32 2147483647, %v1047
        %vm1058 = vcmp.eq.f32.partialorder %v1057, 8.507059e+37
        %v1059 = vand.u32 %v1047, 2147483648
        %v1060 = vor.u32 1.1754944e-38, %v1059
        %v1061 = vsel %vm1058, %v1060, %v1056
        %v1062 = vmul.f32 1.0, %v1061
        %v1063 = vxor.u32 %v1041, 2147483648
        %v1064 = vmul.f32 %v1063, 1.442695
        %v1065 = vpow.pop %v1064
        %v1066 = vadd.f32 %v1065, 1.0
        %v1067 = vrcp.pop %v1066
        %v1068 = vmul.f32 %v1066, %v1067
        %v1069 = vsub.f32 1.0, %v1068
        %v1070 = vmul.f32 %v1067, %v1069
        %v1071 = vadd.f32 %v1067, %v1070
        %vm1072 = vweird.f32 %v1066
        %vm1073 = vweird.f32 %v1067
        %vm1074 = vmor %vm1072, %vm1073
        %v1075 = vsel %vm1074, %v1067, %v1071
        %v1076 = vand.u32 2147483647, %v1066
        %vm1077 = vcmp.eq.f32.partialorder %v1076, 8.507059e+37
        %v1078 = vand.u32 %v1066, 2147483648
        %v1079 = vor.u32 1.1754944e-38, %v1078
        %v1080 = vsel %vm1077, %v1079, %v1075
        %v1081 = vmul.f32 1.0, %v1080
        %v1082 = vtanh.pop %v1042
        %v1083 = vxor.u32 %v1043, 2147483648
        %v1084 = vmul.f32 %v1083, 1.442695
        %v1085 = vpow.pop %v1084
        %v1086 = vadd.f32 %v1085, 1.0
        %v1087 = vrcp.pop %v1086
        %v1088 = vmul.f32 %v1086, %v1087
        %v1089 = vsub.f32 1.0, %v1088
        %v1090 = vmul.f32 %v1087, %v1089
        %v1091 = vadd.f32 %v1087, %v1090
        %vm1092 = vweird.f32 %v1086
        %vm1093 = vweird.f32 %v1087
        %vm1094 = vmor %vm1092, %vm1093
        %v1095 = vsel %vm1094, %v1087, %v1091
        %v1096 = vand.u32 2147483647, %v1086
        %vm1097 = vcmp.eq.f32.partialorder %v1096, 8.507059e+37
        %v1098 = vand.u32 %v1086, 2147483648
        %v1099 = vor.u32 1.1754944e-38, %v1098
        %v1100 = vsel %vm1097, %v1099, %v1095
        %v1101 = vmul.f32 1.0, %v1100
        %v1102 = vmul.f32 %v1081, %v974
        %v1103 = vmul.f32 %v1062, %v1082
        %v1104 = vadd.f32 %v1102, %v1103
        %v1105 = vtanh.pop %v1104
        %v1106 = vmul.f32 %v1101, %v1105
        %s1107 = sadd.s32 %s677, 1
        %v1108 = vstv %s1107
        %vm1109 = vcmp.gt.s32.totalorder %v676, %v1108
        %v1110 = vsel %vm1109, 1, 0
        %1111 = vset.pattern.permute.xlu0 0
        %1112 = vperm.xlu0 %1111, %v1110
        %v1113 = vpop.permute.xlu0 %1112
        %vm1114 = vcmp.eq.s32.totalorder %v1113, 1
        %v1115 = vsel %vm1114, %v1104, %v974
        %v1116 = vsel %vm1114, %v1106, %v975
        %v1117 = vsel %vm1114, 1, 0
        %v1118 = vcvt.s32.f32 %v1117
        %v1119 = vmul.f32 %v1106, %v1118
        %s1120 = scalar_lea.vmem %s391, 8 [#allocation5]
        %1121 = vst [vmem:[%s1120] sm:$0xff] %v1119
        %s1122 = smul.u32 2, 4
        %s1123 = smul.addr %s1122, 8
        %s1124 = scalar_lea.vmem [#allocation2], %s1123
        %v1125 = vld [vmem:[%s1124] sm:$0xff]
        %v1126 = vld [vmem:[%s1124 + $0x8] sm:$0xff]
        %v1127 = vld [vmem:[%s1124 + $0x10] sm:$0xff]
        %v1128 = vld [vmem:[%s1124 + $0x18] sm:$0xff]
        %v1129 = vpack.c.bf16 %v1116, %v1116
        %1130 = vmatpush.bf16.msra.mxu0 %v812
        %1131 = vmatpush.bf16.msra.mxu0 %v808
        %1132 = vmatpush.bf16.msra.mxu0 %v804
        %1133 = vmatpush.bf16.msra.mxu0 %v800
        %1134 = vmatpush.bf16.msra.mxu0 %v796
        %1135 = vmatpush.bf16.msra.mxu0 %v792
        %1136 = vmatpush.bf16.msra.mxu0 %v788
        %1137 = vmatpush.bf16.msra.mxu0 %v784
        %1138 = vmatmul.bf16.gmra.mxu0 %v1129
        %v1139 = vpop.f32.mrf.mxu0
        %v1140 = vadd.f32 0.0, %v1139
        %v1141 = vpop.f32.mrf.mxu0
        %1142 = vdwg.mxu0
        %1143 = vmatpush.bf16.msra.mxu0 %v813
        %1144 = vmatpush.bf16.msra.mxu0 %v809
        %1145 = vmatpush.bf16.msra.mxu0 %v805
        %1146 = vmatpush.bf16.msra.mxu0 %v801
        %1147 = vmatpush.bf16.msra.mxu0 %v797
        %1148 = vmatpush.bf16.msra.mxu0 %v793
        %1149 = vmatpush.bf16.msra.mxu0 %v789
        %1150 = vmatpush.bf16.msra.mxu0 %v785
        %1151 = vmatmul.bf16.gmra.mxu0 %v1129
        %v1152 = vpop.f32.mrf.mxu0
        %v1153 = vadd.f32 0.0, %v1152
        %v1154 = vpop.f32.mrf.mxu0
        %1155 = vdwg.mxu0
        %1156 = vmatpush.bf16.msra.mxu0 %v814
        %1157 = vmatpush.bf16.msra.mxu0 %v810
        %1158 = vmatpush.bf16.msra.mxu0 %v806
        %1159 = vmatpush.bf16.msra.mxu0 %v802
        %1160 = vmatpush.bf16.msra.mxu0 %v798
        %1161 = vmatpush.bf16.msra.mxu0 %v794
        %1162 = vmatpush.bf16.msra.mxu0 %v790
        %1163 = vmatpush.bf16.msra.mxu0 %v786
        %1164 = vmatmul.bf16.gmra.mxu0 %v1129
        %v1165 = vpop.f32.mrf.mxu0
        %v1166 = vadd.f32 0.0, %v1165
        %v1167 = vpop.f32.mrf.mxu0
        %1168 = vdwg.mxu0
        %1169 = vmatpush.bf16.msra.mxu0 %v815
        %1170 = vmatpush.bf16.msra.mxu0 %v811
        %1171 = vmatpush.bf16.msra.mxu0 %v807
        %1172 = vmatpush.bf16.msra.mxu0 %v803
        %1173 = vmatpush.bf16.msra.mxu0 %v799
        %1174 = vmatpush.bf16.msra.mxu0 %v795
        %1175 = vmatpush.bf16.msra.mxu0 %v791
        %1176 = vmatpush.bf16.msra.mxu0 %v787
        %1177 = vmatmul.bf16.gmra.mxu0 %v1129
        %v1178 = vpop.f32.mrf.mxu0
        %v1179 = vadd.f32 0.0, %v1178
        %v1180 = vpop.f32.mrf.mxu0
        %1181 = vdwg.mxu0
        %v1182 = vadd.f32 %v1125, %v1140
        %v1183 = vadd.f32 %v1126, %v1153
        %v1184 = vadd.f32 %v1127, %v1166
        %v1185 = vadd.f32 %v1128, %v1179
        %v1186 = vxor.u32 %v1182, 2147483648
        %v1187 = vmul.f32 %v1186, 1.442695
        %v1188 = vpow.pop %v1187
        %v1189 = vadd.f32 %v1188, 1.0
        %v1190 = vrcp.pop %v1189
        %v1191 = vmul.f32 %v1189, %v1190
        %v1192 = vsub.f32 1.0, %v1191
        %v1193 = vmul.f32 %v1190, %v1192
        %v1194 = vadd.f32 %v1190, %v1193
        %vm1195 = vweird.f32 %v1189
        %vm1196 = vweird.f32 %v1190
        %vm1197 = vmor %vm1195, %vm1196
        %v1198 = vsel %vm1197, %v1190, %v1194
        %v1199 = vand.u32 2147483647, %v1189
        %vm1200 = vcmp.eq.f32.partialorder %v1199, 8.507059e+37
        %v1201 = vand.u32 %v1189, 2147483648
        %v1202 = vor.u32 1.1754944e-38, %v1201
        %v1203 = vsel %vm1200, %v1202, %v1198
        %v1204 = vmul.f32 1.0, %v1203
        %v1205 = vxor.u32 %v1183, 2147483648
        %v1206 = vmul.f32 %v1205, 1.442695
        %v1207 = vpow.pop %v1206
        %v1208 = vadd.f32 %v1207, 1.0
        %v1209 = vrcp.pop %v1208
        %v1210 = vmul.f32 %v1208, %v1209
        %v1211 = vsub.f32 1.0, %v1210
        %v1212 = vmul.f32 %v1209, %v1211
        %v1213 = vadd.f32 %v1209, %v1212
        %vm1214 = vweird.f32 %v1208
        %vm1215 = vweird.f32 %v1209
        %vm1216 = vmor %vm1214, %vm1215
        %v1217 = vsel %vm1216, %v1209, %v1213
        %v1218 = vand.u32 2147483647, %v1208
        %vm1219 = vcmp.eq.f32.partialorder %v1218, 8.507059e+37
        %v1220 = vand.u32 %v1208, 2147483648
        %v1221 = vor.u32 1.1754944e-38, %v1220
        %v1222 = vsel %vm1219, %v1221, %v1217
        %v1223 = vmul.f32 1.0, %v1222
        %v1224 = vtanh.pop %v1184
        %v1225 = vxor.u32 %v1185, 2147483648
        %v1226 = vmul.f32 %v1225, 1.442695
        %v1227 = vpow.pop %v1226
        %v1228 = vadd.f32 %v1227, 1.0
        %v1229 = vrcp.pop %v1228
        %v1230 = vmul.f32 %v1228, %v1229
        %v1231 = vsub.f32 1.0, %v1230
        %v1232 = vmul.f32 %v1229, %v1231
        %v1233 = vadd.f32 %v1229, %v1232
        %vm1234 = vweird.f32 %v1228
        %vm1235 = vweird.f32 %v1229
        %vm1236 = vmor %vm1234, %vm1235
        %v1237 = vsel %vm1236, %v1229, %v1233
        %v1238 = vand.u32 2147483647, %v1228
        %vm1239 = vcmp.eq.f32.partialorder %v1238, 8.507059e+37
        %v1240 = vand.u32 %v1228, 2147483648
        %v1241 = vor.u32 1.1754944e-38, %v1240
        %v1242 = vsel %vm1239, %v1241, %v1237
        %v1243 = vmul.f32 1.0, %v1242
        %v1244 = vmul.f32 %v1223, %v1115
        %v1245 = vmul.f32 %v1204, %v1224
        %v1246 = vadd.f32 %v1244, %v1245
        %v1247 = vtanh.pop %v1246
        %v1248 = vmul.f32 %v1243, %v1247
        %s1249 = sadd.s32 %s677, 2
        %v1250 = vstv %s1249
        %vm1251 = vcmp.gt.s32.totalorder %v676, %v1250
        %v1252 = vsel %vm1251, 1, 0
        %1253 = vset.pattern.permute.xlu0 0
        %1254 = vperm.xlu0 %1253, %v1252
        %v1255 = vpop.permute.xlu0 %1254
        %vm1256 = vcmp.eq.s32.totalorder %v1255, 1
        %v1257 = vsel %vm1256, %v1246, %v1115
        %v1258 = vsel %vm1256, %v1248, %v1116
        %v1259 = vsel %vm1256, 1, 0
        %v1260 = vcvt.s32.f32 %v1259
        %v1261 = vmul.f32 %v1248, %v1260
        %s1262 = scalar_lea.vmem %s391, 16 [#allocation5]
        %1263 = vst [vmem:[%s1262] sm:$0xff] %v1261
        %s1264 = smul.u32 3, 4
        %s1265 = smul.addr %s1264, 8
        %s1266 = scalar_lea.vmem [#allocation2], %s1265
        %v1267 = vld [vmem:[%s1266] sm:$0xff]
        %v1268 = vld [vmem:[%s1266 + $0x8] sm:$0xff]
        %v1269 = vld [vmem:[%s1266 + $0x10] sm:$0xff]
        %v1270 = vld [vmem:[%s1266 + $0x18] sm:$0xff]
        %v1271 = vpack.c.bf16 %v1258, %v1258
        %1272 = vmatpush.bf16.msra.mxu0 %v812
        %1273 = vmatpush.bf16.msra.mxu0 %v808
        %1274 = vmatpush.bf16.msra.mxu0 %v804
        %1275 = vmatpush.bf16.msra.mxu0 %v800
        %1276 = vmatpush.bf16.msra.mxu0 %v796
        %1277 = vmatpush.bf16.msra.mxu0 %v792
        %1278 = vmatpush.bf16.msra.mxu0 %v788
        %1279 = vmatpush.bf16.msra.mxu0 %v784
        %1280 = vmatmul.bf16.gmra.mxu0 %v1271
        %v1281 = vpop.f32.mrf.mxu0
        %v1282 = vadd.f32 0.0, %v1281
        %v1283 = vpop.f32.mrf.mxu0
        %1284 = vdwg.mxu0
        %1285 = vmatpush.bf16.msra.mxu0 %v813
        %1286 = vmatpush.bf16.msra.mxu0 %v809
        %1287 = vmatpush.bf16.msra.mxu0 %v805
        %1288 = vmatpush.bf16.msra.mxu0 %v801
        %1289 = vmatpush.bf16.msra.mxu0 %v797
        %1290 = vmatpush.bf16.msra.mxu0 %v793
        %1291 = vmatpush.bf16.msra.mxu0 %v789
        %1292 = vmatpush.bf16.msra.mxu0 %v785
        %1293 = vmatmul.bf16.gmra.mxu0 %v1271
        %v1294 = vpop.f32.mrf.mxu0
        %v1295 = vadd.f32 0.0, %v1294
        %v1296 = vpop.f32.mrf.mxu0
        %1297 = vdwg.mxu0
        %1298 = vmatpush.bf16.msra.mxu0 %v814
        %1299 = vmatpush.bf16.msra.mxu0 %v810
        %1300 = vmatpush.bf16.msra.mxu0 %v806
        %1301 = vmatpush.bf16.msra.mxu0 %v802
        %1302 = vmatpush.bf16.msra.mxu0 %v798
        %1303 = vmatpush.bf16.msra.mxu0 %v794
        %1304 = vmatpush.bf16.msra.mxu0 %v790
        %1305 = vmatpush.bf16.msra.mxu0 %v786
        %1306 = vmatmul.bf16.gmra.mxu0 %v1271
        %v1307 = vpop.f32.mrf.mxu0
        %v1308 = vadd.f32 0.0, %v1307
        %v1309 = vpop.f32.mrf.mxu0
        %1310 = vdwg.mxu0
        %1311 = vmatpush.bf16.msra.mxu0 %v815
        %1312 = vmatpush.bf16.msra.mxu0 %v811
        %1313 = vmatpush.bf16.msra.mxu0 %v807
        %1314 = vmatpush.bf16.msra.mxu0 %v803
        %1315 = vmatpush.bf16.msra.mxu0 %v799
        %1316 = vmatpush.bf16.msra.mxu0 %v795
        %1317 = vmatpush.bf16.msra.mxu0 %v791
        %1318 = vmatpush.bf16.msra.mxu0 %v787
        %1319 = vmatmul.bf16.gmra.mxu0 %v1271
        %v1320 = vpop.f32.mrf.mxu0
        %v1321 = vadd.f32 0.0, %v1320
        %v1322 = vpop.f32.mrf.mxu0
        %1323 = vdwg.mxu0
        %v1324 = vadd.f32 %v1267, %v1282
        %v1325 = vadd.f32 %v1268, %v1295
        %v1326 = vadd.f32 %v1269, %v1308
        %v1327 = vadd.f32 %v1270, %v1321
        %v1328 = vxor.u32 %v1324, 2147483648
        %v1329 = vmul.f32 %v1328, 1.442695
        %v1330 = vpow.pop %v1329
        %v1331 = vadd.f32 %v1330, 1.0
        %v1332 = vrcp.pop %v1331
        %v1333 = vmul.f32 %v1331, %v1332
        %v1334 = vsub.f32 1.0, %v1333
        %v1335 = vmul.f32 %v1332, %v1334
        %v1336 = vadd.f32 %v1332, %v1335
        %vm1337 = vweird.f32 %v1331
        %vm1338 = vweird.f32 %v1332
        %vm1339 = vmor %vm1337, %vm1338
        %v1340 = vsel %vm1339, %v1332, %v1336
        %v1341 = vand.u32 2147483647, %v1331
        %vm1342 = vcmp.eq.f32.partialorder %v1341, 8.507059e+37
        %v1343 = vand.u32 %v1331, 2147483648
        %v1344 = vor.u32 1.1754944e-38, %v1343
        %v1345 = vsel %vm1342, %v1344, %v1340
        %v1346 = vmul.f32 1.0, %v1345
        %v1347 = vxor.u32 %v1325, 2147483648
        %v1348 = vmul.f32 %v1347, 1.442695
        %v1349 = vpow.pop %v1348
        %v1350 = vadd.f32 %v1349, 1.0
        %v1351 = vrcp.pop %v1350
        %v1352 = vmul.f32 %v1350, %v1351
        %v1353 = vsub.f32 1.0, %v1352
        %v1354 = vmul.f32 %v1351, %v1353
        %v1355 = vadd.f32 %v1351, %v1354
        %vm1356 = vweird.f32 %v1350
        %vm1357 = vweird.f32 %v1351
        %vm1358 = vmor %vm1356, %vm1357
        %v1359 = vsel %vm1358, %v1351, %v1355
        %v1360 = vand.u32 2147483647, %v1350
        %vm1361 = vcmp.eq.f32.partialorder %v1360, 8.507059e+37
        %v1362 = vand.u32 %v1350, 2147483648
        %v1363 = vor.u32 1.1754944e-38, %v1362
        %v1364 = vsel %vm1361, %v1363, %v1359
        %v1365 = vmul.f32 1.0, %v1364
        %v1366 = vtanh.pop %v1326
        %v1367 = vxor.u32 %v1327, 2147483648
        %v1368 = vmul.f32 %v1367, 1.442695
        %v1369 = vpow.pop %v1368
        %v1370 = vadd.f32 %v1369, 1.0
        %v1371 = vrcp.pop %v1370
        %v1372 = vmul.f32 %v1370, %v1371
        %v1373 = vsub.f32 1.0, %v1372
        %v1374 = vmul.f32 %v1371, %v1373
        %v1375 = vadd.f32 %v1371, %v1374
        %vm1376 = vweird.f32 %v1370
        %vm1377 = vweird.f32 %v1371
        %vm1378 = vmor %vm1376, %vm1377
        %v1379 = vsel %vm1378, %v1371, %v1375
        %v1380 = vand.u32 2147483647, %v1370
        %vm1381 = vcmp.eq.f32.partialorder %v1380, 8.507059e+37
        %v1382 = vand.u32 %v1370, 2147483648
        %v1383 = vor.u32 1.1754944e-38, %v1382
        %v1384 = vsel %vm1381, %v1383, %v1379
        %v1385 = vmul.f32 1.0, %v1384
        %v1386 = vmul.f32 %v1365, %v1257
        %v1387 = vmul.f32 %v1346, %v1366
        %v1388 = vadd.f32 %v1386, %v1387
        %v1389 = vtanh.pop %v1388
        %v1390 = vmul.f32 %v1385, %v1389
        %s1391 = sadd.s32 %s677, 3
        %v1392 = vstv %s1391
        %vm1393 = vcmp.gt.s32.totalorder %v676, %v1392
        %v1394 = vsel %vm1393, 1, 0
        %1395 = vset.pattern.permute.xlu0 0
        %1396 = vperm.xlu0 %1395, %v1394
        %v1397 = vpop.permute.xlu0 %1396
        %vm1398 = vcmp.eq.s32.totalorder %v1397, 1
        %v1399 = vsel %vm1398, %v1388, %v1257
        %v1400 = vsel %vm1398, %v1390, %v1258
        %v1401 = vsel %vm1398, 1, 0
        %v1402 = vcvt.s32.f32 %v1401
        %v1403 = vmul.f32 %v1390, %v1402
        %s1404 = scalar_lea.vmem %s391, 24 [#allocation5]
        %1405 = vst [vmem:[%s1404] sm:$0xff] %v1403
        %s1406 = smul.u32 4, 4
        %s1407 = smul.addr %s1406, 8
        %s1408 = scalar_lea.vmem [#allocation2], %s1407
        %v1409 = vld [vmem:[%s1408] sm:$0xff]
        %v1410 = vld [vmem:[%s1408 + $0x8] sm:$0xff]
        %v1411 = vld [vmem:[%s1408 + $0x10] sm:$0xff]
        %v1412 = vld [vmem:[%s1408 + $0x18] sm:$0xff]
        %v1413 = vpack.c.bf16 %v1400, %v1400
        %1414 = vmatpush.bf16.msra.mxu0 %v812
        %1415 = vmatpush.bf16.msra.mxu0 %v808
        %1416 = vmatpush.bf16.msra.mxu0 %v804
        %1417 = vmatpush.bf16.msra.mxu0 %v800
        %1418 = vmatpush.bf16.msra.mxu0 %v796
        %1419 = vmatpush.bf16.msra.mxu0 %v792
        %1420 = vmatpush.bf16.msra.mxu0 %v788
        %1421 = vmatpush.bf16.msra.mxu0 %v784
        %1422 = vmatmul.bf16.gmra.mxu0 %v1413
        %v1423 = vpop.f32.mrf.mxu0
        %v1424 = vadd.f32 0.0, %v1423
        %v1425 = vpop.f32.mrf.mxu0
        %1426 = vdwg.mxu0
        %1427 = vmatpush.bf16.msra.mxu0 %v813
        %1428 = vmatpush.bf16.msra.mxu0 %v809
        %1429 = vmatpush.bf16.msra.mxu0 %v805
        %1430 = vmatpush.bf16.msra.mxu0 %v801
        %1431 = vmatpush.bf16.msra.mxu0 %v797
        %1432 = vmatpush.bf16.msra.mxu0 %v793
        %1433 = vmatpush.bf16.msra.mxu0 %v789
        %1434 = vmatpush.bf16.msra.mxu0 %v785
        %1435 = vmatmul.bf16.gmra.mxu0 %v1413
        %v1436 = vpop.f32.mrf.mxu0
        %v1437 = vadd.f32 0.0, %v1436
        %v1438 = vpop.f32.mrf.mxu0
        %1439 = vdwg.mxu0
        %1440 = vmatpush.bf16.msra.mxu0 %v814
        %1441 = vmatpush.bf16.msra.mxu0 %v810
        %1442 = vmatpush.bf16.msra.mxu0 %v806
        %1443 = vmatpush.bf16.msra.mxu0 %v802
        %1444 = vmatpush.bf16.msra.mxu0 %v798
        %1445 = vmatpush.bf16.msra.mxu0 %v794
        %1446 = vmatpush.bf16.msra.mxu0 %v790
        %1447 = vmatpush.bf16.msra.mxu0 %v786
        %1448 = vmatmul.bf16.gmra.mxu0 %v1413
        %v1449 = vpop.f32.mrf.mxu0
        %v1450 = vadd.f32 0.0, %v1449
        %v1451 = vpop.f32.mrf.mxu0
        %1452 = vdwg.mxu0
        %1453 = vmatpush.bf16.msra.mxu0 %v815
        %1454 = vmatpush.bf16.msra.mxu0 %v811
        %1455 = vmatpush.bf16.msra.mxu0 %v807
        %1456 = vmatpush.bf16.msra.mxu0 %v803
        %1457 = vmatpush.bf16.msra.mxu0 %v799
        %1458 = vmatpush.bf16.msra.mxu0 %v795
        %1459 = vmatpush.bf16.msra.mxu0 %v791
        %1460 = vmatpush.bf16.msra.mxu0 %v787
        %1461 = vmatmul.bf16.gmra.mxu0 %v1413
        %v1462 = vpop.f32.mrf.mxu0
        %v1463 = vadd.f32 0.0, %v1462
        %v1464 = vpop.f32.mrf.mxu0
        %1465 = vdwg.mxu0
        %v1466 = vadd.f32 %v1409, %v1424
        %v1467 = vadd.f32 %v1410, %v1437
        %v1468 = vadd.f32 %v1411, %v1450
        %v1469 = vadd.f32 %v1412, %v1463
        %v1470 = vxor.u32 %v1466, 2147483648
        %v1471 = vmul.f32 %v1470, 1.442695
        %v1472 = vpow.pop %v1471
        %v1473 = vadd.f32 %v1472, 1.0
        %v1474 = vrcp.pop %v1473
        %v1475 = vmul.f32 %v1473, %v1474
        %v1476 = vsub.f32 1.0, %v1475
        %v1477 = vmul.f32 %v1474, %v1476
        %v1478 = vadd.f32 %v1474, %v1477
        %vm1479 = vweird.f32 %v1473
        %vm1480 = vweird.f32 %v1474
        %vm1481 = vmor %vm1479, %vm1480
        %v1482 = vsel %vm1481, %v1474, %v1478
        %v1483 = vand.u32 2147483647, %v1473
        %vm1484 = vcmp.eq.f32.partialorder %v1483, 8.507059e+37
        %v1485 = vand.u32 %v1473, 2147483648
        %v1486 = vor.u32 1.1754944e-38, %v1485
        %v1487 = vsel %vm1484, %v1486, %v1482
        %v1488 = vmul.f32 1.0, %v1487
        %v1489 = vxor.u32 %v1467, 2147483648
        %v1490 = vmul.f32 %v1489, 1.442695
        %v1491 = vpow.pop %v1490
        %v1492 = vadd.f32 %v1491, 1.0
        %v1493 = vrcp.pop %v1492
        %v1494 = vmul.f32 %v1492, %v1493
        %v1495 = vsub.f32 1.0, %v1494
        %v1496 = vmul.f32 %v1493, %v1495
        %v1497 = vadd.f32 %v1493, %v1496
        %vm1498 = vweird.f32 %v1492
        %vm1499 = vweird.f32 %v1493
        %vm1500 = vmor %vm1498, %vm1499
        %v1501 = vsel %vm1500, %v1493, %v1497
        %v1502 = vand.u32 2147483647, %v1492
        %vm1503 = vcmp.eq.f32.partialorder %v1502, 8.507059e+37
        %v1504 = vand.u32 %v1492, 2147483648
        %v1505 = vor.u32 1.1754944e-38, %v1504
        %v1506 = vsel %vm1503, %v1505, %v1501
        %v1507 = vmul.f32 1.0, %v1506
        %v1508 = vtanh.pop %v1468
        %v1509 = vxor.u32 %v1469, 2147483648
        %v1510 = vmul.f32 %v1509, 1.442695
        %v1511 = vpow.pop %v1510
        %v1512 = vadd.f32 %v1511, 1.0
        %v1513 = vrcp.pop %v1512
        %v1514 = vmul.f32 %v1512, %v1513
        %v1515 = vsub.f32 1.0, %v1514
        %v1516 = vmul.f32 %v1513, %v1515
        %v1517 = vadd.f32 %v1513, %v1516
        %vm1518 = vweird.f32 %v1512
        %vm1519 = vweird.f32 %v1513
        %vm1520 = vmor %vm1518, %vm1519
        %v1521 = vsel %vm1520, %v1513, %v1517
        %v1522 = vand.u32 2147483647, %v1512
        %vm1523 = vcmp.eq.f32.partialorder %v1522, 8.507059e+37
        %v1524 = vand.u32 %v1512, 2147483648
        %v1525 = vor.u32 1.1754944e-38, %v1524
        %v1526 = vsel %vm1523, %v1525, %v1521
        %v1527 = vmul.f32 1.0, %v1526
        %v1528 = vmul.f32 %v1507, %v1399
        %v1529 = vmul.f32 %v1488, %v1508
        %v1530 = vadd.f32 %v1528, %v1529
        %v1531 = vtanh.pop %v1530
        %v1532 = vmul.f32 %v1527, %v1531
        %s1533 = sadd.s32 %s677, 4
        %v1534 = vstv %s1533
        %vm1535 = vcmp.gt.s32.totalorder %v676, %v1534
        %v1536 = vsel %vm1535, 1, 0
        %1537 = vset.pattern.permute.xlu0 0
        %1538 = vperm.xlu0 %1537, %v1536
        %v1539 = vpop.permute.xlu0 %1538
        %vm1540 = vcmp.eq.s32.totalorder %v1539, 1
        %v1541 = vsel %vm1540, %v1530, %v1399
        %v1542 = vsel %vm1540, %v1532, %v1400
        %v1543 = vsel %vm1540, 1, 0
        %v1544 = vcvt.s32.f32 %v1543
        %v1545 = vmul.f32 %v1532, %v1544
        %s1546 = scalar_lea.vmem %s391, 32 [#allocation5]
        %1547 = vst [vmem:[%s1546] sm:$0xff] %v1545
        %s1548 = smul.u32 5, 4
        %s1549 = smul.addr %s1548, 8
        %s1550 = scalar_lea.vmem [#allocation2], %s1549
        %v1551 = vld [vmem:[%s1550] sm:$0xff]
        %v1552 = vld [vmem:[%s1550 + $0x8] sm:$0xff]
        %v1553 = vld [vmem:[%s1550 + $0x10] sm:$0xff]
        %v1554 = vld [vmem:[%s1550 + $0x18] sm:$0xff]
        %v1555 = vpack.c.bf16 %v1542, %v1542
        %1556 = vmatpush.bf16.msra.mxu0 %v812
        %1557 = vmatpush.bf16.msra.mxu0 %v808
        %1558 = vmatpush.bf16.msra.mxu0 %v804
        %1559 = vmatpush.bf16.msra.mxu0 %v800
        %1560 = vmatpush.bf16.msra.mxu0 %v796
        %1561 = vmatpush.bf16.msra.mxu0 %v792
        %1562 = vmatpush.bf16.msra.mxu0 %v788
        %1563 = vmatpush.bf16.msra.mxu0 %v784
        %1564 = vmatmul.bf16.gmra.mxu0 %v1555
        %v1565 = vpop.f32.mrf.mxu0
        %v1566 = vadd.f32 0.0, %v1565
        %v1567 = vpop.f32.mrf.mxu0
        %1568 = vdwg.mxu0
        %1569 = vmatpush.bf16.msra.mxu0 %v813
        %1570 = vmatpush.bf16.msra.mxu0 %v809
        %1571 = vmatpush.bf16.msra.mxu0 %v805
        %1572 = vmatpush.bf16.msra.mxu0 %v801
        %1573 = vmatpush.bf16.msra.mxu0 %v797
        %1574 = vmatpush.bf16.msra.mxu0 %v793
        %1575 = vmatpush.bf16.msra.mxu0 %v789
        %1576 = vmatpush.bf16.msra.mxu0 %v785
        %1577 = vmatmul.bf16.gmra.mxu0 %v1555
        %v1578 = vpop.f32.mrf.mxu0
        %v1579 = vadd.f32 0.0, %v1578
        %v1580 = vpop.f32.mrf.mxu0
        %1581 = vdwg.mxu0
        %1582 = vmatpush.bf16.msra.mxu0 %v814
        %1583 = vmatpush.bf16.msra.mxu0 %v810
        %1584 = vmatpush.bf16.msra.mxu0 %v806
        %1585 = vmatpush.bf16.msra.mxu0 %v802
        %1586 = vmatpush.bf16.msra.mxu0 %v798
        %1587 = vmatpush.bf16.msra.mxu0 %v794
        %1588 = vmatpush.bf16.msra.mxu0 %v790
        %1589 = vmatpush.bf16.msra.mxu0 %v786
        %1590 = vmatmul.bf16.gmra.mxu0 %v1555
        %v1591 = vpop.f32.mrf.mxu0
        %v1592 = vadd.f32 0.0, %v1591
        %v1593 = vpop.f32.mrf.mxu0
        %1594 = vdwg.mxu0
        %1595 = vmatpush.bf16.msra.mxu0 %v815
        %1596 = vmatpush.bf16.msra.mxu0 %v811
        %1597 = vmatpush.bf16.msra.mxu0 %v807
        %1598 = vmatpush.bf16.msra.mxu0 %v803
        %1599 = vmatpush.bf16.msra.mxu0 %v799
        %1600 = vmatpush.bf16.msra.mxu0 %v795
        %1601 = vmatpush.bf16.msra.mxu0 %v791
        %1602 = vmatpush.bf16.msra.mxu0 %v787
        %1603 = vmatmul.bf16.gmra.mxu0 %v1555
        %v1604 = vpop.f32.mrf.mxu0
        %v1605 = vadd.f32 0.0, %v1604
        %v1606 = vpop.f32.mrf.mxu0
        %1607 = vdwg.mxu0
        %v1608 = vadd.f32 %v1551, %v1566
        %v1609 = vadd.f32 %v1552, %v1579
        %v1610 = vadd.f32 %v1553, %v1592
        %v1611 = vadd.f32 %v1554, %v1605
        %v1612 = vxor.u32 %v1608, 2147483648
        %v1613 = vmul.f32 %v1612, 1.442695
        %v1614 = vpow.pop %v1613
        %v1615 = vadd.f32 %v1614, 1.0
        %v1616 = vrcp.pop %v1615
        %v1617 = vmul.f32 %v1615, %v1616
        %v1618 = vsub.f32 1.0, %v1617
        %v1619 = vmul.f32 %v1616, %v1618
        %v1620 = vadd.f32 %v1616, %v1619
        %vm1621 = vweird.f32 %v1615
        %vm1622 = vweird.f32 %v1616
        %vm1623 = vmor %vm1621, %vm1622
        %v1624 = vsel %vm1623, %v1616, %v1620
        %v1625 = vand.u32 2147483647, %v1615
        %vm1626 = vcmp.eq.f32.partialorder %v1625, 8.507059e+37
        %v1627 = vand.u32 %v1615, 2147483648
        %v1628 = vor.u32 1.1754944e-38, %v1627
        %v1629 = vsel %vm1626, %v1628, %v1624
        %v1630 = vmul.f32 1.0, %v1629
        %v1631 = vxor.u32 %v1609, 2147483648
        %v1632 = vmul.f32 %v1631, 1.442695
        %v1633 = vpow.pop %v1632
        %v1634 = vadd.f32 %v1633, 1.0
        %v1635 = vrcp.pop %v1634
        %v1636 = vmul.f32 %v1634, %v1635
        %v1637 = vsub.f32 1.0, %v1636
        %v1638 = vmul.f32 %v1635, %v1637
        %v1639 = vadd.f32 %v1635, %v1638
        %vm1640 = vweird.f32 %v1634
        %vm1641 = vweird.f32 %v1635
        %vm1642 = vmor %vm1640, %vm1641
        %v1643 = vsel %vm1642, %v1635, %v1639
        %v1644 = vand.u32 2147483647, %v1634
        %vm1645 = vcmp.eq.f32.partialorder %v1644, 8.507059e+37
        %v1646 = vand.u32 %v1634, 2147483648
        %v1647 = vor.u32 1.1754944e-38, %v1646
        %v1648 = vsel %vm1645, %v1647, %v1643
        %v1649 = vmul.f32 1.0, %v1648
        %v1650 = vtanh.pop %v1610
        %v1651 = vxor.u32 %v1611, 2147483648
        %v1652 = vmul.f32 %v1651, 1.442695
        %v1653 = vpow.pop %v1652
        %v1654 = vadd.f32 %v1653, 1.0
        %v1655 = vrcp.pop %v1654
        %v1656 = vmul.f32 %v1654, %v1655
        %v1657 = vsub.f32 1.0, %v1656
        %v1658 = vmul.f32 %v1655, %v1657
        %v1659 = vadd.f32 %v1655, %v1658
        %vm1660 = vweird.f32 %v1654
        %vm1661 = vweird.f32 %v1655
        %vm1662 = vmor %vm1660, %vm1661
        %v1663 = vsel %vm1662, %v1655, %v1659
        %v1664 = vand.u32 2147483647, %v1654
        %vm1665 = vcmp.eq.f32.partialorder %v1664, 8.507059e+37
        %v1666 = vand.u32 %v1654, 2147483648
        %v1667 = vor.u32 1.1754944e-38, %v1666
        %v1668 = vsel %vm1665, %v1667, %v1663
        %v1669 = vmul.f32 1.0, %v1668
        %v1670 = vmul.f32 %v1649, %v1541
        %v1671 = vmul.f32 %v1630, %v1650
        %v1672 = vadd.f32 %v1670, %v1671
        %v1673 = vtanh.pop %v1672
        %v1674 = vmul.f32 %v1669, %v1673
        %s1675 = sadd.s32 %s677, 5
        %v1676 = vstv %s1675
        %vm1677 = vcmp.gt.s32.totalorder %v676, %v1676
        %v1678 = vsel %vm1677, 1, 0
        %1679 = vset.pattern.permute.xlu0 0
        %1680 = vperm.xlu0 %1679, %v1678
        %v1681 = vpop.permute.xlu0 %1680
        %vm1682 = vcmp.eq.s32.totalorder %v1681, 1
        %v1683 = vsel %vm1682, %v1672, %v1541
        %v1684 = vsel %vm1682, %v1674, %v1542
        %v1685 = vsel %vm1682, 1, 0
        %v1686 = vcvt.s32.f32 %v1685
        %v1687 = vmul.f32 %v1674, %v1686
        %s1688 = scalar_lea.vmem %s391, 40 [#allocation5]
        %1689 = vst [vmem:[%s1688] sm:$0xff] %v1687
        %s1690 = smul.u32 6, 4
        %s1691 = smul.addr %s1690, 8
        %s1692 = scalar_lea.vmem [#allocation2], %s1691
        %v1693 = vld [vmem:[%s1692] sm:$0xff]
        %v1694 = vld [vmem:[%s1692 + $0x8] sm:$0xff]
        %v1695 = vld [vmem:[%s1692 + $0x10] sm:$0xff]
        %v1696 = vld [vmem:[%s1692 + $0x18] sm:$0xff]
        %v1697 = vpack.c.bf16 %v1684, %v1684
        %1698 = vmatpush.bf16.msra.mxu0 %v812
        %1699 = vmatpush.bf16.msra.mxu0 %v808
        %1700 = vmatpush.bf16.msra.mxu0 %v804
        %1701 = vmatpush.bf16.msra.mxu0 %v800
        %1702 = vmatpush.bf16.msra.mxu0 %v796
        %1703 = vmatpush.bf16.msra.mxu0 %v792
        %1704 = vmatpush.bf16.msra.mxu0 %v788
        %1705 = vmatpush.bf16.msra.mxu0 %v784
        %1706 = vmatmul.bf16.gmra.mxu0 %v1697
        %v1707 = vpop.f32.mrf.mxu0
        %v1708 = vadd.f32 0.0, %v1707
        %v1709 = vpop.f32.mrf.mxu0
        %1710 = vdwg.mxu0
        %1711 = vmatpush.bf16.msra.mxu0 %v813
        %1712 = vmatpush.bf16.msra.mxu0 %v809
        %1713 = vmatpush.bf16.msra.mxu0 %v805
        %1714 = vmatpush.bf16.msra.mxu0 %v801
        %1715 = vmatpush.bf16.msra.mxu0 %v797
        %1716 = vmatpush.bf16.msra.mxu0 %v793
        %1717 = vmatpush.bf16.msra.mxu0 %v789
        %1718 = vmatpush.bf16.msra.mxu0 %v785
        %1719 = vmatmul.bf16.gmra.mxu0 %v1697
        %v1720 = vpop.f32.mrf.mxu0
        %v1721 = vadd.f32 0.0, %v1720
        %v1722 = vpop.f32.mrf.mxu0
        %1723 = vdwg.mxu0
        %1724 = vmatpush.bf16.msra.mxu0 %v814
        %1725 = vmatpush.bf16.msra.mxu0 %v810
        %1726 = vmatpush.bf16.msra.mxu0 %v806
        %1727 = vmatpush.bf16.msra.mxu0 %v802
        %1728 = vmatpush.bf16.msra.mxu0 %v798
        %1729 = vmatpush.bf16.msra.mxu0 %v794
        %1730 = vmatpush.bf16.msra.mxu0 %v790
        %1731 = vmatpush.bf16.msra.mxu0 %v786
        %1732 = vmatmul.bf16.gmra.mxu0 %v1697
        %v1733 = vpop.f32.mrf.mxu0
        %v1734 = vadd.f32 0.0, %v1733
        %v1735 = vpop.f32.mrf.mxu0
        %1736 = vdwg.mxu0
        %1737 = vmatpush.bf16.msra.mxu0 %v815
        %1738 = vmatpush.bf16.msra.mxu0 %v811
        %1739 = vmatpush.bf16.msra.mxu0 %v807
        %1740 = vmatpush.bf16.msra.mxu0 %v803
        %1741 = vmatpush.bf16.msra.mxu0 %v799
        %1742 = vmatpush.bf16.msra.mxu0 %v795
        %1743 = vmatpush.bf16.msra.mxu0 %v791
        %1744 = vmatpush.bf16.msra.mxu0 %v787
        %1745 = vmatmul.bf16.gmra.mxu0 %v1697
        %v1746 = vpop.f32.mrf.mxu0
        %v1747 = vadd.f32 0.0, %v1746
        %v1748 = vpop.f32.mrf.mxu0
        %1749 = vdwg.mxu0
        %v1750 = vadd.f32 %v1693, %v1708
        %v1751 = vadd.f32 %v1694, %v1721
        %v1752 = vadd.f32 %v1695, %v1734
        %v1753 = vadd.f32 %v1696, %v1747
        %v1754 = vxor.u32 %v1750, 2147483648
        %v1755 = vmul.f32 %v1754, 1.442695
        %v1756 = vpow.pop %v1755
        %v1757 = vadd.f32 %v1756, 1.0
        %v1758 = vrcp.pop %v1757
        %v1759 = vmul.f32 %v1757, %v1758
        %v1760 = vsub.f32 1.0, %v1759
        %v1761 = vmul.f32 %v1758, %v1760
        %v1762 = vadd.f32 %v1758, %v1761
        %vm1763 = vweird.f32 %v1757
        %vm1764 = vweird.f32 %v1758
        %vm1765 = vmor %vm1763, %vm1764
        %v1766 = vsel %vm1765, %v1758, %v1762
        %v1767 = vand.u32 2147483647, %v1757
        %vm1768 = vcmp.eq.f32.partialorder %v1767, 8.507059e+37
        %v1769 = vand.u32 %v1757, 2147483648
        %v1770 = vor.u32 1.1754944e-38, %v1769
        %v1771 = vsel %vm1768, %v1770, %v1766
        %v1772 = vmul.f32 1.0, %v1771
        %v1773 = vxor.u32 %v1751, 2147483648
        %v1774 = vmul.f32 %v1773, 1.442695
        %v1775 = vpow.pop %v1774
        %v1776 = vadd.f32 %v1775, 1.0
        %v1777 = vrcp.pop %v1776
        %v1778 = vmul.f32 %v1776, %v1777
        %v1779 = vsub.f32 1.0, %v1778
        %v1780 = vmul.f32 %v1777, %v1779
        %v1781 = vadd.f32 %v1777, %v1780
        %vm1782 = vweird.f32 %v1776
        %vm1783 = vweird.f32 %v1777
        %vm1784 = vmor %vm1782, %vm1783
        %v1785 = vsel %vm1784, %v1777, %v1781
        %v1786 = vand.u32 2147483647, %v1776
        %vm1787 = vcmp.eq.f32.partialorder %v1786, 8.507059e+37
        %v1788 = vand.u32 %v1776, 2147483648
        %v1789 = vor.u32 1.1754944e-38, %v1788
        %v1790 = vsel %vm1787, %v1789, %v1785
        %v1791 = vmul.f32 1.0, %v1790
        %v1792 = vtanh.pop %v1752
        %v1793 = vxor.u32 %v1753, 2147483648
        %v1794 = vmul.f32 %v1793, 1.442695
        %v1795 = vpow.pop %v1794
        %v1796 = vadd.f32 %v1795, 1.0
        %v1797 = vrcp.pop %v1796
        %v1798 = vmul.f32 %v1796, %v1797
        %v1799 = vsub.f32 1.0, %v1798
        %v1800 = vmul.f32 %v1797, %v1799
        %v1801 = vadd.f32 %v1797, %v1800
        %vm1802 = vweird.f32 %v1796
        %vm1803 = vweird.f32 %v1797
        %vm1804 = vmor %vm1802, %vm1803
        %v1805 = vsel %vm1804, %v1797, %v1801
        %v1806 = vand.u32 2147483647, %v1796
        %vm1807 = vcmp.eq.f32.partialorder %v1806, 8.507059e+37
        %v1808 = vand.u32 %v1796, 2147483648
        %v1809 = vor.u32 1.1754944e-38, %v1808
        %v1810 = vsel %vm1807, %v1809, %v1805
        %v1811 = vmul.f32 1.0, %v1810
        %v1812 = vmul.f32 %v1791, %v1683
        %v1813 = vmul.f32 %v1772, %v1792
        %v1814 = vadd.f32 %v1812, %v1813
        %v1815 = vtanh.pop %v1814
        %v1816 = vmul.f32 %v1811, %v1815
        %s1817 = sadd.s32 %s677, 6
        %v1818 = vstv %s1817
        %vm1819 = vcmp.gt.s32.totalorder %v676, %v1818
        %v1820 = vsel %vm1819, 1, 0
        %1821 = vset.pattern.permute.xlu0 0
        %1822 = vperm.xlu0 %1821, %v1820
        %v1823 = vpop.permute.xlu0 %1822
        %vm1824 = vcmp.eq.s32.totalorder %v1823, 1
        %v1825 = vsel %vm1824, %v1814, %v1683
        %v1826 = vsel %vm1824, %v1816, %v1684
        %v1827 = vsel %vm1824, 1, 0
        %v1828 = vcvt.s32.f32 %v1827
        %v1829 = vmul.f32 %v1816, %v1828
        %s1830 = scalar_lea.vmem %s391, 48 [#allocation5]
        %1831 = vst [vmem:[%s1830] sm:$0xff] %v1829
        %s1832 = smul.u32 7, 4
        %s1833 = smul.addr %s1832, 8
        %s1834 = scalar_lea.vmem [#allocation2], %s1833
        %v1835 = vld [vmem:[%s1834] sm:$0xff]
        %v1836 = vld [vmem:[%s1834 + $0x8] sm:$0xff]
        %v1837 = vld [vmem:[%s1834 + $0x10] sm:$0xff]
        %v1838 = vld [vmem:[%s1834 + $0x18] sm:$0xff]
        %v1839 = vpack.c.bf16 %v1826, %v1826
        %1840 = vmatpush.bf16.msra.mxu0 %v812
        %1841 = vmatpush.bf16.msra.mxu0 %v808
        %1842 = vmatpush.bf16.msra.mxu0 %v804
        %1843 = vmatpush.bf16.msra.mxu0 %v800
        %1844 = vmatpush.bf16.msra.mxu0 %v796
        %1845 = vmatpush.bf16.msra.mxu0 %v792
        %1846 = vmatpush.bf16.msra.mxu0 %v788
        %1847 = vmatpush.bf16.msra.mxu0 %v784
        %1848 = vmatmul.bf16.gmra.mxu0 %v1839
        %v1849 = vpop.f32.mrf.mxu0
        %v1850 = vadd.f32 0.0, %v1849
        %v1851 = vpop.f32.mrf.mxu0
        %1852 = vdwg.mxu0
        %1853 = vmatpush.bf16.msra.mxu0 %v813
        %1854 = vmatpush.bf16.msra.mxu0 %v809
        %1855 = vmatpush.bf16.msra.mxu0 %v805
        %1856 = vmatpush.bf16.msra.mxu0 %v801
        %1857 = vmatpush.bf16.msra.mxu0 %v797
        %1858 = vmatpush.bf16.msra.mxu0 %v793
        %1859 = vmatpush.bf16.msra.mxu0 %v789
        %1860 = vmatpush.bf16.msra.mxu0 %v785
        %1861 = vmatmul.bf16.gmra.mxu0 %v1839
        %v1862 = vpop.f32.mrf.mxu0
        %v1863 = vadd.f32 0.0, %v1862
        %v1864 = vpop.f32.mrf.mxu0
        %1865 = vdwg.mxu0
        %1866 = vmatpush.bf16.msra.mxu0 %v814
        %1867 = vmatpush.bf16.msra.mxu0 %v810
        %1868 = vmatpush.bf16.msra.mxu0 %v806
        %1869 = vmatpush.bf16.msra.mxu0 %v802
        %1870 = vmatpush.bf16.msra.mxu0 %v798
        %1871 = vmatpush.bf16.msra.mxu0 %v794
        %1872 = vmatpush.bf16.msra.mxu0 %v790
        %1873 = vmatpush.bf16.msra.mxu0 %v786
        %1874 = vmatmul.bf16.gmra.mxu0 %v1839
        %v1875 = vpop.f32.mrf.mxu0
        %v1876 = vadd.f32 0.0, %v1875
        %v1877 = vpop.f32.mrf.mxu0
        %1878 = vdwg.mxu0
        %1879 = vmatpush.bf16.msra.mxu0 %v815
        %1880 = vmatpush.bf16.msra.mxu0 %v811
        %1881 = vmatpush.bf16.msra.mxu0 %v807
        %1882 = vmatpush.bf16.msra.mxu0 %v803
        %1883 = vmatpush.bf16.msra.mxu0 %v799
        %1884 = vmatpush.bf16.msra.mxu0 %v795
        %1885 = vmatpush.bf16.msra.mxu0 %v791
        %1886 = vmatpush.bf16.msra.mxu0 %v787
        %1887 = vmatmul.bf16.gmra.mxu0 %v1839
        %v1888 = vpop.f32.mrf.mxu0
        %v1889 = vadd.f32 0.0, %v1888
        %v1890 = vpop.f32.mrf.mxu0
        %1891 = vdwg.mxu0
        %v1892 = vadd.f32 %v1835, %v1850
        %v1893 = vadd.f32 %v1836, %v1863
        %v1894 = vadd.f32 %v1837, %v1876
        %v1895 = vadd.f32 %v1838, %v1889
        %v1896 = vxor.u32 %v1892, 2147483648
        %v1897 = vmul.f32 %v1896, 1.442695
        %v1898 = vpow.pop %v1897
        %v1899 = vadd.f32 %v1898, 1.0
        %v1900 = vrcp.pop %v1899
        %v1901 = vmul.f32 %v1899, %v1900
        %v1902 = vsub.f32 1.0, %v1901
        %v1903 = vmul.f32 %v1900, %v1902
        %v1904 = vadd.f32 %v1900, %v1903
        %vm1905 = vweird.f32 %v1899
        %vm1906 = vweird.f32 %v1900
        %vm1907 = vmor %vm1905, %vm1906
        %v1908 = vsel %vm1907, %v1900, %v1904
        %v1909 = vand.u32 2147483647, %v1899
        %vm1910 = vcmp.eq.f32.partialorder %v1909, 8.507059e+37
        %v1911 = vand.u32 %v1899, 2147483648
        %v1912 = vor.u32 1.1754944e-38, %v1911
        %v1913 = vsel %vm1910, %v1912, %v1908
        %v1914 = vmul.f32 1.0, %v1913
        %v1915 = vxor.u32 %v1893, 2147483648
        %v1916 = vmul.f32 %v1915, 1.442695
        %v1917 = vpow.pop %v1916
        %v1918 = vadd.f32 %v1917, 1.0
        %v1919 = vrcp.pop %v1918
        %v1920 = vmul.f32 %v1918, %v1919
        %v1921 = vsub.f32 1.0, %v1920
        %v1922 = vmul.f32 %v1919, %v1921
        %v1923 = vadd.f32 %v1919, %v1922
        %vm1924 = vweird.f32 %v1918
        %vm1925 = vweird.f32 %v1919
        %vm1926 = vmor %vm1924, %vm1925
        %v1927 = vsel %vm1926, %v1919, %v1923
        %v1928 = vand.u32 2147483647, %v1918
        %vm1929 = vcmp.eq.f32.partialorder %v1928, 8.507059e+37
        %v1930 = vand.u32 %v1918, 2147483648
        %v1931 = vor.u32 1.1754944e-38, %v1930
        %v1932 = vsel %vm1929, %v1931, %v1927
        %v1933 = vmul.f32 1.0, %v1932
        %v1934 = vtanh.pop %v1894
        %v1935 = vxor.u32 %v1895, 2147483648
        %v1936 = vmul.f32 %v1935, 1.442695
        %v1937 = vpow.pop %v1936
        %v1938 = vadd.f32 %v1937, 1.0
        %v1939 = vrcp.pop %v1938
        %v1940 = vmul.f32 %v1938, %v1939
        %v1941 = vsub.f32 1.0, %v1940
        %v1942 = vmul.f32 %v1939, %v1941
        %v1943 = vadd.f32 %v1939, %v1942
        %vm1944 = vweird.f32 %v1938
        %vm1945 = vweird.f32 %v1939
        %vm1946 = vmor %vm1944, %vm1945
        %v1947 = vsel %vm1946, %v1939, %v1943
        %v1948 = vand.u32 2147483647, %v1938
        %vm1949 = vcmp.eq.f32.partialorder %v1948, 8.507059e+37
        %v1950 = vand.u32 %v1938, 2147483648
        %v1951 = vor.u32 1.1754944e-38, %v1950
        %v1952 = vsel %vm1949, %v1951, %v1947
        %v1953 = vmul.f32 1.0, %v1952
        %v1954 = vmul.f32 %v1933, %v1825
        %v1955 = vmul.f32 %v1914, %v1934
        %v1956 = vadd.f32 %v1954, %v1955
        %v1957 = vtanh.pop %v1956
        %v1958 = vmul.f32 %v1953, %v1957
        %s1959 = sadd.s32 %s677, 7
        %v1960 = vstv %s1959
        %vm1961 = vcmp.gt.s32.totalorder %v676, %v1960
        %v1962 = vsel %vm1961, 1, 0
        %1963 = vset.pattern.permute.xlu0 0
        %1964 = vperm.xlu0 %1963, %v1962
        %v1965 = vpop.permute.xlu0 %1964
        %vm1966 = vcmp.eq.s32.totalorder %v1965, 1
        %v1967 = vsel %vm1966, %v1956, %v1825
        %v1968 = vsel %vm1966, %v1958, %v1826
        %v1969 = vsel %vm1966, 1, 0
        %v1970 = vcvt.s32.f32 %v1969
        %v1971 = vmul.f32 %v1958, %v1970
        %s1972 = scalar_lea.vmem %s391, 56 [#allocation5]
        %1973 = vst [vmem:[%s1972] sm:$0xff] %v1971
        %1974 = vst [vmem:[#allocation3] sm:$0xff] %v1968
        %1975 = vst [vmem:[#allocation4] sm:$0xff] %v1967
        // Predicated region
        $region53: #{base_local_encoder_forward.3} parent=47 // pred_check
          %p1976 = pneg %p429
        $region54: #{base_local_encoder_forward.3} parent=47 // pred_check_branch
          %1978 = sbr.rel (%p1976) target = $region56
        $region55: #{base_local_encoder_forward.3} parent=47 // pred_region
          %1979 = vst [vmem:[%s398] sm:$0xff] %v1968
          %1980 = vst [vmem:[%s405] sm:$0xff] %v1967
        $region56: #{base_local_encoder_forward.3} parent=47 // pred_fallthru
          _
        %s1981 = sand.u32 %s218, 1
        %s1982 = sand.u32 %s218, 1
        %s1983 = smul.addr %s1982, 64
        %s1984 = scalar_lea.vmem [#allocation5], %s1983
        %s1985 = sand.u32 %s244, 1
        %s1986 = scalar_lea.sflag [#allocation7], %s1985
        %s1987 = sand.u32 %s244, 1
        %s1988 = smul.addr %s1987, 8
        %s1989 = scalar_lea.vmem [#allocation6], %s1988
        %s1990 = sand.u32 %s270, 1
        %s1991 = scalar_lea.sflag [#allocation9], %s1990
        %s1992 = sand.u32 %s270, 1
        %s1993 = smul.addr %s1992, 8
        %s1994 = scalar_lea.vmem [#allocation8], %s1993
        // Predicated region
        $region57: #{base_local_encoder_forward.3} parent=47 // pred_check
          %p1995 = pneg %p228
        $region58: #{base_local_encoder_forward.3} parent=47 // pred_check_branch
          %1997 = sbr.rel (%p1995) target = $region60
        $region59: #{base_local_encoder_forward.3} parent=47 // pred_region
          %s1998 = smul.u32 8, %s32
          %s1999 = smul.addr %s1998, 2
          %s2000 = sadd.s32 %s31, %s1999
          %s2001 = smul.addr %s2000, 8
          %s2002 = scalar_lea.vmem %s7, %s2001
          // Predicated region
          $region61: #{base_local_encoder_forward.3} parent=59 // pred_check
            _
          $region62: #{base_local_encoder_forward.3} parent=59 // pred_check_branch
            %2004 = sbr.rel (0) target = $region64
          $region63: #{base_local_encoder_forward.3} parent=59 // pred_region
            // Predicated region
            $region65: #{base_local_encoder_forward.3} parent=63 // pred_check
              _
            $region66: #{base_local_encoder_forward.3} parent=63 // pred_check_branch
              %2006 = sbr.rel (0) target = $region68
            $region67: #{base_local_encoder_forward.3} parent=63 // pred_region
              // Predicated region
              $region80: #{base_local_encoder_forward.3} parent=67 // pred_check
                _
              $region81: #{base_local_encoder_forward.3} parent=67 // pred_check_branch
                %2036 = sbr.rel (0) target = $region83
              $region82: #{base_local_encoder_forward.3} parent=67 // pred_region
                loop: start=0, step=1, limit=1
                $region84: #{base_local_encoder_forward.3} parent=82 // loop_pre_header
                  _
                $region85: #{base_local_encoder_forward.3} parent=82 // loop_header
                  %s2038 = sphi 0, %s2042
                  %p2039 = scmp.ge.s32.totalorder %s2038, 1
                  %s2043 = sphi %s1984, %s1984
                  %s2044 = sphi %s2002, %s2002
                $region86: #{base_local_encoder_forward.3} parent=82 // loop_header_branch
                  %2041 = sbr.rel (%p2039) target = $region90
                $region87: #{base_local_encoder_forward.3} parent=82 // loop_body
                  %v2045 = vld [vmem:[%s2043] sm:$0xff]
                  %2046 = vst [vmem:[%s2044] sm:$0xff] %v2045
                  %v2047 = vld [vmem:[%s2043 + $0x8] sm:$0xff]
                  %2048 = vst [vmem:[%s2044 + $0x10] sm:$0xff] %v2047
                  %v2049 = vld [vmem:[%s2043 + $0x10] sm:$0xff]
                  %2050 = vst [vmem:[%s2044 + $0x20] sm:$0xff] %v2049
                  %v2051 = vld [vmem:[%s2043 + $0x18] sm:$0xff]
                  %2052 = vst [vmem:[%s2044 + $0x30] sm:$0xff] %v2051
                  %v2053 = vld [vmem:[%s2043 + $0x20] sm:$0xff]
                  %2054 = vst [vmem:[%s2044 + $0x40] sm:$0xff] %v2053
                  %v2055 = vld [vmem:[%s2043 + $0x28] sm:$0xff]
                  %2056 = vst [vmem:[%s2044 + $0x50] sm:$0xff] %v2055
                  %v2057 = vld [vmem:[%s2043 + $0x30] sm:$0xff]
                  %2058 = vst [vmem:[%s2044 + $0x60] sm:$0xff] %v2057
                  %v2059 = vld [vmem:[%s2043 + $0x38] sm:$0xff]
                  %2060 = vst [vmem:[%s2044 + $0x70] sm:$0xff] %v2059
                $region88: #{base_local_encoder_forward.3} parent=82 // loop_footer
                  %s2042 = sadd.s32 1, %s2038
                $region89: #{base_local_encoder_forward.3} parent=82 // loop_footer_branch
                  %2037 = sbr.rel target = $region85
                $region90: #{base_local_encoder_forward.3} parent=82 // loop_exit
                  _
              $region83: #{base_local_encoder_forward.3} parent=67 // pred_fallthru
                _
              // Predicated region
              $region91: #{base_local_encoder_forward.3} parent=67 // pred_check
                _
              $region92: #{base_local_encoder_forward.3} parent=67 // pred_check_branch
                %2062 = sbr.rel target = $region94
              $region93: #{base_local_encoder_forward.3} parent=67 // pred_region
                _
              $region94: #{base_local_encoder_forward.3} parent=67 // pred_fallthru
                _
            $region68: #{base_local_encoder_forward.3} parent=63 // pred_fallthru
              _
            // Predicated region
            $region69: #{base_local_encoder_forward.3} parent=63 // pred_check
              _
            $region70: #{base_local_encoder_forward.3} parent=63 // pred_check_branch
              %2008 = sbr.rel target = $region72
            $region71: #{base_local_encoder_forward.3} parent=63 // pred_region
              %s2010 = ssub.s32 256, 1
              loop: start=0, step=1, limit=1
              $region73: #{base_local_encoder_forward.3} parent=71 // loop_pre_header
                _
              $region74: #{base_local_encoder_forward.3} parent=71 // loop_header
                %s2012 = sphi 0, %s2016
                %p2013 = scmp.ge.s32.totalorder %s2012, 1
                %s2017 = sphi %s1984, %s1984
                %s2018 = sphi %s2002, %s2002
              $region75: #{base_local_encoder_forward.3} parent=71 // loop_header_branch
                %2015 = sbr.rel (%p2013) target = $region79
              $region76: #{base_local_encoder_forward.3} parent=71 // loop_body
                %v2019 = vld [vmem:[%s2017] sm:%s2010]
                %2020 = vst [vmem:[%s2018] sm:%s2010] %v2019
                %v2021 = vld [vmem:[%s2017 + $0x8] sm:%s2010]
                %2022 = vst [vmem:[%s2018 + $0x10] sm:%s2010] %v2021
                %v2023 = vld [vmem:[%s2017 + $0x10] sm:%s2010]
                %2024 = vst [vmem:[%s2018 + $0x20] sm:%s2010] %v2023
                %v2025 = vld [vmem:[%s2017 + $0x18] sm:%s2010]
                %2026 = vst [vmem:[%s2018 + $0x30] sm:%s2010] %v2025
                %v2027 = vld [vmem:[%s2017 + $0x20] sm:%s2010]
                %2028 = vst [vmem:[%s2018 + $0x40] sm:%s2010] %v2027
                %v2029 = vld [vmem:[%s2017 + $0x28] sm:%s2010]
                %2030 = vst [vmem:[%s2018 + $0x50] sm:%s2010] %v2029
                %v2031 = vld [vmem:[%s2017 + $0x30] sm:%s2010]
                %2032 = vst [vmem:[%s2018 + $0x60] sm:%s2010] %v2031
                %v2033 = vld [vmem:[%s2017 + $0x38] sm:%s2010]
                %2034 = vst [vmem:[%s2018 + $0x70] sm:%s2010] %v2033
              $region77: #{base_local_encoder_forward.3} parent=71 // loop_footer
                %s2016 = sadd.s32 1, %s2012
              $region78: #{base_local_encoder_forward.3} parent=71 // loop_footer_branch
                %2011 = sbr.rel target = $region74
              $region79: #{base_local_encoder_forward.3} parent=71 // loop_exit
                _
            $region72: #{base_local_encoder_forward.3} parent=63 // pred_fallthru
              _
          $region64: #{base_local_encoder_forward.3} parent=59 // pred_fallthru
            _
          %2063 = vnop
        $region60: #{base_local_encoder_forward.3} parent=47 // pred_fallthru
          _
        // Predicated region
        $region95: #{base_local_encoder_forward.3} parent=47 // pred_check
          %p2064 = pneg %p254
        $region96: #{base_local_encoder_forward.3} parent=47 // pred_check_branch
          %2066 = sbr.rel (%p2064) target = $region98
        $region97: #{base_local_encoder_forward.3} parent=47 // pred_region
          %2068 = vsyncadd %s1986, 0
          %s2069 = smul.addr %s31, 8
          %s2070 = scalar_lea.hbm %s8, %s2069
          %s2072 = sshll.u32 %s1989, 4
          %s2073 = int_to_ptr.vmem [resolvable:$true] %s2072
          %s2074 = sshll.u32 %s2070, 4
          %s2075 = int_to_ptr.hbm [resolvable:$true] %s2074
          %2077 = dma.vmem_to_hbm [thread:$0]  %s2073, 128, %s2075, %s1986
        $region98: #{base_local_encoder_forward.3} parent=47 // pred_fallthru
          _
        // Predicated region
        $region99: #{base_local_encoder_forward.3} parent=47 // pred_check
          %p2078 = pneg %p280
        $region100: #{base_local_encoder_forward.3} parent=47 // pred_check_branch
          %2080 = sbr.rel (%p2078) target = $region102
        $region101: #{base_local_encoder_forward.3} parent=47 // pred_region
          %2082 = vsyncadd %s1991, 0
          %s2083 = smul.addr %s31, 8
          %s2084 = scalar_lea.hbm %s9, %s2083
          %s2086 = sshll.u32 %s1994, 4
          %s2087 = int_to_ptr.vmem [resolvable:$true] %s2086
          %s2088 = sshll.u32 %s2084, 4
          %s2089 = int_to_ptr.hbm [resolvable:$true] %s2088
          %2091 = dma.vmem_to_hbm [thread:$0]  %s2087, 128, %s2089, %s1991
        $region102: #{base_local_encoder_forward.3} parent=47 // pred_fallthru
          _
      $region48: #{base_local_encoder_forward.3} parent=5 // pred_fallthru
        _
      %p2092 = scmp.le.s32.totalorder 2, %s22
      // Predicated region
      $region103: #{base_local_encoder_forward.3} parent=5 // pred_check
        %p2093 = pneg %p2092
      $region104: #{base_local_encoder_forward.3} parent=5 // pred_check_branch
        %2095 = sbr.rel (%p2093) target = $region106
      $region105: #{base_local_encoder_forward.3} parent=5 // pred_region
        %s2096 = ssub.s32 %s22, 2
        // Predicated region
        $region107: #{base_local_encoder_forward.3} parent=105 // pred_check
          %p2097 = pneg %p234
        $region108: #{base_local_encoder_forward.3} parent=105 // pred_check_branch
          %2099 = sbr.rel (%p2097) target = $region110
        $region109: #{base_local_encoder_forward.3} parent=105 // pred_region
          %s2100 = sand.u32 %s219, 1
          %s2101 = sand.u32 %s219, 1
          %s2102 = smul.addr %s2101, 64
          %s2103 = scalar_lea.vmem [#allocation5], %s2102
        $region110: #{base_local_encoder_forward.3} parent=105 // pred_fallthru
          _
        // Predicated region
        $region111: #{base_local_encoder_forward.3} parent=105 // pred_check
          %p2104 = pneg %p260
        $region112: #{base_local_encoder_forward.3} parent=105 // pred_check_branch
          %2106 = sbr.rel (%p2104) target = $region114
        $region113: #{base_local_encoder_forward.3} parent=105 // pred_region
          %s2107 = sand.u32 %s245, 1
          %s2108 = scalar_lea.sflag [#allocation7], %s2107
          %s2109 = sand.u32 %s245, 1
          %s2110 = smul.addr %s2109, 8
          %s2111 = scalar_lea.vmem [#allocation6], %s2110
          %2113 = dma.done %s2108, 128
        $region114: #{base_local_encoder_forward.3} parent=105 // pred_fallthru
          _
        // Predicated region
        $region115: #{base_local_encoder_forward.3} parent=105 // pred_check
          %p2114 = pneg %p286
        $region116: #{base_local_encoder_forward.3} parent=105 // pred_check_branch
          %2116 = sbr.rel (%p2114) target = $region118
        $region117: #{base_local_encoder_forward.3} parent=105 // pred_region
          %s2117 = sand.u32 %s271, 1
          %s2118 = scalar_lea.sflag [#allocation9], %s2117
          %s2119 = sand.u32 %s271, 1
          %s2120 = smul.addr %s2119, 8
          %s2121 = scalar_lea.vmem [#allocation8], %s2120
          %2123 = dma.done %s2118, 128
        $region118: #{base_local_encoder_forward.3} parent=105 // pred_fallthru
          _
      $region106: #{base_local_encoder_forward.3} parent=5 // pred_fallthru
        _
    $region6: #{base_local_encoder_forward.3} parent=1 // loop_footer
      %s26 = sadd.s32 1, %s22
    $region7: #{base_local_encoder_forward.3} parent=1 // loop_footer_branch
      %21 = sbr.rel target = $region3
    $region8: #{base_local_encoder_forward.3} parent=1 // loop_exit
      _
    %2124 = vsyncpa [#allocation7], 1
    %s2125 = scalar_lea.sflag [#allocation7], 1
    %2126 = vsyncpa %s2125, 1
    %2127 = vsyncpa [#allocation9], 1
    %s2128 = scalar_lea.sflag [#allocation9], 1
    %2129 = vsyncpa %s2128, 1

// kernel: base_local_encoder_forward.2
$region0: #{base_local_encoder_forward.2}
  #allocation0 [shape = 'u32[]', space=smem, size = 0x4, offset = 0x4, fixed_abs, tag = 'smem constant byte address 0x4 - core index']
  #allocation1 [shape = 'u32[72,128]{1,0:T(1,128)}', space=vmem, size = 0x9000, scoped, tag = 'internal scratch']
  #allocation2 [shape = 'f32[64,512]{1,0:T(8,128)}', space=vmem, size = 0x20000, scoped, tag = 'scratch operand']
  #allocation3 [shape = 'f32[8,128]{1,0:T(8,128)}', space=vmem, size = 0x1000, scoped, tag = 'scratch operand']
  #allocation4 [shape = 'f32[8,128]{1,0:T(8,128)}', space=vmem, size = 0x1000, scoped, tag = 'scratch operand']
  %s0 = inlined_call_operand.vmem [shape: f32[2,1,64,16], index: 0, kind: input, shape index: {}]
  %s1 = inlined_call_operand.vmem [shape: bf16[16,512], index: 1, kind: input, shape index: {}]
  %s2 = inlined_call_operand.vmem [shape: bf16[128,512], index: 2, kind: input, shape index: {}]
  %s3 = inlined_call_operand.vmem [shape: f32[1,512], index: 3, kind: input, shape index: {}]
  %s4 = inlined_call_operand.vmem [shape: f32[16,128], index: 4, kind: input, shape index: {}]
  %s5 = inlined_call_operand.vmem [shape: f32[16,128], index: 5, kind: input, shape index: {}]
  %s6 = inlined_call_operand.vmem [shape: s32[16,1], index: 6, kind: input, shape index: {}]
  %s7 = inlined_call_operand.vmem [shape: f32[8,16,128], index: 7, kind: output, shape index: {0}]
  %s8 = inlined_call_operand.vmem [shape: f32[16,128], index: 8, kind: output, shape index: {1}]
  %s9 = inlined_call_operand.vmem [shape: f32[16,128], index: 9, kind: output, shape index: {2}]
  %10 = xla_tuple %s7, %s8, %s9
  %s11 = sld [smem:[#allocation0]]
  $region119: #{base_local_encoder_forward.2} parent=0
    _
  %s13 = ssub.s32 1, %s11
  %s14 = scalar_select 0, %s13, %s11
  $region1: #{base_local_encoder_forward.2} parent=0
    #allocation5 [shape = 'u8[65536]{0}', space=vmem, size = 0x10000, scoped, tag = 'output window, operand 0']
    loop: start=0, step=1, limit=4
    $region2: #{base_local_encoder_forward.2} parent=1 // loop_pre_header
      _
    $region3: #{base_local_encoder_forward.2} parent=1 // loop_header
      %s16 = sphi 0, %s20
      %p17 = scmp.ge.s32.totalorder %s16, 4
      %s23 = sphi 0, %s35
      %s24 = sphi 0, %s31
      %s25 = sphi 0, %s23
      %s26 = sphi 0, %s24
      %s27 = sphi 0, %s25
      %s28 = sphi 0, %s26
      %s40 = sphi 0, %s42
      %s43 = sphi 0, %s40
      %s44 = sphi 0, %s43
      %s60 = sphi 0, %s44
      %s64 = sphi 0, %s64
      %s66 = sphi 0, %s64
      %s67 = sphi 0, %s66
      %s81 = sphi 0, %s67
      %s85 = sphi 0, %s85
      %s87 = sphi 0, %s85
      %s88 = sphi 0, %s87
      %s102 = sphi 0, %s88
      %s106 = sphi 0, %s106
      %s108 = sphi 0, %s106
      %s109 = sphi 0, %s108
      %s123 = sphi 0, %s109
      %s129 = sphi 0, %s131
      %s132 = sphi 0, %s129
      %s133 = sphi 0, %s132
      %s149 = sphi 0, %s133
      %s155 = sphi 0, %s157
      %s158 = sphi 0, %s155
      %s159 = sphi 0, %s158
      %s175 = sphi 0, %s159
      %s181 = sphi 0, %s183
      %s184 = sphi 0, %s181
      %s185 = sphi 0, %s184
      %s201 = sphi 0, %s185
      %s209 = sphi 0, %s211
      %s212 = sphi 0, %s209
      %s213 = sphi 0, %s212
      %s229 = sphi 0, %s213
      %s235 = sphi 0, %s237
      %s238 = sphi 0, %s235
      %s239 = sphi 0, %s238
      %s255 = sphi 0, %s239
      %s261 = sphi 0, %s263
      %s264 = sphi 0, %s261
      %s265 = sphi 0, %s264
      %s281 = sphi 0, %s265
    $region4: #{base_local_encoder_forward.2} parent=1 // loop_header_branch
      %19 = sbr.rel (%p17) target = $region8
    $region5: #{base_local_encoder_forward.2} parent=1 // loop_body
      %s21 = ssub.s32 %s16, 1
      %s22 = ssub.s32 %s16, 2
      %s29 = sadd.s32 1, %s24
      %p30 = scmp.ge.s32.totalorder %s29, 1
      %s31 = scalar_select %p30, 0, %s29
      %s32 = sadd.s32 1, %s23
      %s33 = scalar_select %p30, %s32, %s23
      %p34 = scmp.ge.s32.totalorder %s33, 2
      %s35 = scalar_select %p34, 0, %s33
      %s36 = ssub.s32 %s23, %s35
      %s37 = ssub.s32 %s24, %s31
      %s38 = sor.u32 %s36, %s37
      %p39 = scmp.eq.s32.totalorder %s38, 0
      %s41 = sadd.s32 %s40, 1
      %s42 = scalar_select %p39, %s40, %s41
      %p45 = pneg %p39
      %p46 = scmp.eq.s32.totalorder %s16, 1
      %p47 = por %p45, %p46
      %p48 = scmp.ne.s32.totalorder %s40, %s43
      %p49 = scmp.eq.s32.totalorder %s16, 0
      %p50 = por %p48, %p49
      %p51 = scmp.ne.s32.totalorder %s40, %s43
      %p52 = scmp.eq.s32.totalorder %s21, 1
      %p53 = por %p51, %p52
      %p54 = scmp.ne.s32.totalorder %s43, %s44
      %p55 = scmp.eq.s32.totalorder %s21, 0
      %p56 = por %p54, %p55
      %p57 = scmp.ne.s32.totalorder %s43, %s44
      %p58 = scmp.eq.s32.totalorder %s22, 1
      %p59 = por %p57, %p58
      %p61 = scmp.ne.s32.totalorder %s44, %s60
      %p62 = scmp.eq.s32.totalorder %s22, 0
      %p63 = por %p61, %p62
      %s65 = sadd.s32 %s64, 1
      %p68 = scmp.eq.s32.totalorder %s16, 1
      %p69 = scmp.ne.s32.totalorder %s64, %s66
      %p70 = scmp.eq.s32.totalorder %s16, 0
      %p71 = por %p69, %p70
      %p72 = scmp.ne.s32.totalorder %s64, %s66
      %p73 = scmp.eq.s32.totalorder %s21, 1
      %p74 = por %p72, %p73
      %p75 = scmp.ne.s32.totalorder %s66, %s67
      %p76 = scmp.eq.s32.totalorder %s21, 0
      %p77 = por %p75, %p76
      %p78 = scmp.ne.s32.totalorder %s66, %s67
      %p79 = scmp.eq.s32.totalorder %s22, 1
      %p80 = por %p78, %p79
      %p82 = scmp.ne.s32.totalorder %s67, %s81
      %p83 = scmp.eq.s32.totalorder %s22, 0
      %p84 = por %p82, %p83
      %s86 = sadd.s32 %s85, 1
      %p89 = scmp.eq.s32.totalorder %s16, 1
      %p90 = scmp.ne.s32.totalorder %s85, %s87
      %p91 = scmp.eq.s32.totalorder %s16, 0
      %p92 = por %p90, %p91
      %p93 = scmp.ne.s32.totalorder %s85, %s87
      %p94 = scmp.eq.s32.totalorder %s21, 1
      %p95 = por %p93, %p94
      %p96 = scmp.ne.s32.totalorder %s87, %s88
      %p97 = scmp.eq.s32.totalorder %s21, 0
      %p98 = por %p96, %p97
      %p99 = scmp.ne.s32.totalorder %s87, %s88
      %p100 = scmp.eq.s32.totalorder %s22, 1
      %p101 = por %p99, %p100
      %p103 = scmp.ne.s32.totalorder %s88, %s102
      %p104 = scmp.eq.s32.totalorder %s22, 0
      %p105 = por %p103, %p104
      %s107 = sadd.s32 %s106, 1
      %p110 = scmp.eq.s32.totalorder %s16, 1
      %p111 = scmp.ne.s32.totalorder %s106, %s108
      %p112 = scmp.eq.s32.totalorder %s16, 0
      %p113 = por %p111, %p112
      %p114 = scmp.ne.s32.totalorder %s106, %s108
      %p115 = scmp.eq.s32.totalorder %s21, 1
      %p116 = por %p114, %p115
      %p117 = scmp.ne.s32.totalorder %s108, %s109
      %p118 = scmp.eq.s32.totalorder %s21, 0
      %p119 = por %p117, %p118
      %p120 = scmp.ne.s32.totalorder %s108, %s109
      %p121 = scmp.eq.s32.totalorder %s22, 1
      %p122 = por %p120, %p121
      %p124 = scmp.ne.s32.totalorder %s109, %s123
      %p125 = scmp.eq.s32.totalorder %s22, 0
      %p126 = por %p124, %p125
      %s127 = ssub.s32 %s23, %s35
      %p128 = scmp.eq.s32.totalorder %s127, 0
      %s130 = sadd.s32 %s129, 1
      %s131 = scalar_select %p128, %s129, %s130
      %p134 = pneg %p128
      %p135 = scmp.eq.s32.totalorder %s16, 1
      %p136 = por %p134, %p135
      %p137 = scmp.ne.s32.totalorder %s129, %s132
      %p138 = scmp.eq.s32.totalorder %s16, 0
      %p139 = por %p137, %p138
      %p140 = scmp.ne.s32.totalorder %s129, %s132
      %p141 = scmp.eq.s32.totalorder %s21, 1
      %p142 = por %p140, %p141
      %p143 = scmp.ne.s32.totalorder %s132, %s133
      %p144 = scmp.eq.s32.totalorder %s21, 0
      %p145 = por %p143, %p144
      %p146 = scmp.ne.s32.totalorder %s132, %s133
      %p147 = scmp.eq.s32.totalorder %s22, 1
      %p148 = por %p146, %p147
      %p150 = scmp.ne.s32.totalorder %s133, %s149
      %p151 = scmp.eq.s32.totalorder %s22, 0
      %p152 = por %p150, %p151
      %s153 = ssub.s32 %s23, %s35
      %p154 = scmp.eq.s32.totalorder %s153, 0
      %s156 = sadd.s32 %s155, 1
      %s157 = scalar_select %p154, %s155, %s156
      %p160 = pneg %p154
      %p161 = scmp.eq.s32.totalorder %s16, 1
      %p162 = por %p160, %p161
      %p163 = scmp.ne.s32.totalorder %s155, %s158
      %p164 = scmp.eq.s32.totalorder %s16, 0
      %p165 = por %p163, %p164
      %p166 = scmp.ne.s32.totalorder %s155, %s158
      %p167 = scmp.eq.s32.totalorder %s21, 1
      %p168 = por %p166, %p167
      %p169 = scmp.ne.s32.totalorder %s158, %s159
      %p170 = scmp.eq.s32.totalorder %s21, 0
      %p171 = por %p169, %p170
      %p172 = scmp.ne.s32.totalorder %s158, %s159
      %p173 = scmp.eq.s32.totalorder %s22, 1
      %p174 = por %p172, %p173
      %p176 = scmp.ne.s32.totalorder %s159, %s175
      %p177 = scmp.eq.s32.totalorder %s22, 0
      %p178 = por %p176, %p177
      %s179 = ssub.s32 %s23, %s35
      %p180 = scmp.eq.s32.totalorder %s179, 0
      %s182 = sadd.s32 %s181, 1
      %s183 = scalar_select %p180, %s181, %s182
      %p186 = pneg %p180
      %p187 = scmp.eq.s32.totalorder %s16, 1
      %p188 = por %p186, %p187
      %p189 = scmp.ne.s32.totalorder %s181, %s184
      %p190 = scmp.eq.s32.totalorder %s16, 0
      %p191 = por %p189, %p190
      %p192 = scmp.ne.s32.totalorder %s181, %s184
      %p193 = scmp.eq.s32.totalorder %s21, 1
      %p194 = por %p192, %p193
      %p195 = scmp.ne.s32.totalorder %s184, %s185
      %p196 = scmp.eq.s32.totalorder %s21, 0
      %p197 = por %p195, %p196
      %p198 = scmp.ne.s32.totalorder %s184, %s185
      %p199 = scmp.eq.s32.totalorder %s22, 1
      %p200 = por %p198, %p199
      %p202 = scmp.ne.s32.totalorder %s185, %s201
      %p203 = scmp.eq.s32.totalorder %s22, 0
      %p204 = por %p202, %p203
      %s205 = ssub.s32 %s24, %s31
      %s206 = ssub.s32 %s23, %s35
      %s207 = sor.u32 %s205, %s206
      %p208 = scmp.eq.s32.totalorder %s207, 0
      %s210 = sadd.s32 %s209, 1
      %s211 = scalar_select %p208, %s209, %s210
      %p214 = pneg %p208
      %p215 = scmp.eq.s32.totalorder %s16, 1
      %p216 = por %p214, %p215
      %p217 = scmp.ne.s32.totalorder %s209, %s212
      %p218 = scmp.eq.s32.totalorder %s16, 0
      %p219 = por %p217, %p218
      %p220 = scmp.ne.s32.totalorder %s209, %s212
      %p221 = scmp.eq.s32.totalorder %s21, 1
      %p222 = por %p220, %p221
      %p223 = scmp.ne.s32.totalorder %s212, %s213
      %p224 = scmp.eq.s32.totalorder %s21, 0
      %p225 = por %p223, %p224
      %p226 = scmp.ne.s32.totalorder %s212, %s213
      %p227 = scmp.eq.s32.totalorder %s22, 1
      %p228 = por %p226, %p227
      %p230 = scmp.ne.s32.totalorder %s213, %s229
      %p231 = scmp.eq.s32.totalorder %s22, 0
      %p232 = por %p230, %p231
      %s233 = ssub.s32 %s23, %s35
      %p234 = scmp.eq.s32.totalorder %s233, 0
      %s236 = sadd.s32 %s235, 1
      %s237 = scalar_select %p234, %s235, %s236
      %p240 = pneg %p234
      %p241 = scmp.eq.s32.totalorder %s16, 1
      %p242 = por %p240, %p241
      %p243 = scmp.ne.s32.totalorder %s235, %s238
      %p244 = scmp.eq.s32.totalorder %s16, 0
      %p245 = por %p243, %p244
      %p246 = scmp.ne.s32.totalorder %s235, %s238
      %p247 = scmp.eq.s32.totalorder %s21, 1
      %p248 = por %p246, %p247
      %p249 = scmp.ne.s32.totalorder %s238, %s239
      %p250 = scmp.eq.s32.totalorder %s21, 0
      %p251 = por %p249, %p250
      %p252 = scmp.ne.s32.totalorder %s238, %s239
      %p253 = scmp.eq.s32.totalorder %s22, 1
      %p254 = por %p252, %p253
      %p256 = scmp.ne.s32.totalorder %s239, %s255
      %p257 = scmp.eq.s32.totalorder %s22, 0
      %p258 = por %p256, %p257
      %s259 = ssub.s32 %s23, %s35
      %p260 = scmp.eq.s32.totalorder %s259, 0
      %s262 = sadd.s32 %s261, 1
      %s263 = scalar_select %p260, %s261, %s262
      %p266 = pneg %p260
      %p267 = scmp.eq.s32.totalorder %s16, 1
      %p268 = por %p266, %p267
      %p269 = scmp.ne.s32.totalorder %s261, %s264
      %p270 = scmp.eq.s32.totalorder %s16, 0
      %p271 = por %p269, %p270
      %p272 = scmp.ne.s32.totalorder %s261, %s264
      %p273 = scmp.eq.s32.totalorder %s21, 1
      %p274 = por %p272, %p273
      %p275 = scmp.ne.s32.totalorder %s264, %s265
      %p276 = scmp.eq.s32.totalorder %s21, 0
      %p277 = por %p275, %p276
      %p278 = scmp.ne.s32.totalorder %s264, %s265
      %p279 = scmp.eq.s32.totalorder %s22, 1
      %p280 = por %p278, %p279
      %p282 = scmp.ne.s32.totalorder %s265, %s281
      %p283 = scmp.eq.s32.totalorder %s22, 0
      %p284 = por %p282, %p283
      %p285 = scmp.le.s32.totalorder 1, %s16
      %p286 = scmp.lt.s32.totalorder %s16, 3
      %p287 = pnand %p285, %p286
      %p288 = pneg %p287
      // Predicated region
      $region9: #{base_local_encoder_forward.2} parent=5 // pred_check
        _
      $region10: #{base_local_encoder_forward.2} parent=5 // pred_check_branch
        %290 = sbr.rel (%p287) target = $region12
      $region11: #{base_local_encoder_forward.2} parent=5 // pred_region
        %s291 = ssub.s32 %s16, 1
        // Predicated region
        $region13: #{base_local_encoder_forward.2} parent=11 // pred_check
          %p292 = pneg %p77
        $region14: #{base_local_encoder_forward.2} parent=11 // pred_check_branch
          %294 = sbr.rel (%p292) target = $region16
        $region15: #{base_local_encoder_forward.2} parent=11 // pred_region
          _
        $region16: #{base_local_encoder_forward.2} parent=11 // pred_fallthru
          _
        // Predicated region
        $region17: #{base_local_encoder_forward.2} parent=11 // pred_check
          %p295 = pneg %p98
        $region18: #{base_local_encoder_forward.2} parent=11 // pred_check_branch
          %297 = sbr.rel (%p295) target = $region20
        $region19: #{base_local_encoder_forward.2} parent=11 // pred_region
          _
        $region20: #{base_local_encoder_forward.2} parent=11 // pred_fallthru
          _
        // Predicated region
        $region21: #{base_local_encoder_forward.2} parent=11 // pred_check
          %p298 = pneg %p119
        $region22: #{base_local_encoder_forward.2} parent=11 // pred_check_branch
          %300 = sbr.rel (%p298) target = $region24
        $region23: #{base_local_encoder_forward.2} parent=11 // pred_region
          _
        $region24: #{base_local_encoder_forward.2} parent=11 // pred_fallthru
          _
      $region12: #{base_local_encoder_forward.2} parent=5 // pred_fallthru
        _
      %p301 = scmp.lt.s32.totalorder %s16, 2
      // Predicated region
      $region25: #{base_local_encoder_forward.2} parent=5 // pred_check
        %p302 = pneg %p301
      $region26: #{base_local_encoder_forward.2} parent=5 // pred_check_branch
        %304 = sbr.rel (%p302) target = $region28
      $region27: #{base_local_encoder_forward.2} parent=5 // pred_region
        // Predicated region
        $region29: #{base_local_encoder_forward.2} parent=27 // pred_check
          %p305 = pneg %p50
        $region30: #{base_local_encoder_forward.2} parent=27 // pred_check_branch
          %307 = sbr.rel (%p305) target = $region32
        $region31: #{base_local_encoder_forward.2} parent=27 // pred_region
          %p308 = scmp.lt.s32.totalorder %s23, 1
          %s309 = scalar_select %p308, %s23, 1
          %p310 = scmp.lt.s32.totalorder %s24, 0
          %s311 = scalar_select %p310, %s24, 0
          %s312 = smul.addr %s311, 8
          %s313 = smul.addr %s309, 8
          %s314 = sadd.s32 %s312, %s313
          %s315 = smul.addr %s314, 8
          %s316 = scalar_lea.vmem %s0, %s315
        $region32: #{base_local_encoder_forward.2} parent=27 // pred_fallthru
          _
        // Predicated region
        $region33: #{base_local_encoder_forward.2} parent=27 // pred_check
          %p317 = pneg %p139
        $region34: #{base_local_encoder_forward.2} parent=27 // pred_check_branch
          %319 = sbr.rel (%p317) target = $region36
        $region35: #{base_local_encoder_forward.2} parent=27 // pred_region
          %p320 = scmp.lt.s32.totalorder %s23, 1
          %s321 = scalar_select %p320, %s23, 1
          %s322 = smul.addr %s321, 8
          %s323 = scalar_lea.vmem %s4, %s322
        $region36: #{base_local_encoder_forward.2} parent=27 // pred_fallthru
          _
        // Predicated region
        $region37: #{base_local_encoder_forward.2} parent=27 // pred_check
          %p324 = pneg %p165
        $region38: #{base_local_encoder_forward.2} parent=27 // pred_check_branch
          %326 = sbr.rel (%p324) target = $region40
        $region39: #{base_local_encoder_forward.2} parent=27 // pred_region
          %p327 = scmp.lt.s32.totalorder %s23, 1
          %s328 = scalar_select %p327, %s23, 1
          %s329 = smul.addr %s328, 8
          %s330 = scalar_lea.vmem %s5, %s329
        $region40: #{base_local_encoder_forward.2} parent=27 // pred_fallthru
          _
        // Predicated region
        $region41: #{base_local_encoder_forward.2} parent=27 // pred_check
          %p331 = pneg %p191
        $region42: #{base_local_encoder_forward.2} parent=27 // pred_check_branch
          %333 = sbr.rel (%p331) target = $region44
        $region43: #{base_local_encoder_forward.2} parent=27 // pred_region
          %p334 = scmp.lt.s32.totalorder %s23, 1
          %s335 = scalar_select %p334, %s23, 1
          %s336 = smul.addr %s335, 8
          %s337 = scalar_lea.vmem %s6, %s336
        $region44: #{base_local_encoder_forward.2} parent=27 // pred_fallthru
          _
      $region28: #{base_local_encoder_forward.2} parent=5 // pred_fallthru
        _
      %p338 = scmp.le.s32.totalorder 1, %s16
      %p339 = scmp.lt.s32.totalorder %s16, 3
      %p340 = pnand %p338, %p339
      %p341 = pneg %p340
      // Predicated region
      $region45: #{base_local_encoder_forward.2} parent=5 // pred_check
        _
      $region46: #{base_local_encoder_forward.2} parent=5 // pred_check_branch
        %343 = sbr.rel (%p340) target = $region48
      $region47: #{base_local_encoder_forward.2} parent=5 // pred_region
        %s344 = ssub.s32 %s16, 1
        %p345 = scmp.lt.s32.totalorder %s25, 1
        %s346 = scalar_select %p345, %s25, 1
        %p347 = scmp.lt.s32.totalorder %s26, 0
        %s348 = scalar_select %p347, %s26, 0
        %s349 = smul.addr %s348, 8
        %s350 = smul.addr %s346, 8
        %s351 = sadd.s32 %s349, %s350
        %s352 = smul.addr %s351, 8
        %s353 = scalar_lea.vmem %s0, %s352
        %p354 = pneg %p56
        %p355 = pneg %p53
        %p356 = pneg %p77
        %p357 = pneg %p74
        %p358 = pneg %p98
        %p359 = pneg %p95
        %p360 = pneg %p119
        %p361 = pneg %p116
        %p362 = scmp.lt.s32.totalorder %s25, 1
        %s363 = scalar_select %p362, %s25, 1
        %s364 = smul.addr %s363, 8
        %s365 = scalar_lea.vmem %s4, %s364
        %p366 = pneg %p145
        %p367 = pneg %p142
        %p368 = scmp.lt.s32.totalorder %s25, 1
        %s369 = scalar_select %p368, %s25, 1
        %s370 = smul.addr %s369, 8
        %s371 = scalar_lea.vmem %s5, %s370
        %p372 = pneg %p171
        %p373 = pneg %p168
        %p374 = scmp.lt.s32.totalorder %s25, 1
        %s375 = scalar_select %p374, %s25, 1
        %s376 = smul.addr %s375, 8
        %s377 = scalar_lea.vmem %s6, %s376
        %p378 = pneg %p197
        %p379 = pneg %p194
        %p380 = pneg %p225
        %p381 = pneg %p222
        %s382 = sand.u32 %s212, 1
        %s383 = sand.u32 %s212, 1
        %s384 = smul.addr %s383, 64
        %s385 = scalar_lea.vmem [#allocation5], %s384
        %p386 = pneg %p251
        %p387 = pneg %p248
        %p388 = scmp.lt.s32.totalorder %s25, 1
        %s389 = scalar_select %p388, %s25, 1
        %s390 = smul.addr %s389, 8
        %s391 = scalar_lea.vmem %s8, %s390
        %p392 = pneg %p277
        %p393 = pneg %p274
        %p394 = scmp.lt.s32.totalorder %s25, 1
        %s395 = scalar_select %p394, %s25, 1
        %s396 = smul.addr %s395, 8
        %s397 = scalar_lea.vmem %s9, %s396
        %p398 = scmp.lt.s32.totalorder %s25, 1
        %s399 = scalar_select %p398, %s25, 1
        %p400 = scmp.lt.s32.totalorder %s26, 0
        %s401 = scalar_select %p400, %s26, 0
        %s402 = smul.addr %s401, 8
        %s403 = smul.addr %s399, 8
        %s404 = sadd.s32 %s402, %s403
        %s405 = smul.addr %s404, 8
        %s406 = scalar_lea.vmem %s0, %s405
        %p407 = scmp.lt.s32.totalorder %s25, 1
        %s408 = scalar_select %p407, %s25, 1
        %s409 = smul.addr %s408, 8
        %s410 = scalar_lea.vmem %s4, %s409
        %p411 = scmp.lt.s32.totalorder %s25, 1
        %s412 = scalar_select %p411, %s25, 1
        %s413 = smul.addr %s412, 8
        %s414 = scalar_lea.vmem %s5, %s413
        %p415 = scmp.lt.s32.totalorder %s25, 1
        %s416 = scalar_select %p415, %s25, 1
        %s417 = smul.addr %s416, 8
        %s418 = scalar_lea.vmem %s6, %s417
        %s419 = smul.u32 8, %s26
        %p420 = scmp.lt.s32.totalorder %s25, 1
        %s421 = scalar_select %p420, %s25, 1
        %s422 = smul.addr %s421, 8
        %s423 = scalar_lea.vmem %s8, %s422
        %p424 = scmp.lt.s32.totalorder %s25, 1
        %s425 = scalar_select %p424, %s25, 1
        %s426 = smul.addr %s425, 8
        %s427 = scalar_lea.vmem %s9, %s426
        %p429 = scmp.eq.s32.totalorder %s26, 0
        // Predicated region
        $region49: #{base_local_encoder_forward.2} parent=47 // pred_check
          %p430 = pneg %p429
        $region50: #{base_local_encoder_forward.2} parent=47 // pred_check_branch
          %432 = sbr.rel (%p430) target = $region52
        $region51: #{base_local_encoder_forward.2} parent=47 // pred_region
          %v433 = vld [vmem:[%s410] sm:$0xff]
          %434 = vst [vmem:[#allocation3] sm:$0xff] %v433
          %v435 = vld [vmem:[%s414] sm:$0xff]
          %436 = vst [vmem:[#allocation4] sm:$0xff] %v435
        $region52: #{base_local_encoder_forward.2} parent=47 // pred_fallthru
          _
        %v437 = vld [vmem:[%s406] sm:$0xff]
        %v438 = vld [vmem:[%s406 + $0x8] sm:$0xff]
        %v439 = vld [vmem:[%s406 + $0x10] sm:$0xff]
        %v440 = vld [vmem:[%s406 + $0x18] sm:$0xff]
        %v441 = vld [vmem:[%s406 + $0x20] sm:$0xff]
        %v442 = vld [vmem:[%s406 + $0x28] sm:$0xff]
        %v443 = vld [vmem:[%s406 + $0x30] sm:$0xff]
        %v444 = vld [vmem:[%s406 + $0x38] sm:$0xff]
        %v445 = vpack.c.bf16 %v438, %v437
        %v446 = vpack.c.bf16 %v440, %v439
        %v447 = vpack.c.bf16 %v442, %v441
        %v448 = vpack.c.bf16 %v444, %v443
        %v449 = vld [vmem:[%s1] sm:$0xff]
        %v450 = vld [vmem:[%s1 + $0x8] sm:$0xff]
        %v451 = vld [vmem:[%s1 + $0x10] sm:$0xff]
        %v452 = vld [vmem:[%s1 + $0x18] sm:$0xff]
        %v453 = vld [vmem:[%s3] sm:$0xf]
        %v455 = vperm.slane %v453, 0
        %v456 = vperm.slane %v453, 1
        %v457 = vperm.slane %v453, 2
        %v458 = vperm.slane %v453, 3
        %v467 = vunpack.c.l.b16 %v449
        %v468 = vunpack.c.h.b16 %v449
        %v469 = vunpack.c.l.b16 %v450
        %v470 = vunpack.c.h.b16 %v450
        %v471 = vunpack.c.l.b16 %v451
        %v472 = vunpack.c.h.b16 %v451
        %v473 = vunpack.c.l.b16 %v452
        %v474 = vunpack.c.h.b16 %v452
        %v475 = vpack.c.b16 %v471, %v467
        %v476 = vpack.c.b16 %v472, %v468
        %v477 = vpack.c.b16 %v473, %v469
        %v478 = vpack.c.b16 %v474, %v470
        %vm483 = vcmask 130048
        %v485 = vsel %vm483, %v445, 0
        %v488 = vsel %vm483, %v446, 0
        %v491 = vsel %vm483, %v447, 0
        %v494 = vsel %vm483, %v448, 0
        %496 = vmatpush.bf16.msra.mxu0 0
        %497 = vmatpush.bf16.msra.mxu0 0
        %498 = vmatpush.bf16.msra.mxu0 0
        %499 = vmatpush.bf16.msra.mxu0 0
        %500 = vmatpush.bf16.msra.mxu0 0
        %501 = vmatpush.bf16.msra.mxu0 0
        %502 = vmatpush.bf16.msra.mxu0 0
        %503 = vmatpush.bf16.msra.mxu0 %v475
        %504 = vmatmul.bf16.gmra.mxu0 %v485
        %v505 = vpop.f32.mrf.mxu0
        %v506 = vadd.f32 %v455, %v505
        %v507 = vpop.f32.mrf.mxu0
        %v508 = vadd.f32 %v455, %v507
        %509 = vmatmul.bf16.gmra.mxu0 %v488
        %v510 = vpop.f32.mrf.mxu0
        %v511 = vadd.f32 %v455, %v510
        %v512 = vpop.f32.mrf.mxu0
        %v513 = vadd.f32 %v455, %v512
        %514 = vmatmul.bf16.gmra.mxu0 %v491
        %v515 = vpop.f32.mrf.mxu0
        %v516 = vadd.f32 %v455, %v515
        %v517 = vpop.f32.mrf.mxu0
        %v518 = vadd.f32 %v455, %v517
        %519 = vmatmul.bf16.gmra.mxu0 %v494
        %v520 = vpop.f32.mrf.mxu0
        %v521 = vadd.f32 %v455, %v520
        %v522 = vpop.f32.mrf.mxu0
        %v523 = vadd.f32 %v455, %v522
        %524 = vdwg.mxu0
        %525 = vmatpush.bf16.msra.mxu0 0
        %526 = vmatpush.bf16.msra.mxu0 0
        %527 = vmatpush.bf16.msra.mxu0 0
        %528 = vmatpush.bf16.msra.mxu0 0
        %529 = vmatpush.bf16.msra.mxu0 0
        %530 = vmatpush.bf16.msra.mxu0 0
        %531 = vmatpush.bf16.msra.mxu0 0
        %532 = vmatpush.bf16.msra.mxu0 %v476
        %533 = vmatmul.bf16.gmra.mxu0 %v485
        %v534 = vpop.f32.mrf.mxu0
        %v535 = vadd.f32 %v456, %v534
        %v536 = vpop.f32.mrf.mxu0
        %v537 = vadd.f32 %v456, %v536
        %538 = vmatmul.bf16.gmra.mxu0 %v488
        %v539 = vpop.f32.mrf.mxu0
        %v540 = vadd.f32 %v456, %v539
        %v541 = vpop.f32.mrf.mxu0
        %v542 = vadd.f32 %v456, %v541
        %543 = vmatmul.bf16.gmra.mxu0 %v491
        %v544 = vpop.f32.mrf.mxu0
        %v545 = vadd.f32 %v456, %v544
        %v546 = vpop.f32.mrf.mxu0
        %v547 = vadd.f32 %v456, %v546
        %548 = vmatmul.bf16.gmra.mxu0 %v494
        %v549 = vpop.f32.mrf.mxu0
        %v550 = vadd.f32 %v456, %v549
        %v551 = vpop.f32.mrf.mxu0
        %v552 = vadd.f32 %v456, %v551
        %553 = vdwg.mxu0
        %554 = vmatpush.bf16.msra.mxu0 0
        %555 = vmatpush.bf16.msra.mxu0 0
        %556 = vmatpush.bf16.msra.mxu0 0
        %557 = vmatpush.bf16.msra.mxu0 0
        %558 = vmatpush.bf16.msra.mxu0 0
        %559 = vmatpush.bf16.msra.mxu0 0
        %560 = vmatpush.bf16.msra.mxu0 0
        %561 = vmatpush.bf16.msra.mxu0 %v477
        %562 = vmatmul.bf16.gmra.mxu0 %v485
        %v563 = vpop.f32.mrf.mxu0
        %v564 = vadd.f32 %v457, %v563
        %v565 = vpop.f32.mrf.mxu0
        %v566 = vadd.f32 %v457, %v565
        %567 = vmatmul.bf16.gmra.mxu0 %v488
        %v568 = vpop.f32.mrf.mxu0
        %v569 = vadd.f32 %v457, %v568
        %v570 = vpop.f32.mrf.mxu0
        %v571 = vadd.f32 %v457, %v570
        %572 = vmatmul.bf16.gmra.mxu0 %v491
        %v573 = vpop.f32.mrf.mxu0
        %v574 = vadd.f32 %v457, %v573
        %v575 = vpop.f32.mrf.mxu0
        %v576 = vadd.f32 %v457, %v575
        %577 = vmatmul.bf16.gmra.mxu0 %v494
        %v578 = vpop.f32.mrf.mxu0
        %v579 = vadd.f32 %v457, %v578
        %v580 = vpop.f32.mrf.mxu0
        %v581 = vadd.f32 %v457, %v580
        %582 = vdwg.mxu0
        %583 = vmatpush.bf16.msra.mxu0 0
        %584 = vmatpush.bf16.msra.mxu0 0
        %585 = vmatpush.bf16.msra.mxu0 0
        %586 = vmatpush.bf16.msra.mxu0 0
        %587 = vmatpush.bf16.msra.mxu0 0
        %588 = vmatpush.bf16.msra.mxu0 0
        %589 = vmatpush.bf16.msra.mxu0 0
        %590 = vmatpush.bf16.msra.mxu0 %v478
        %591 = vmatmul.bf16.gmra.mxu0 %v485
        %v592 = vpop.f32.mrf.mxu0
        %v593 = vadd.f32 %v458, %v592
        %v594 = vpop.f32.mrf.mxu0
        %v595 = vadd.f32 %v458, %v594
        %596 = vmatmul.bf16.gmra.mxu0 %v488
        %v597 = vpop.f32.mrf.mxu0
        %v598 = vadd.f32 %v458, %v597
        %v599 = vpop.f32.mrf.mxu0
        %v600 = vadd.f32 %v458, %v599
        %601 = vmatmul.bf16.gmra.mxu0 %v491
        %v602 = vpop.f32.mrf.mxu0
        %v603 = vadd.f32 %v458, %v602
        %v604 = vpop.f32.mrf.mxu0
        %v605 = vadd.f32 %v458, %v604
        %606 = vmatmul.bf16.gmra.mxu0 %v494
        %v607 = vpop.f32.mrf.mxu0
        %v608 = vadd.f32 %v458, %v607
        %v609 = vpop.f32.mrf.mxu0
        %v610 = vadd.f32 %v458, %v609
        %611 = vdwg.mxu0
        %612 = vst [vmem:[#allocation2] sm:$0xff] %v506
        %613 = vst [vmem:[#allocation2 + $0x8] sm:$0xff] %v535
        %614 = vst [vmem:[#allocation2 + $0x10] sm:$0xff] %v564
        %615 = vst [vmem:[#allocation2 + $0x18] sm:$0xff] %v593
        %616 = vst [vmem:[#allocation2 + $0x20] sm:$0xff] %v508
        %617 = vst [vmem:[#allocation2 + $0x28] sm:$0xff] %v537
        %618 = vst [vmem:[#allocation2 + $0x30] sm:$0xff] %v566
        %619 = vst [vmem:[#allocation2 + $0x38] sm:$0xff] %v595
        %620 = vst [vmem:[#allocation2 + $0x40] sm:$0xff] %v511
        %621 = vst [vmem:[#allocation2 + $0x48] sm:$0xff] %v540
        %622 = vst [vmem:[#allocation2 + $0x50] sm:$0xff] %v569
        %623 = vst [vmem:[#allocation2 + $0x58] sm:$0xff] %v598
        %624 = vst [vmem:[#allocation2 + $0x60] sm:$0xff] %v513
        %625 = vst [vmem:[#allocation2 + $0x68] sm:$0xff] %v542
        %626 = vst [vmem:[#allocation2 + $0x70] sm:$0xff] %v571
        %627 = vst [vmem:[#allocation2 + $0x78] sm:$0xff] %v600
        %628 = vst [vmem:[#allocation2 + $0x80] sm:$0xff] %v516
        %629 = vst [vmem:[#allocation2 + $0x88] sm:$0xff] %v545
        %630 = vst [vmem:[#allocation2 + $0x90] sm:$0xff] %v574
        %631 = vst [vmem:[#allocation2 + $0x98] sm:$0xff] %v603
        %632 = vst [vmem:[#allocation2 + $0xa0] sm:$0xff] %v518
        %633 = vst [vmem:[#allocation2 + $0xa8] sm:$0xff] %v547
        %634 = vst [vmem:[#allocation2 + $0xb0] sm:$0xff] %v576
        %635 = vst [vmem:[#allocation2 + $0xb8] sm:$0xff] %v605
        %636 = vst [vmem:[#allocation2 + $0xc0] sm:$0xff] %v521
        %637 = vst [vmem:[#allocation2 + $0xc8] sm:$0xff] %v550
        %638 = vst [vmem:[#allocation2 + $0xd0] sm:$0xff] %v579
        %639 = vst [vmem:[#allocation2 + $0xd8] sm:$0xff] %v608
        %640 = vst [vmem:[#allocation2 + $0xe0] sm:$0xff] %v523
        %641 = vst [vmem:[#allocation2 + $0xe8] sm:$0xff] %v552
        %642 = vst [vmem:[#allocation2 + $0xf0] sm:$0xff] %v581
        %643 = vst [vmem:[#allocation2 + $0xf8] sm:$0xff] %v610
        %v644 = vld [vmem:[%s2] sm:$0xff]
        %v645 = vld [vmem:[%s2 + $0x8] sm:$0xff]
        %v646 = vld [vmem:[%s2 + $0x10] sm:$0xff]
        %v647 = vld [vmem:[%s2 + $0x18] sm:$0xff]
        %v648 = vld [vmem:[%s2 + $0x20] sm:$0xff]
        %v649 = vld [vmem:[%s2 + $0x28] sm:$0xff]
        %v650 = vld [vmem:[%s2 + $0x30] sm:$0xff]
        %v651 = vld [vmem:[%s2 + $0x38] sm:$0xff]
        %v652 = vld [vmem:[%s2 + $0x40] sm:$0xff]
        %v653 = vld [vmem:[%s2 + $0x48] sm:$0xff]
        %v654 = vld [vmem:[%s2 + $0x50] sm:$0xff]
        %v655 = vld [vmem:[%s2 + $0x58] sm:$0xff]
        %v656 = vld [vmem:[%s2 + $0x60] sm:$0xff]
        %v657 = vld [vmem:[%s2 + $0x68] sm:$0xff]
        %v658 = vld [vmem:[%s2 + $0x70] sm:$0xff]
        %v659 = vld [vmem:[%s2 + $0x78] sm:$0xff]
        %v660 = vld [vmem:[%s2 + $0x80] sm:$0xff]
        %v661 = vld [vmem:[%s2 + $0x88] sm:$0xff]
        %v662 = vld [vmem:[%s2 + $0x90] sm:$0xff]
        %v663 = vld [vmem:[%s2 + $0x98] sm:$0xff]
        %v664 = vld [vmem:[%s2 + $0xa0] sm:$0xff]
        %v665 = vld [vmem:[%s2 + $0xa8] sm:$0xff]
        %v666 = vld [vmem:[%s2 + $0xb0] sm:$0xff]
        %v667 = vld [vmem:[%s2 + $0xb8] sm:$0xff]
        %v668 = vld [vmem:[%s2 + $0xc0] sm:$0xff]
        %v669 = vld [vmem:[%s2 + $0xc8] sm:$0xff]
        %v670 = vld [vmem:[%s2 + $0xd0] sm:$0xff]
        %v671 = vld [vmem:[%s2 + $0xd8] sm:$0xff]
        %v672 = vld [vmem:[%s2 + $0xe0] sm:$0xff]
        %v673 = vld [vmem:[%s2 + $0xe8] sm:$0xff]
        %v674 = vld [vmem:[%s2 + $0xf0] sm:$0xff]
        %v675 = vld [vmem:[%s2 + $0xf8] sm:$0xff]
        %v676 = vld [vmem:[%s418] sm:$0xff]
        %s677 = smul.u32 %s26, 8
        %v678 = vld [vmem:[#allocation3] sm:$0xff]
        %v679 = vld [vmem:[#allocation4] sm:$0xff]
        %s680 = smul.u32 0, 4
        %s681 = smul.addr %s680, 8
        %s682 = scalar_lea.vmem [#allocation2], %s681
        %v683 = vld [vmem:[%s682] sm:$0xff]
        %v684 = vld [vmem:[%s682 + $0x8] sm:$0xff]
        %v685 = vld [vmem:[%s682 + $0x10] sm:$0xff]
        %v686 = vld [vmem:[%s682 + $0x18] sm:$0xff]
        %v687 = vpack.c.bf16 %v678, %v678
        %v720 = vunpack.c.l.b16 %v644
        %v721 = vunpack.c.h.b16 %v644
        %v722 = vunpack.c.l.b16 %v645
        %v723 = vunpack.c.h.b16 %v645
        %v724 = vunpack.c.l.b16 %v646
        %v725 = vunpack.c.h.b16 %v646
        %v726 = vunpack.c.l.b16 %v647
        %v727 = vunpack.c.h.b16 %v647
        %v728 = vunpack.c.l.b16 %v648
        %v729 = vunpack.c.h.b16 %v648
        %v730 = vunpack.c.l.b16 %v649
        %v731 = vunpack.c.h.b16 %v649
        %v732 = vunpack.c.l.b16 %v650
        %v733 = vunpack.c.h.b16 %v650
        %v734 = vunpack.c.l.b16 %v651
        %v735 = vunpack.c.h.b16 %v651
        %v736 = vunpack.c.l.b16 %v652
        %v737 = vunpack.c.h.b16 %v652
        %v738 = vunpack.c.l.b16 %v653
        %v739 = vunpack.c.h.b16 %v653
        %v740 = vunpack.c.l.b16 %v654
        %v741 = vunpack.c.h.b16 %v654
        %v742 = vunpack.c.l.b16 %v655
        %v743 = vunpack.c.h.b16 %v655
        %v744 = vunpack.c.l.b16 %v656
        %v745 = vunpack.c.h.b16 %v656
        %v746 = vunpack.c.l.b16 %v657
        %v747 = vunpack.c.h.b16 %v657
        %v748 = vunpack.c.l.b16 %v658
        %v749 = vunpack.c.h.b16 %v658
        %v750 = vunpack.c.l.b16 %v659
        %v751 = vunpack.c.h.b16 %v659
        %v752 = vunpack.c.l.b16 %v660
        %v753 = vunpack.c.h.b16 %v660
        %v754 = vunpack.c.l.b16 %v661
        %v755 = vunpack.c.h.b16 %v661
        %v756 = vunpack.c.l.b16 %v662
        %v757 = vunpack.c.h.b16 %v662
        %v758 = vunpack.c.l.b16 %v663
        %v759 = vunpack.c.h.b16 %v663
        %v760 = vunpack.c.l.b16 %v664
        %v761 = vunpack.c.h.b16 %v664
        %v762 = vunpack.c.l.b16 %v665
        %v763 = vunpack.c.h.b16 %v665
        %v764 = vunpack.c.l.b16 %v666
        %v765 = vunpack.c.h.b16 %v666
        %v766 = vunpack.c.l.b16 %v667
        %v767 = vunpack.c.h.b16 %v667
        %v768 = vunpack.c.l.b16 %v668
        %v769 = vunpack.c.h.b16 %v668
        %v770 = vunpack.c.l.b16 %v669
        %v771 = vunpack.c.h.b16 %v669
        %v772 = vunpack.c.l.b16 %v670
        %v773 = vunpack.c.h.b16 %v670
        %v774 = vunpack.c.l.b16 %v671
        %v775 = vunpack.c.h.b16 %v671
        %v776 = vunpack.c.l.b16 %v672
        %v777 = vunpack.c.h.b16 %v672
        %v778 = vunpack.c.l.b16 %v673
        %v779 = vunpack.c.h.b16 %v673
        %v780 = vunpack.c.l.b16 %v674
        %v781 = vunpack.c.h.b16 %v674
        %v782 = vunpack.c.l.b16 %v675
        %v783 = vunpack.c.h.b16 %v675
        %v784 = vpack.c.b16 %v724, %v720
        %v785 = vpack.c.b16 %v725, %v721
        %v786 = vpack.c.b16 %v726, %v722
        %v787 = vpack.c.b16 %v727, %v723
        %v788 = vpack.c.b16 %v732, %v728
        %v789 = vpack.c.b16 %v733, %v729
        %v790 = vpack.c.b16 %v734, %v730
        %v791 = vpack.c.b16 %v735, %v731
        %v792 = vpack.c.b16 %v740, %v736
        %v793 = vpack.c.b16 %v741, %v737
        %v794 = vpack.c.b16 %v742, %v738
        %v795 = vpack.c.b16 %v743, %v739
        %v796 = vpack.c.b16 %v748, %v744
        %v797 = vpack.c.b16 %v749, %v745
        %v798 = vpack.c.b16 %v750, %v746
        %v799 = vpack.c.b16 %v751, %v747
        %v800 = vpack.c.b16 %v756, %v752
        %v801 = vpack.c.b16 %v757, %v753
        %v802 = vpack.c.b16 %v758, %v754
        %v803 = vpack.c.b16 %v759, %v755
        %v804 = vpack.c.b16 %v764, %v760
        %v805 = vpack.c.b16 %v765, %v761
        %v806 = vpack.c.b16 %v766, %v762
        %v807 = vpack.c.b16 %v767, %v763
        %v808 = vpack.c.b16 %v772, %v768
        %v809 = vpack.c.b16 %v773, %v769
        %v810 = vpack.c.b16 %v774, %v770
        %v811 = vpack.c.b16 %v775, %v771
        %v812 = vpack.c.b16 %v780, %v776
        %v813 = vpack.c.b16 %v781, %v777
        %v814 = vpack.c.b16 %v782, %v778
        %v815 = vpack.c.b16 %v783, %v779
        %848 = vmatpush.bf16.msra.mxu0 %v812
        %849 = vmatpush.bf16.msra.mxu0 %v808
        %850 = vmatpush.bf16.msra.mxu0 %v804
        %851 = vmatpush.bf16.msra.mxu0 %v800
        %852 = vmatpush.bf16.msra.mxu0 %v796
        %853 = vmatpush.bf16.msra.mxu0 %v792
        %854 = vmatpush.bf16.msra.mxu0 %v788
        %855 = vmatpush.bf16.msra.mxu0 %v784
        %856 = vmatmul.bf16.gmra.mxu0 %v687
        %v857 = vpop.f32.mrf.mxu0
        %v858 = vadd.f32 0.0, %v857
        %v859 = vpop.f32.mrf.mxu0
        %860 = vdwg.mxu0
        %861 = vmatpush.bf16.msra.mxu0 %v813
        %862 = vmatpush.bf16.msra.mxu0 %v809
        %863 = vmatpush.bf16.msra.mxu0 %v805
        %864 = vmatpush.bf16.msra.mxu0 %v801
        %865 = vmatpush.bf16.msra.mxu0 %v797
        %866 = vmatpush.bf16.msra.mxu0 %v793
        %867 = vmatpush.bf16.msra.mxu0 %v789
        %868 = vmatpush.bf16.msra.mxu0 %v785
        %869 = vmatmul.bf16.gmra.mxu0 %v687
        %v870 = vpop.f32.mrf.mxu0
        %v871 = vadd.f32 0.0, %v870
        %v872 = vpop.f32.mrf.mxu0
        %873 = vdwg.mxu0
        %874 = vmatpush.bf16.msra.mxu0 %v814
        %875 = vmatpush.bf16.msra.mxu0 %v810
        %876 = vmatpush.bf16.msra.mxu0 %v806
        %877 = vmatpush.bf16.msra.mxu0 %v802
        %878 = vmatpush.bf16.msra.mxu0 %v798
        %879 = vmatpush.bf16.msra.mxu0 %v794
        %880 = vmatpush.bf16.msra.mxu0 %v790
        %881 = vmatpush.bf16.msra.mxu0 %v786
        %882 = vmatmul.bf16.gmra.mxu0 %v687
        %v883 = vpop.f32.mrf.mxu0
        %v884 = vadd.f32 0.0, %v883
        %v885 = vpop.f32.mrf.mxu0
        %886 = vdwg.mxu0
        %887 = vmatpush.bf16.msra.mxu0 %v815
        %888 = vmatpush.bf16.msra.mxu0 %v811
        %889 = vmatpush.bf16.msra.mxu0 %v807
        %890 = vmatpush.bf16.msra.mxu0 %v803
        %891 = vmatpush.bf16.msra.mxu0 %v799
        %892 = vmatpush.bf16.msra.mxu0 %v795
        %893 = vmatpush.bf16.msra.mxu0 %v791
        %894 = vmatpush.bf16.msra.mxu0 %v787
        %895 = vmatmul.bf16.gmra.mxu0 %v687
        %v896 = vpop.f32.mrf.mxu0
        %v897 = vadd.f32 0.0, %v896
        %v898 = vpop.f32.mrf.mxu0
        %899 = vdwg.mxu0
        %v900 = vadd.f32 %v683, %v858
        %v901 = vadd.f32 %v684, %v871
        %v902 = vadd.f32 %v685, %v884
        %v903 = vadd.f32 %v686, %v897
        %v904 = vxor.u32 %v900, 2147483648
        %v905 = vmul.f32 %v904, 1.442695
        %v906 = vpow.pop %v905
        %v907 = vadd.f32 %v906, 1.0
        %v908 = vrcp.pop %v907
        %v909 = vmul.f32 %v907, %v908
        %v910 = vsub.f32 1.0, %v909
        %v911 = vmul.f32 %v908, %v910
        %v912 = vadd.f32 %v908, %v911
        %vm913 = vweird.f32 %v907
        %vm914 = vweird.f32 %v908
        %vm915 = vmor %vm913, %vm914
        %v916 = vsel %vm915, %v908, %v912
        %v917 = vand.u32 2147483647, %v907
        %vm918 = vcmp.eq.f32.partialorder %v917, 8.507059e+37
        %v919 = vand.u32 %v907, 2147483648
        %v920 = vor.u32 1.1754944e-38, %v919
        %v921 = vsel %vm918, %v920, %v916
        %v922 = vmul.f32 1.0, %v921
        %v923 = vxor.u32 %v901, 2147483648
        %v924 = vmul.f32 %v923, 1.442695
        %v925 = vpow.pop %v924
        %v926 = vadd.f32 %v925, 1.0
        %v927 = vrcp.pop %v926
        %v928 = vmul.f32 %v926, %v927
        %v929 = vsub.f32 1.0, %v928
        %v930 = vmul.f32 %v927, %v929
        %v931 = vadd.f32 %v927, %v930
        %vm932 = vweird.f32 %v926
        %vm933 = vweird.f32 %v927
        %vm934 = vmor %vm932, %vm933
        %v935 = vsel %vm934, %v927, %v931
        %v936 = vand.u32 2147483647, %v926
        %vm937 = vcmp.eq.f32.partialorder %v936, 8.507059e+37
        %v938 = vand.u32 %v926, 2147483648
        %v939 = vor.u32 1.1754944e-38, %v938
        %v940 = vsel %vm937, %v939, %v935
        %v941 = vmul.f32 1.0, %v940
        %v942 = vtanh.pop %v902
        %v943 = vxor.u32 %v903, 2147483648
        %v944 = vmul.f32 %v943, 1.442695
        %v945 = vpow.pop %v944
        %v946 = vadd.f32 %v945, 1.0
        %v947 = vrcp.pop %v946
        %v948 = vmul.f32 %v946, %v947
        %v949 = vsub.f32 1.0, %v948
        %v950 = vmul.f32 %v947, %v949
        %v951 = vadd.f32 %v947, %v950
        %vm952 = vweird.f32 %v946
        %vm953 = vweird.f32 %v947
        %vm954 = vmor %vm952, %vm953
        %v955 = vsel %vm954, %v947, %v951
        %v956 = vand.u32 2147483647, %v946
        %vm957 = vcmp.eq.f32.partialorder %v956, 8.507059e+37
        %v958 = vand.u32 %v946, 2147483648
        %v959 = vor.u32 1.1754944e-38, %v958
        %v960 = vsel %vm957, %v959, %v955
        %v961 = vmul.f32 1.0, %v960
        %v962 = vmul.f32 %v941, %v679
        %v963 = vmul.f32 %v922, %v942
        %v964 = vadd.f32 %v962, %v963
        %v965 = vtanh.pop %v964
        %v966 = vmul.f32 %v961, %v965
        %v967 = vstv %s677
        %vm968 = vcmp.gt.s32.totalorder %v676, %v967
        %v969 = vsel %vm968, 1, 0
        %970 = vset.pattern.permute.xlu0 0
        %971 = vperm.xlu0 %970, %v969
        %v972 = vpop.permute.xlu0 %971
        %vm973 = vcmp.eq.s32.totalorder %v972, 1
        %v974 = vsel %vm973, %v964, %v679
        %v975 = vsel %vm973, %v966, %v678
        %v976 = vsel %vm973, 1, 0
        %v977 = vcvt.s32.f32 %v976
        %v978 = vmul.f32 %v966, %v977
        %979 = vst [vmem:[%s385] sm:$0xff] %v978
        %s980 = smul.u32 1, 4
        %s981 = smul.addr %s980, 8
        %s982 = scalar_lea.vmem [#allocation2], %s981
        %v983 = vld [vmem:[%s982] sm:$0xff]
        %v984 = vld [vmem:[%s982 + $0x8] sm:$0xff]
        %v985 = vld [vmem:[%s982 + $0x10] sm:$0xff]
        %v986 = vld [vmem:[%s982 + $0x18] sm:$0xff]
        %v987 = vpack.c.bf16 %v975, %v975
        %988 = vmatpush.bf16.msra.mxu0 %v812
        %989 = vmatpush.bf16.msra.mxu0 %v808
        %990 = vmatpush.bf16.msra.mxu0 %v804
        %991 = vmatpush.bf16.msra.mxu0 %v800
        %992 = vmatpush.bf16.msra.mxu0 %v796
        %993 = vmatpush.bf16.msra.mxu0 %v792
        %994 = vmatpush.bf16.msra.mxu0 %v788
        %995 = vmatpush.bf16.msra.mxu0 %v784
        %996 = vmatmul.bf16.gmra.mxu0 %v987
        %v997 = vpop.f32.mrf.mxu0
        %v998 = vadd.f32 0.0, %v997
        %v999 = vpop.f32.mrf.mxu0
        %1000 = vdwg.mxu0
        %1001 = vmatpush.bf16.msra.mxu0 %v813
        %1002 = vmatpush.bf16.msra.mxu0 %v809
        %1003 = vmatpush.bf16.msra.mxu0 %v805
        %1004 = vmatpush.bf16.msra.mxu0 %v801
        %1005 = vmatpush.bf16.msra.mxu0 %v797
        %1006 = vmatpush.bf16.msra.mxu0 %v793
        %1007 = vmatpush.bf16.msra.mxu0 %v789
        %1008 = vmatpush.bf16.msra.mxu0 %v785
        %1009 = vmatmul.bf16.gmra.mxu0 %v987
        %v1010 = vpop.f32.mrf.mxu0
        %v1011 = vadd.f32 0.0, %v1010
        %v1012 = vpop.f32.mrf.mxu0
        %1013 = vdwg.mxu0
        %1014 = vmatpush.bf16.msra.mxu0 %v814
        %1015 = vmatpush.bf16.msra.mxu0 %v810
        %1016 = vmatpush.bf16.msra.mxu0 %v806
        %1017 = vmatpush.bf16.msra.mxu0 %v802
        %1018 = vmatpush.bf16.msra.mxu0 %v798
        %1019 = vmatpush.bf16.msra.mxu0 %v794
        %1020 = vmatpush.bf16.msra.mxu0 %v790
        %1021 = vmatpush.bf16.msra.mxu0 %v786
        %1022 = vmatmul.bf16.gmra.mxu0 %v987
        %v1023 = vpop.f32.mrf.mxu0
        %v1024 = vadd.f32 0.0, %v1023
        %v1025 = vpop.f32.mrf.mxu0
        %1026 = vdwg.mxu0
        %1027 = vmatpush.bf16.msra.mxu0 %v815
        %1028 = vmatpush.bf16.msra.mxu0 %v811
        %1029 = vmatpush.bf16.msra.mxu0 %v807
        %1030 = vmatpush.bf16.msra.mxu0 %v803
        %1031 = vmatpush.bf16.msra.mxu0 %v799
        %1032 = vmatpush.bf16.msra.mxu0 %v795
        %1033 = vmatpush.bf16.msra.mxu0 %v791
        %1034 = vmatpush.bf16.msra.mxu0 %v787
        %1035 = vmatmul.bf16.gmra.mxu0 %v987
        %v1036 = vpop.f32.mrf.mxu0
        %v1037 = vadd.f32 0.0, %v1036
        %v1038 = vpop.f32.mrf.mxu0
        %1039 = vdwg.mxu0
        %v1040 = vadd.f32 %v983, %v998
        %v1041 = vadd.f32 %v984, %v1011
        %v1042 = vadd.f32 %v985, %v1024
        %v1043 = vadd.f32 %v986, %v1037
        %v1044 = vxor.u32 %v1040, 2147483648
        %v1045 = vmul.f32 %v1044, 1.442695
        %v1046 = vpow.pop %v1045
        %v1047 = vadd.f32 %v1046, 1.0
        %v1048 = vrcp.pop %v1047
        %v1049 = vmul.f32 %v1047, %v1048
        %v1050 = vsub.f32 1.0, %v1049
        %v1051 = vmul.f32 %v1048, %v1050
        %v1052 = vadd.f32 %v1048, %v1051
        %vm1053 = vweird.f32 %v1047
        %vm1054 = vweird.f32 %v1048
        %vm1055 = vmor %vm1053, %vm1054
        %v1056 = vsel %vm1055, %v1048, %v1052
        %v1057 = vand.u32 2147483647, %v1047
        %vm1058 = vcmp.eq.f32.partialorder %v1057, 8.507059e+37
        %v1059 = vand.u32 %v1047, 2147483648
        %v1060 = vor.u32 1.1754944e-38, %v1059
        %v1061 = vsel %vm1058, %v1060, %v1056
        %v1062 = vmul.f32 1.0, %v1061
        %v1063 = vxor.u32 %v1041, 2147483648
        %v1064 = vmul.f32 %v1063, 1.442695
        %v1065 = vpow.pop %v1064
        %v1066 = vadd.f32 %v1065, 1.0
        %v1067 = vrcp.pop %v1066
        %v1068 = vmul.f32 %v1066, %v1067
        %v1069 = vsub.f32 1.0, %v1068
        %v1070 = vmul.f32 %v1067, %v1069
        %v1071 = vadd.f32 %v1067, %v1070
        %vm1072 = vweird.f32 %v1066
        %vm1073 = vweird.f32 %v1067
        %vm1074 = vmor %vm1072, %vm1073
        %v1075 = vsel %vm1074, %v1067, %v1071
        %v1076 = vand.u32 2147483647, %v1066
        %vm1077 = vcmp.eq.f32.partialorder %v1076, 8.507059e+37
        %v1078 = vand.u32 %v1066, 2147483648
        %v1079 = vor.u32 1.1754944e-38, %v1078
        %v1080 = vsel %vm1077, %v1079, %v1075
        %v1081 = vmul.f32 1.0, %v1080
        %v1082 = vtanh.pop %v1042
        %v1083 = vxor.u32 %v1043, 2147483648
        %v1084 = vmul.f32 %v1083, 1.442695
        %v1085 = vpow.pop %v1084
        %v1086 = vadd.f32 %v1085, 1.0
        %v1087 = vrcp.pop %v1086
        %v1088 = vmul.f32 %v1086, %v1087
        %v1089 = vsub.f32 1.0, %v1088
        %v1090 = vmul.f32 %v1087, %v1089
        %v1091 = vadd.f32 %v1087, %v1090
        %vm1092 = vweird.f32 %v1086
        %vm1093 = vweird.f32 %v1087
        %vm1094 = vmor %vm1092, %vm1093
        %v1095 = vsel %vm1094, %v1087, %v1091
        %v1096 = vand.u32 2147483647, %v1086
        %vm1097 = vcmp.eq.f32.partialorder %v1096, 8.507059e+37
        %v1098 = vand.u32 %v1086, 2147483648
        %v1099 = vor.u32 1.1754944e-38, %v1098
        %v1100 = vsel %vm1097, %v1099, %v1095
        %v1101 = vmul.f32 1.0, %v1100
        %v1102 = vmul.f32 %v1081, %v974
        %v1103 = vmul.f32 %v1062, %v1082
        %v1104 = vadd.f32 %v1102, %v1103
        %v1105 = vtanh.pop %v1104
        %v1106 = vmul.f32 %v1101, %v1105
        %s1107 = sadd.s32 %s677, 1
        %v1108 = vstv %s1107
        %vm1109 = vcmp.gt.s32.totalorder %v676, %v1108
        %v1110 = vsel %vm1109, 1, 0
        %1111 = vset.pattern.permute.xlu0 0
        %1112 = vperm.xlu0 %1111, %v1110
        %v1113 = vpop.permute.xlu0 %1112
        %vm1114 = vcmp.eq.s32.totalorder %v1113, 1
        %v1115 = vsel %vm1114, %v1104, %v974
        %v1116 = vsel %vm1114, %v1106, %v975
        %v1117 = vsel %vm1114, 1, 0
        %v1118 = vcvt.s32.f32 %v1117
        %v1119 = vmul.f32 %v1106, %v1118
        %s1120 = scalar_lea.vmem %s385, 8 [#allocation5]
        %1121 = vst [vmem:[%s1120] sm:$0xff] %v1119
        %s1122 = smul.u32 2, 4
        %s1123 = smul.addr %s1122, 8
        %s1124 = scalar_lea.vmem [#allocation2], %s1123
        %v1125 = vld [vmem:[%s1124] sm:$0xff]
        %v1126 = vld [vmem:[%s1124 + $0x8] sm:$0xff]
        %v1127 = vld [vmem:[%s1124 + $0x10] sm:$0xff]
        %v1128 = vld [vmem:[%s1124 + $0x18] sm:$0xff]
        %v1129 = vpack.c.bf16 %v1116, %v1116
        %1130 = vmatpush.bf16.msra.mxu0 %v812
        %1131 = vmatpush.bf16.msra.mxu0 %v808
        %1132 = vmatpush.bf16.msra.mxu0 %v804
        %1133 = vmatpush.bf16.msra.mxu0 %v800
        %1134 = vmatpush.bf16.msra.mxu0 %v796
        %1135 = vmatpush.bf16.msra.mxu0 %v792
        %1136 = vmatpush.bf16.msra.mxu0 %v788
        %1137 = vmatpush.bf16.msra.mxu0 %v784
        %1138 = vmatmul.bf16.gmra.mxu0 %v1129
        %v1139 = vpop.f32.mrf.mxu0
        %v1140 = vadd.f32 0.0, %v1139
        %v1141 = vpop.f32.mrf.mxu0
        %1142 = vdwg.mxu0
        %1143 = vmatpush.bf16.msra.mxu0 %v813
        %1144 = vmatpush.bf16.msra.mxu0 %v809
        %1145 = vmatpush.bf16.msra.mxu0 %v805
        %1146 = vmatpush.bf16.msra.mxu0 %v801
        %1147 = vmatpush.bf16.msra.mxu0 %v797
        %1148 = vmatpush.bf16.msra.mxu0 %v793
        %1149 = vmatpush.bf16.msra.mxu0 %v789
        %1150 = vmatpush.bf16.msra.mxu0 %v785
        %1151 = vmatmul.bf16.gmra.mxu0 %v1129
        %v1152 = vpop.f32.mrf.mxu0
        %v1153 = vadd.f32 0.0, %v1152
        %v1154 = vpop.f32.mrf.mxu0
        %1155 = vdwg.mxu0
        %1156 = vmatpush.bf16.msra.mxu0 %v814
        %1157 = vmatpush.bf16.msra.mxu0 %v810
        %1158 = vmatpush.bf16.msra.mxu0 %v806
        %1159 = vmatpush.bf16.msra.mxu0 %v802
        %1160 = vmatpush.bf16.msra.mxu0 %v798
        %1161 = vmatpush.bf16.msra.mxu0 %v794
        %1162 = vmatpush.bf16.msra.mxu0 %v790
        %1163 = vmatpush.bf16.msra.mxu0 %v786
        %1164 = vmatmul.bf16.gmra.mxu0 %v1129
        %v1165 = vpop.f32.mrf.mxu0
        %v1166 = vadd.f32 0.0, %v1165
        %v1167 = vpop.f32.mrf.mxu0
        %1168 = vdwg.mxu0
        %1169 = vmatpush.bf16.msra.mxu0 %v815
        %1170 = vmatpush.bf16.msra.mxu0 %v811
        %1171 = vmatpush.bf16.msra.mxu0 %v807
        %1172 = vmatpush.bf16.msra.mxu0 %v803
        %1173 = vmatpush.bf16.msra.mxu0 %v799
        %1174 = vmatpush.bf16.msra.mxu0 %v795
        %1175 = vmatpush.bf16.msra.mxu0 %v791
        %1176 = vmatpush.bf16.msra.mxu0 %v787
        %1177 = vmatmul.bf16.gmra.mxu0 %v1129
        %v1178 = vpop.f32.mrf.mxu0
        %v1179 = vadd.f32 0.0, %v1178
        %v1180 = vpop.f32.mrf.mxu0
        %1181 = vdwg.mxu0
        %v1182 = vadd.f32 %v1125, %v1140
        %v1183 = vadd.f32 %v1126, %v1153
        %v1184 = vadd.f32 %v1127, %v1166
        %v1185 = vadd.f32 %v1128, %v1179
        %v1186 = vxor.u32 %v1182, 2147483648
        %v1187 = vmul.f32 %v1186, 1.442695
        %v1188 = vpow.pop %v1187
        %v1189 = vadd.f32 %v1188, 1.0
        %v1190 = vrcp.pop %v1189
        %v1191 = vmul.f32 %v1189, %v1190
        %v1192 = vsub.f32 1.0, %v1191
        %v1193 = vmul.f32 %v1190, %v1192
        %v1194 = vadd.f32 %v1190, %v1193
        %vm1195 = vweird.f32 %v1189
        %vm1196 = vweird.f32 %v1190
        %vm1197 = vmor %vm1195, %vm1196
        %v1198 = vsel %vm1197, %v1190, %v1194
        %v1199 = vand.u32 2147483647, %v1189
        %vm1200 = vcmp.eq.f32.partialorder %v1199, 8.507059e+37
        %v1201 = vand.u32 %v1189, 2147483648
        %v1202 = vor.u32 1.1754944e-38, %v1201
        %v1203 = vsel %vm1200, %v1202, %v1198
        %v1204 = vmul.f32 1.0, %v1203
        %v1205 = vxor.u32 %v1183, 2147483648
        %v1206 = vmul.f32 %v1205, 1.442695
        %v1207 = vpow.pop %v1206
        %v1208 = vadd.f32 %v1207, 1.0
        %v1209 = vrcp.pop %v1208
        %v1210 = vmul.f32 %v1208, %v1209
        %v1211 = vsub.f32 1.0, %v1210
        %v1212 = vmul.f32 %v1209, %v1211
        %v1213 = vadd.f32 %v1209, %v1212
        %vm1214 = vweird.f32 %v1208
        %vm1215 = vweird.f32 %v1209
        %vm1216 = vmor %vm1214, %vm1215
        %v1217 = vsel %vm1216, %v1209, %v1213
        %v1218 = vand.u32 2147483647, %v1208
        %vm1219 = vcmp.eq.f32.partialorder %v1218, 8.507059e+37
        %v1220 = vand.u32 %v1208, 2147483648
        %v1221 = vor.u32 1.1754944e-38, %v1220
        %v1222 = vsel %vm1219, %v1221, %v1217
        %v1223 = vmul.f32 1.0, %v1222
        %v1224 = vtanh.pop %v1184
        %v1225 = vxor.u32 %v1185, 2147483648
        %v1226 = vmul.f32 %v1225, 1.442695
        %v1227 = vpow.pop %v1226
        %v1228 = vadd.f32 %v1227, 1.0
        %v1229 = vrcp.pop %v1228
        %v1230 = vmul.f32 %v1228, %v1229
        %v1231 = vsub.f32 1.0, %v1230
        %v1232 = vmul.f32 %v1229, %v1231
        %v1233 = vadd.f32 %v1229, %v1232
        %vm1234 = vweird.f32 %v1228
        %vm1235 = vweird.f32 %v1229
        %vm1236 = vmor %vm1234, %vm1235
        %v1237 = vsel %vm1236, %v1229, %v1233
        %v1238 = vand.u32 2147483647, %v1228
        %vm1239 = vcmp.eq.f32.partialorder %v1238, 8.507059e+37
        %v1240 = vand.u32 %v1228, 2147483648
        %v1241 = vor.u32 1.1754944e-38, %v1240
        %v1242 = vsel %vm1239, %v1241, %v1237
        %v1243 = vmul.f32 1.0, %v1242
        %v1244 = vmul.f32 %v1223, %v1115
        %v1245 = vmul.f32 %v1204, %v1224
        %v1246 = vadd.f32 %v1244, %v1245
        %v1247 = vtanh.pop %v1246
        %v1248 = vmul.f32 %v1243, %v1247
        %s1249 = sadd.s32 %s677, 2
        %v1250 = vstv %s1249
        %vm1251 = vcmp.gt.s32.totalorder %v676, %v1250
        %v1252 = vsel %vm1251, 1, 0
        %1253 = vset.pattern.permute.xlu0 0
        %1254 = vperm.xlu0 %1253, %v1252
        %v1255 = vpop.permute.xlu0 %1254
        %vm1256 = vcmp.eq.s32.totalorder %v1255, 1
        %v1257 = vsel %vm1256, %v1246, %v1115
        %v1258 = vsel %vm1256, %v1248, %v1116
        %v1259 = vsel %vm1256, 1, 0
        %v1260 = vcvt.s32.f32 %v1259
        %v1261 = vmul.f32 %v1248, %v1260
        %s1262 = scalar_lea.vmem %s385, 16 [#allocation5]
        %1263 = vst [vmem:[%s1262] sm:$0xff] %v1261
        %s1264 = smul.u32 3, 4
        %s1265 = smul.addr %s1264, 8
        %s1266 = scalar_lea.vmem [#allocation2], %s1265
        %v1267 = vld [vmem:[%s1266] sm:$0xff]
        %v1268 = vld [vmem:[%s1266 + $0x8] sm:$0xff]
        %v1269 = vld [vmem:[%s1266 + $0x10] sm:$0xff]
        %v1270 = vld [vmem:[%s1266 + $0x18] sm:$0xff]
        %v1271 = vpack.c.bf16 %v1258, %v1258
        %1272 = vmatpush.bf16.msra.mxu0 %v812
        %1273 = vmatpush.bf16.msra.mxu0 %v808
        %1274 = vmatpush.bf16.msra.mxu0 %v804
        %1275 = vmatpush.bf16.msra.mxu0 %v800
        %1276 = vmatpush.bf16.msra.mxu0 %v796
        %1277 = vmatpush.bf16.msra.mxu0 %v792
        %1278 = vmatpush.bf16.msra.mxu0 %v788
        %1279 = vmatpush.bf16.msra.mxu0 %v784
        %1280 = vmatmul.bf16.gmra.mxu0 %v1271
        %v1281 = vpop.f32.mrf.mxu0
        %v1282 = vadd.f32 0.0, %v1281
        %v1283 = vpop.f32.mrf.mxu0
        %1284 = vdwg.mxu0
        %1285 = vmatpush.bf16.msra.mxu0 %v813
        %1286 = vmatpush.bf16.msra.mxu0 %v809
        %1287 = vmatpush.bf16.msra.mxu0 %v805
        %1288 = vmatpush.bf16.msra.mxu0 %v801
        %1289 = vmatpush.bf16.msra.mxu0 %v797
        %1290 = vmatpush.bf16.msra.mxu0 %v793
        %1291 = vmatpush.bf16.msra.mxu0 %v789
        %1292 = vmatpush.bf16.msra.mxu0 %v785
        %1293 = vmatmul.bf16.gmra.mxu0 %v1271
        %v1294 = vpop.f32.mrf.mxu0
        %v1295 = vadd.f32 0.0, %v1294
        %v1296 = vpop.f32.mrf.mxu0
        %1297 = vdwg.mxu0
        %1298 = vmatpush.bf16.msra.mxu0 %v814
        %1299 = vmatpush.bf16.msra.mxu0 %v810
        %1300 = vmatpush.bf16.msra.mxu0 %v806
        %1301 = vmatpush.bf16.msra.mxu0 %v802
        %1302 = vmatpush.bf16.msra.mxu0 %v798
        %1303 = vmatpush.bf16.msra.mxu0 %v794
        %1304 = vmatpush.bf16.msra.mxu0 %v790
        %1305 = vmatpush.bf16.msra.mxu0 %v786
        %1306 = vmatmul.bf16.gmra.mxu0 %v1271
        %v1307 = vpop.f32.mrf.mxu0
        %v1308 = vadd.f32 0.0, %v1307
        %v1309 = vpop.f32.mrf.mxu0
        %1310 = vdwg.mxu0
        %1311 = vmatpush.bf16.msra.mxu0 %v815
        %1312 = vmatpush.bf16.msra.mxu0 %v811
        %1313 = vmatpush.bf16.msra.mxu0 %v807
        %1314 = vmatpush.bf16.msra.mxu0 %v803
        %1315 = vmatpush.bf16.msra.mxu0 %v799
        %1316 = vmatpush.bf16.msra.mxu0 %v795
        %1317 = vmatpush.bf16.msra.mxu0 %v791
        %1318 = vmatpush.bf16.msra.mxu0 %v787
        %1319 = vmatmul.bf16.gmra.mxu0 %v1271
        %v1320 = vpop.f32.mrf.mxu0
        %v1321 = vadd.f32 0.0, %v1320
        %v1322 = vpop.f32.mrf.mxu0
        %1323 = vdwg.mxu0
        %v1324 = vadd.f32 %v1267, %v1282
        %v1325 = vadd.f32 %v1268, %v1295
        %v1326 = vadd.f32 %v1269, %v1308
        %v1327 = vadd.f32 %v1270, %v1321
        %v1328 = vxor.u32 %v1324, 2147483648
        %v1329 = vmul.f32 %v1328, 1.442695
        %v1330 = vpow.pop %v1329
        %v1331 = vadd.f32 %v1330, 1.0
        %v1332 = vrcp.pop %v1331
        %v1333 = vmul.f32 %v1331, %v1332
        %v1334 = vsub.f32 1.0, %v1333
        %v1335 = vmul.f32 %v1332, %v1334
        %v1336 = vadd.f32 %v1332, %v1335
        %vm1337 = vweird.f32 %v1331
        %vm1338 = vweird.f32 %v1332
        %vm1339 = vmor %vm1337, %vm1338
        %v1340 = vsel %vm1339, %v1332, %v1336
        %v1341 = vand.u32 2147483647, %v1331
        %vm1342 = vcmp.eq.f32.partialorder %v1341, 8.507059e+37
        %v1343 = vand.u32 %v1331, 2147483648
        %v1344 = vor.u32 1.1754944e-38, %v1343
        %v1345 = vsel %vm1342, %v1344, %v1340
        %v1346 = vmul.f32 1.0, %v1345
        %v1347 = vxor.u32 %v1325, 2147483648
        %v1348 = vmul.f32 %v1347, 1.442695
        %v1349 = vpow.pop %v1348
        %v1350 = vadd.f32 %v1349, 1.0
        %v1351 = vrcp.pop %v1350
        %v1352 = vmul.f32 %v1350, %v1351
        %v1353 = vsub.f32 1.0, %v1352
        %v1354 = vmul.f32 %v1351, %v1353
        %v1355 = vadd.f32 %v1351, %v1354
        %vm1356 = vweird.f32 %v1350
        %vm1357 = vweird.f32 %v1351
        %vm1358 = vmor %vm1356, %vm1357
        %v1359 = vsel %vm1358, %v1351, %v1355
        %v1360 = vand.u32 2147483647, %v1350
        %vm1361 = vcmp.eq.f32.partialorder %v1360, 8.507059e+37
        %v1362 = vand.u32 %v1350, 2147483648
        %v1363 = vor.u32 1.1754944e-38, %v1362
        %v1364 = vsel %vm1361, %v1363, %v1359
        %v1365 = vmul.f32 1.0, %v1364
        %v1366 = vtanh.pop %v1326
        %v1367 = vxor.u32 %v1327, 2147483648
        %v1368 = vmul.f32 %v1367, 1.442695
        %v1369 = vpow.pop %v1368
        %v1370 = vadd.f32 %v1369, 1.0
        %v1371 = vrcp.pop %v1370
        %v1372 = vmul.f32 %v1370, %v1371
        %v1373 = vsub.f32 1.0, %v1372
        %v1374 = vmul.f32 %v1371, %v1373
        %v1375 = vadd.f32 %v1371, %v1374
        %vm1376 = vweird.f32 %v1370
        %vm1377 = vweird.f32 %v1371
        %vm1378 = vmor %vm1376, %vm1377
        %v1379 = vsel %vm1378, %v1371, %v1375
        %v1380 = vand.u32 2147483647, %v1370
        %vm1381 = vcmp.eq.f32.partialorder %v1380, 8.507059e+37
        %v1382 = vand.u32 %v1370, 2147483648
        %v1383 = vor.u32 1.1754944e-38, %v1382
        %v1384 = vsel %vm1381, %v1383, %v1379
        %v1385 = vmul.f32 1.0, %v1384
        %v1386 = vmul.f32 %v1365, %v1257
        %v1387 = vmul.f32 %v1346, %v1366
        %v1388 = vadd.f32 %v1386, %v1387
        %v1389 = vtanh.pop %v1388
        %v1390 = vmul.f32 %v1385, %v1389
        %s1391 = sadd.s32 %s677, 3
        %v1392 = vstv %s1391
        %vm1393 = vcmp.gt.s32.totalorder %v676, %v1392
        %v1394 = vsel %vm1393, 1, 0
        %1395 = vset.pattern.permute.xlu0 0
        %1396 = vperm.xlu0 %1395, %v1394
        %v1397 = vpop.permute.xlu0 %1396
        %vm1398 = vcmp.eq.s32.totalorder %v1397, 1
        %v1399 = vsel %vm1398, %v1388, %v1257
        %v1400 = vsel %vm1398, %v1390, %v1258
        %v1401 = vsel %vm1398, 1, 0
        %v1402 = vcvt.s32.f32 %v1401
        %v1403 = vmul.f32 %v1390, %v1402
        %s1404 = scalar_lea.vmem %s385, 24 [#allocation5]
        %1405 = vst [vmem:[%s1404] sm:$0xff] %v1403
        %s1406 = smul.u32 4, 4
        %s1407 = smul.addr %s1406, 8
        %s1408 = scalar_lea.vmem [#allocation2], %s1407
        %v1409 = vld [vmem:[%s1408] sm:$0xff]
        %v1410 = vld [vmem:[%s1408 + $0x8] sm:$0xff]
        %v1411 = vld [vmem:[%s1408 + $0x10] sm:$0xff]
        %v1412 = vld [vmem:[%s1408 + $0x18] sm:$0xff]
        %v1413 = vpack.c.bf16 %v1400, %v1400
        %1414 = vmatpush.bf16.msra.mxu0 %v812
        %1415 = vmatpush.bf16.msra.mxu0 %v808
        %1416 = vmatpush.bf16.msra.mxu0 %v804
        %1417 = vmatpush.bf16.msra.mxu0 %v800
        %1418 = vmatpush.bf16.msra.mxu0 %v796
        %1419 = vmatpush.bf16.msra.mxu0 %v792
        %1420 = vmatpush.bf16.msra.mxu0 %v788
        %1421 = vmatpush.bf16.msra.mxu0 %v784
        %1422 = vmatmul.bf16.gmra.mxu0 %v1413
        %v1423 = vpop.f32.mrf.mxu0
        %v1424 = vadd.f32 0.0, %v1423
        %v1425 = vpop.f32.mrf.mxu0
        %1426 = vdwg.mxu0
        %1427 = vmatpush.bf16.msra.mxu0 %v813
        %1428 = vmatpush.bf16.msra.mxu0 %v809
        %1429 = vmatpush.bf16.msra.mxu0 %v805
        %1430 = vmatpush.bf16.msra.mxu0 %v801
        %1431 = vmatpush.bf16.msra.mxu0 %v797
        %1432 = vmatpush.bf16.msra.mxu0 %v793
        %1433 = vmatpush.bf16.msra.mxu0 %v789
        %1434 = vmatpush.bf16.msra.mxu0 %v785
        %1435 = vmatmul.bf16.gmra.mxu0 %v1413
        %v1436 = vpop.f32.mrf.mxu0
        %v1437 = vadd.f32 0.0, %v1436
        %v1438 = vpop.f32.mrf.mxu0
        %1439 = vdwg.mxu0
        %1440 = vmatpush.bf16.msra.mxu0 %v814
        %1441 = vmatpush.bf16.msra.mxu0 %v810
        %1442 = vmatpush.bf16.msra.mxu0 %v806
        %1443 = vmatpush.bf16.msra.mxu0 %v802
        %1444 = vmatpush.bf16.msra.mxu0 %v798
        %1445 = vmatpush.bf16.msra.mxu0 %v794
        %1446 = vmatpush.bf16.msra.mxu0 %v790
        %1447 = vmatpush.bf16.msra.mxu0 %v786
        %1448 = vmatmul.bf16.gmra.mxu0 %v1413
        %v1449 = vpop.f32.mrf.mxu0
        %v1450 = vadd.f32 0.0, %v1449
        %v1451 = vpop.f32.mrf.mxu0
        %1452 = vdwg.mxu0
        %1453 = vmatpush.bf16.msra.mxu0 %v815
        %1454 = vmatpush.bf16.msra.mxu0 %v811
        %1455 = vmatpush.bf16.msra.mxu0 %v807
        %1456 = vmatpush.bf16.msra.mxu0 %v803
        %1457 = vmatpush.bf16.msra.mxu0 %v799
        %1458 = vmatpush.bf16.msra.mxu0 %v795
        %1459 = vmatpush.bf16.msra.mxu0 %v791
        %1460 = vmatpush.bf16.msra.mxu0 %v787
        %1461 = vmatmul.bf16.gmra.mxu0 %v1413
        %v1462 = vpop.f32.mrf.mxu0
        %v1463 = vadd.f32 0.0, %v1462
        %v1464 = vpop.f32.mrf.mxu0
        %1465 = vdwg.mxu0
        %v1466 = vadd.f32 %v1409, %v1424
        %v1467 = vadd.f32 %v1410, %v1437
        %v1468 = vadd.f32 %v1411, %v1450
        %v1469 = vadd.f32 %v1412, %v1463
        %v1470 = vxor.u32 %v1466, 2147483648
        %v1471 = vmul.f32 %v1470, 1.442695
        %v1472 = vpow.pop %v1471
        %v1473 = vadd.f32 %v1472, 1.0
        %v1474 = vrcp.pop %v1473
        %v1475 = vmul.f32 %v1473, %v1474
        %v1476 = vsub.f32 1.0, %v1475
        %v1477 = vmul.f32 %v1474, %v1476
        %v1478 = vadd.f32 %v1474, %v1477
        %vm1479 = vweird.f32 %v1473
        %vm1480 = vweird.f32 %v1474
        %vm1481 = vmor %vm1479, %vm1480
        %v1482 = vsel %vm1481, %v1474, %v1478
        %v1483 = vand.u32 2147483647, %v1473
        %vm1484 = vcmp.eq.f32.partialorder %v1483, 8.507059e+37
        %v1485 = vand.u32 %v1473, 2147483648
        %v1486 = vor.u32 1.1754944e-38, %v1485
        %v1487 = vsel %vm1484, %v1486, %v1482
        %v1488 = vmul.f32 1.0, %v1487
        %v1489 = vxor.u32 %v1467, 2147483648
        %v1490 = vmul.f32 %v1489, 1.442695
        %v1491 = vpow.pop %v1490
        %v1492 = vadd.f32 %v1491, 1.0
        %v1493 = vrcp.pop %v1492
        %v1494 = vmul.f32 %v1492, %v1493
        %v1495 = vsub.f32 1.0, %v1494
        %v1496 = vmul.f32 %v1493, %v1495
        %v1497 = vadd.f32 %v1493, %v1496
        %vm1498 = vweird.f32 %v1492
        %vm1499 = vweird.f32 %v1493
        %vm1500 = vmor %vm1498, %vm1499
        %v1501 = vsel %vm1500, %v1493, %v1497
        %v1502 = vand.u32 2147483647, %v1492
        %vm1503 = vcmp.eq.f32.partialorder %v1502, 8.507059e+37
        %v1504 = vand.u32 %v1492, 2147483648
        %v1505 = vor.u32 1.1754944e-38, %v1504
        %v1506 = vsel %vm1503, %v1505, %v1501
        %v1507 = vmul.f32 1.0, %v1506
        %v1508 = vtanh.pop %v1468
        %v1509 = vxor.u32 %v1469, 2147483648
        %v1510 = vmul.f32 %v1509, 1.442695
        %v1511 = vpow.pop %v1510
        %v1512 = vadd.f32 %v1511, 1.0
        %v1513 = vrcp.pop %v1512
        %v1514 = vmul.f32 %v1512, %v1513
        %v1515 = vsub.f32 1.0, %v1514
        %v1516 = vmul.f32 %v1513, %v1515
        %v1517 = vadd.f32 %v1513, %v1516
        %vm1518 = vweird.f32 %v1512
        %vm1519 = vweird.f32 %v1513
        %vm1520 = vmor %vm1518, %vm1519
        %v1521 = vsel %vm1520, %v1513, %v1517
        %v1522 = vand.u32 2147483647, %v1512
        %vm1523 = vcmp.eq.f32.partialorder %v1522, 8.507059e+37
        %v1524 = vand.u32 %v1512, 2147483648
        %v1525 = vor.u32 1.1754944e-38, %v1524
        %v1526 = vsel %vm1523, %v1525, %v1521
        %v1527 = vmul.f32 1.0, %v1526
        %v1528 = vmul.f32 %v1507, %v1399
        %v1529 = vmul.f32 %v1488, %v1508
        %v1530 = vadd.f32 %v1528, %v1529
        %v1531 = vtanh.pop %v1530
        %v1532 = vmul.f32 %v1527, %v1531
        %s1533 = sadd.s32 %s677, 4
        %v1534 = vstv %s1533
        %vm1535 = vcmp.gt.s32.totalorder %v676, %v1534
        %v1536 = vsel %vm1535, 1, 0
        %1537 = vset.pattern.permute.xlu0 0
        %1538 = vperm.xlu0 %1537, %v1536
        %v1539 = vpop.permute.xlu0 %1538
        %vm1540 = vcmp.eq.s32.totalorder %v1539, 1
        %v1541 = vsel %vm1540, %v1530, %v1399
        %v1542 = vsel %vm1540, %v1532, %v1400
        %v1543 = vsel %vm1540, 1, 0
        %v1544 = vcvt.s32.f32 %v1543
        %v1545 = vmul.f32 %v1532, %v1544
        %s1546 = scalar_lea.vmem %s385, 32 [#allocation5]
        %1547 = vst [vmem:[%s1546] sm:$0xff] %v1545
        %s1548 = smul.u32 5, 4
        %s1549 = smul.addr %s1548, 8
        %s1550 = scalar_lea.vmem [#allocation2], %s1549
        %v1551 = vld [vmem:[%s1550] sm:$0xff]
        %v1552 = vld [vmem:[%s1550 + $0x8] sm:$0xff]
        %v1553 = vld [vmem:[%s1550 + $0x10] sm:$0xff]
        %v1554 = vld [vmem:[%s1550 + $0x18] sm:$0xff]
        %v1555 = vpack.c.bf16 %v1542, %v1542
        %1556 = vmatpush.bf16.msra.mxu0 %v812
        %1557 = vmatpush.bf16.msra.mxu0 %v808
        %1558 = vmatpush.bf16.msra.mxu0 %v804
        %1559 = vmatpush.bf16.msra.mxu0 %v800
        %1560 = vmatpush.bf16.msra.mxu0 %v796
        %1561 = vmatpush.bf16.msra.mxu0 %v792
        %1562 = vmatpush.bf16.msra.mxu0 %v788
        %1563 = vmatpush.bf16.msra.mxu0 %v784
        %1564 = vmatmul.bf16.gmra.mxu0 %v1555
        %v1565 = vpop.f32.mrf.mxu0
        %v1566 = vadd.f32 0.0, %v1565
        %v1567 = vpop.f32.mrf.mxu0
        %1568 = vdwg.mxu0
        %1569 = vmatpush.bf16.msra.mxu0 %v813
        %1570 = vmatpush.bf16.msra.mxu0 %v809
        %1571 = vmatpush.bf16.msra.mxu0 %v805
        %1572 = vmatpush.bf16.msra.mxu0 %v801
        %1573 = vmatpush.bf16.msra.mxu0 %v797
        %1574 = vmatpush.bf16.msra.mxu0 %v793
        %1575 = vmatpush.bf16.msra.mxu0 %v789
        %1576 = vmatpush.bf16.msra.mxu0 %v785
        %1577 = vmatmul.bf16.gmra.mxu0 %v1555
        %v1578 = vpop.f32.mrf.mxu0
        %v1579 = vadd.f32 0.0, %v1578
        %v1580 = vpop.f32.mrf.mxu0
        %1581 = vdwg.mxu0
        %1582 = vmatpush.bf16.msra.mxu0 %v814
        %1583 = vmatpush.bf16.msra.mxu0 %v810
        %1584 = vmatpush.bf16.msra.mxu0 %v806
        %1585 = vmatpush.bf16.msra.mxu0 %v802
        %1586 = vmatpush.bf16.msra.mxu0 %v798
        %1587 = vmatpush.bf16.msra.mxu0 %v794
        %1588 = vmatpush.bf16.msra.mxu0 %v790
        %1589 = vmatpush.bf16.msra.mxu0 %v786
        %1590 = vmatmul.bf16.gmra.mxu0 %v1555
        %v1591 = vpop.f32.mrf.mxu0
        %v1592 = vadd.f32 0.0, %v1591
        %v1593 = vpop.f32.mrf.mxu0
        %1594 = vdwg.mxu0
        %1595 = vmatpush.bf16.msra.mxu0 %v815
        %1596 = vmatpush.bf16.msra.mxu0 %v811
        %1597 = vmatpush.bf16.msra.mxu0 %v807
        %1598 = vmatpush.bf16.msra.mxu0 %v803
        %1599 = vmatpush.bf16.msra.mxu0 %v799
        %1600 = vmatpush.bf16.msra.mxu0 %v795
        %1601 = vmatpush.bf16.msra.mxu0 %v791
        %1602 = vmatpush.bf16.msra.mxu0 %v787
        %1603 = vmatmul.bf16.gmra.mxu0 %v1555
        %v1604 = vpop.f32.mrf.mxu0
        %v1605 = vadd.f32 0.0, %v1604
        %v1606 = vpop.f32.mrf.mxu0
        %1607 = vdwg.mxu0
        %v1608 = vadd.f32 %v1551, %v1566
        %v1609 = vadd.f32 %v1552, %v1579
        %v1610 = vadd.f32 %v1553, %v1592
        %v1611 = vadd.f32 %v1554, %v1605
        %v1612 = vxor.u32 %v1608, 2147483648
        %v1613 = vmul.f32 %v1612, 1.442695
        %v1614 = vpow.pop %v1613
        %v1615 = vadd.f32 %v1614, 1.0
        %v1616 = vrcp.pop %v1615
        %v1617 = vmul.f32 %v1615, %v1616
        %v1618 = vsub.f32 1.0, %v1617
        %v1619 = vmul.f32 %v1616, %v1618
        %v1620 = vadd.f32 %v1616, %v1619
        %vm1621 = vweird.f32 %v1615
        %vm1622 = vweird.f32 %v1616
        %vm1623 = vmor %vm1621, %vm1622
        %v1624 = vsel %vm1623, %v1616, %v1620
        %v1625 = vand.u32 2147483647, %v1615
        %vm1626 = vcmp.eq.f32.partialorder %v1625, 8.507059e+37
        %v1627 = vand.u32 %v1615, 2147483648
        %v1628 = vor.u32 1.1754944e-38, %v1627
        %v1629 = vsel %vm1626, %v1628, %v1624
        %v1630 = vmul.f32 1.0, %v1629
        %v1631 = vxor.u32 %v1609, 2147483648
        %v1632 = vmul.f32 %v1631, 1.442695
        %v1633 = vpow.pop %v1632
        %v1634 = vadd.f32 %v1633, 1.0
        %v1635 = vrcp.pop %v1634
        %v1636 = vmul.f32 %v1634, %v1635
        %v1637 = vsub.f32 1.0, %v1636
        %v1638 = vmul.f32 %v1635, %v1637
        %v1639 = vadd.f32 %v1635, %v1638
        %vm1640 = vweird.f32 %v1634
        %vm1641 = vweird.f32 %v1635
        %vm1642 = vmor %vm1640, %vm1641
        %v1643 = vsel %vm1642, %v1635, %v1639
        %v1644 = vand.u32 2147483647, %v1634
        %vm1645 = vcmp.eq.f32.partialorder %v1644, 8.507059e+37
        %v1646 = vand.u32 %v1634, 2147483648
        %v1647 = vor.u32 1.1754944e-38, %v1646
        %v1648 = vsel %vm1645, %v1647, %v1643
        %v1649 = vmul.f32 1.0, %v1648
        %v1650 = vtanh.pop %v1610
        %v1651 = vxor.u32 %v1611, 2147483648
        %v1652 = vmul.f32 %v1651, 1.442695
        %v1653 = vpow.pop %v1652
        %v1654 = vadd.f32 %v1653, 1.0
        %v1655 = vrcp.pop %v1654
        %v1656 = vmul.f32 %v1654, %v1655
        %v1657 = vsub.f32 1.0, %v1656
        %v1658 = vmul.f32 %v1655, %v1657
        %v1659 = vadd.f32 %v1655, %v1658
        %vm1660 = vweird.f32 %v1654
        %vm1661 = vweird.f32 %v1655
        %vm1662 = vmor %vm1660, %vm1661
        %v1663 = vsel %vm1662, %v1655, %v1659
        %v1664 = vand.u32 2147483647, %v1654
        %vm1665 = vcmp.eq.f32.partialorder %v1664, 8.507059e+37
        %v1666 = vand.u32 %v1654, 2147483648
        %v1667 = vor.u32 1.1754944e-38, %v1666
        %v1668 = vsel %vm1665, %v1667, %v1663
        %v1669 = vmul.f32 1.0, %v1668
        %v1670 = vmul.f32 %v1649, %v1541
        %v1671 = vmul.f32 %v1630, %v1650
        %v1672 = vadd.f32 %v1670, %v1671
        %v1673 = vtanh.pop %v1672
        %v1674 = vmul.f32 %v1669, %v1673
        %s1675 = sadd.s32 %s677, 5
        %v1676 = vstv %s1675
        %vm1677 = vcmp.gt.s32.totalorder %v676, %v1676
        %v1678 = vsel %vm1677, 1, 0
        %1679 = vset.pattern.permute.xlu0 0
        %1680 = vperm.xlu0 %1679, %v1678
        %v1681 = vpop.permute.xlu0 %1680
        %vm1682 = vcmp.eq.s32.totalorder %v1681, 1
        %v1683 = vsel %vm1682, %v1672, %v1541
        %v1684 = vsel %vm1682, %v1674, %v1542
        %v1685 = vsel %vm1682, 1, 0
        %v1686 = vcvt.s32.f32 %v1685
        %v1687 = vmul.f32 %v1674, %v1686
        %s1688 = scalar_lea.vmem %s385, 40 [#allocation5]
        %1689 = vst [vmem:[%s1688] sm:$0xff] %v1687
        %s1690 = smul.u32 6, 4
        %s1691 = smul.addr %s1690, 8
        %s1692 = scalar_lea.vmem [#allocation2], %s1691
        %v1693 = vld [vmem:[%s1692] sm:$0xff]
        %v1694 = vld [vmem:[%s1692 + $0x8] sm:$0xff]
        %v1695 = vld [vmem:[%s1692 + $0x10] sm:$0xff]
        %v1696 = vld [vmem:[%s1692 + $0x18] sm:$0xff]
        %v1697 = vpack.c.bf16 %v1684, %v1684
        %1698 = vmatpush.bf16.msra.mxu0 %v812
        %1699 = vmatpush.bf16.msra.mxu0 %v808
        %1700 = vmatpush.bf16.msra.mxu0 %v804
        %1701 = vmatpush.bf16.msra.mxu0 %v800
        %1702 = vmatpush.bf16.msra.mxu0 %v796
        %1703 = vmatpush.bf16.msra.mxu0 %v792
        %1704 = vmatpush.bf16.msra.mxu0 %v788
        %1705 = vmatpush.bf16.msra.mxu0 %v784
        %1706 = vmatmul.bf16.gmra.mxu0 %v1697
        %v1707 = vpop.f32.mrf.mxu0
        %v1708 = vadd.f32 0.0, %v1707
        %v1709 = vpop.f32.mrf.mxu0
        %1710 = vdwg.mxu0
        %1711 = vmatpush.bf16.msra.mxu0 %v813
        %1712 = vmatpush.bf16.msra.mxu0 %v809
        %1713 = vmatpush.bf16.msra.mxu0 %v805
        %1714 = vmatpush.bf16.msra.mxu0 %v801
        %1715 = vmatpush.bf16.msra.mxu0 %v797
        %1716 = vmatpush.bf16.msra.mxu0 %v793
        %1717 = vmatpush.bf16.msra.mxu0 %v789
        %1718 = vmatpush.bf16.msra.mxu0 %v785
        %1719 = vmatmul.bf16.gmra.mxu0 %v1697
        %v1720 = vpop.f32.mrf.mxu0
        %v1721 = vadd.f32 0.0, %v1720
        %v1722 = vpop.f32.mrf.mxu0
        %1723 = vdwg.mxu0
        %1724 = vmatpush.bf16.msra.mxu0 %v814
        %1725 = vmatpush.bf16.msra.mxu0 %v810
        %1726 = vmatpush.bf16.msra.mxu0 %v806
        %1727 = vmatpush.bf16.msra.mxu0 %v802
        %1728 = vmatpush.bf16.msra.mxu0 %v798
        %1729 = vmatpush.bf16.msra.mxu0 %v794
        %1730 = vmatpush.bf16.msra.mxu0 %v790
        %1731 = vmatpush.bf16.msra.mxu0 %v786
        %1732 = vmatmul.bf16.gmra.mxu0 %v1697
        %v1733 = vpop.f32.mrf.mxu0
        %v1734 = vadd.f32 0.0, %v1733
        %v1735 = vpop.f32.mrf.mxu0
        %1736 = vdwg.mxu0
        %1737 = vmatpush.bf16.msra.mxu0 %v815
        %1738 = vmatpush.bf16.msra.mxu0 %v811
        %1739 = vmatpush.bf16.msra.mxu0 %v807
        %1740 = vmatpush.bf16.msra.mxu0 %v803
        %1741 = vmatpush.bf16.msra.mxu0 %v799
        %1742 = vmatpush.bf16.msra.mxu0 %v795
        %1743 = vmatpush.bf16.msra.mxu0 %v791
        %1744 = vmatpush.bf16.msra.mxu0 %v787
        %1745 = vmatmul.bf16.gmra.mxu0 %v1697
        %v1746 = vpop.f32.mrf.mxu0
        %v1747 = vadd.f32 0.0, %v1746
        %v1748 = vpop.f32.mrf.mxu0
        %1749 = vdwg.mxu0
        %v1750 = vadd.f32 %v1693, %v1708
        %v1751 = vadd.f32 %v1694, %v1721
        %v1752 = vadd.f32 %v1695, %v1734
        %v1753 = vadd.f32 %v1696, %v1747
        %v1754 = vxor.u32 %v1750, 2147483648
        %v1755 = vmul.f32 %v1754, 1.442695
        %v1756 = vpow.pop %v1755
        %v1757 = vadd.f32 %v1756, 1.0
        %v1758 = vrcp.pop %v1757
        %v1759 = vmul.f32 %v1757, %v1758
        %v1760 = vsub.f32 1.0, %v1759
        %v1761 = vmul.f32 %v1758, %v1760
        %v1762 = vadd.f32 %v1758, %v1761
        %vm1763 = vweird.f32 %v1757
        %vm1764 = vweird.f32 %v1758
        %vm1765 = vmor %vm1763, %vm1764
        %v1766 = vsel %vm1765, %v1758, %v1762
        %v1767 = vand.u32 2147483647, %v1757
        %vm1768 = vcmp.eq.f32.partialorder %v1767, 8.507059e+37
        %v1769 = vand.u32 %v1757, 2147483648
        %v1770 = vor.u32 1.1754944e-38, %v1769
        %v1771 = vsel %vm1768, %v1770, %v1766
        %v1772 = vmul.f32 1.0, %v1771
        %v1773 = vxor.u32 %v1751, 2147483648
        %v1774 = vmul.f32 %v1773, 1.442695
        %v1775 = vpow.pop %v1774
        %v1776 = vadd.f32 %v1775, 1.0
        %v1777 = vrcp.pop %v1776
        %v1778 = vmul.f32 %v1776, %v1777
        %v1779 = vsub.f32 1.0, %v1778
        %v1780 = vmul.f32 %v1777, %v1779
        %v1781 = vadd.f32 %v1777, %v1780
        %vm1782 = vweird.f32 %v1776
        %vm1783 = vweird.f32 %v1777
        %vm1784 = vmor %vm1782, %vm1783
        %v1785 = vsel %vm1784, %v1777, %v1781
        %v1786 = vand.u32 2147483647, %v1776
        %vm1787 = vcmp.eq.f32.partialorder %v1786, 8.507059e+37
        %v1788 = vand.u32 %v1776, 2147483648
        %v1789 = vor.u32 1.1754944e-38, %v1788
        %v1790 = vsel %vm1787, %v1789, %v1785
        %v1791 = vmul.f32 1.0, %v1790
        %v1792 = vtanh.pop %v1752
        %v1793 = vxor.u32 %v1753, 2147483648
        %v1794 = vmul.f32 %v1793, 1.442695
        %v1795 = vpow.pop %v1794
        %v1796 = vadd.f32 %v1795, 1.0
        %v1797 = vrcp.pop %v1796
        %v1798 = vmul.f32 %v1796, %v1797
        %v1799 = vsub.f32 1.0, %v1798
        %v1800 = vmul.f32 %v1797, %v1799
        %v1801 = vadd.f32 %v1797, %v1800
        %vm1802 = vweird.f32 %v1796
        %vm1803 = vweird.f32 %v1797
        %vm1804 = vmor %vm1802, %vm1803
        %v1805 = vsel %vm1804, %v1797, %v1801
        %v1806 = vand.u32 2147483647, %v1796
        %vm1807 = vcmp.eq.f32.partialorder %v1806, 8.507059e+37
        %v1808 = vand.u32 %v1796, 2147483648
        %v1809 = vor.u32 1.1754944e-38, %v1808
        %v1810 = vsel %vm1807, %v1809, %v1805
        %v1811 = vmul.f32 1.0, %v1810
        %v1812 = vmul.f32 %v1791, %v1683
        %v1813 = vmul.f32 %v1772, %v1792
        %v1814 = vadd.f32 %v1812, %v1813
        %v1815 = vtanh.pop %v1814
        %v1816 = vmul.f32 %v1811, %v1815
        %s1817 = sadd.s32 %s677, 6
        %v1818 = vstv %s1817
        %vm1819 = vcmp.gt.s32.totalorder %v676, %v1818
        %v1820 = vsel %vm1819, 1, 0
        %1821 = vset.pattern.permute.xlu0 0
        %1822 = vperm.xlu0 %1821, %v1820
        %v1823 = vpop.permute.xlu0 %1822
        %vm1824 = vcmp.eq.s32.totalorder %v1823, 1
        %v1825 = vsel %vm1824, %v1814, %v1683
        %v1826 = vsel %vm1824, %v1816, %v1684
        %v1827 = vsel %vm1824, 1, 0
        %v1828 = vcvt.s32.f32 %v1827
        %v1829 = vmul.f32 %v1816, %v1828
        %s1830 = scalar_lea.vmem %s385, 48 [#allocation5]
        %1831 = vst [vmem:[%s1830] sm:$0xff] %v1829
        %s1832 = smul.u32 7, 4
        %s1833 = smul.addr %s1832, 8
        %s1834 = scalar_lea.vmem [#allocation2], %s1833
        %v1835 = vld [vmem:[%s1834] sm:$0xff]
        %v1836 = vld [vmem:[%s1834 + $0x8] sm:$0xff]
        %v1837 = vld [vmem:[%s1834 + $0x10] sm:$0xff]
        %v1838 = vld [vmem:[%s1834 + $0x18] sm:$0xff]
        %v1839 = vpack.c.bf16 %v1826, %v1826
        %1840 = vmatpush.bf16.msra.mxu0 %v812
        %1841 = vmatpush.bf16.msra.mxu0 %v808
        %1842 = vmatpush.bf16.msra.mxu0 %v804
        %1843 = vmatpush.bf16.msra.mxu0 %v800
        %1844 = vmatpush.bf16.msra.mxu0 %v796
        %1845 = vmatpush.bf16.msra.mxu0 %v792
        %1846 = vmatpush.bf16.msra.mxu0 %v788
        %1847 = vmatpush.bf16.msra.mxu0 %v784
        %1848 = vmatmul.bf16.gmra.mxu0 %v1839
        %v1849 = vpop.f32.mrf.mxu0
        %v1850 = vadd.f32 0.0, %v1849
        %v1851 = vpop.f32.mrf.mxu0
        %1852 = vdwg.mxu0
        %1853 = vmatpush.bf16.msra.mxu0 %v813
        %1854 = vmatpush.bf16.msra.mxu0 %v809
        %1855 = vmatpush.bf16.msra.mxu0 %v805
        %1856 = vmatpush.bf16.msra.mxu0 %v801
        %1857 = vmatpush.bf16.msra.mxu0 %v797
        %1858 = vmatpush.bf16.msra.mxu0 %v793
        %1859 = vmatpush.bf16.msra.mxu0 %v789
        %1860 = vmatpush.bf16.msra.mxu0 %v785
        %1861 = vmatmul.bf16.gmra.mxu0 %v1839
        %v1862 = vpop.f32.mrf.mxu0
        %v1863 = vadd.f32 0.0, %v1862
        %v1864 = vpop.f32.mrf.mxu0
        %1865 = vdwg.mxu0
        %1866 = vmatpush.bf16.msra.mxu0 %v814
        %1867 = vmatpush.bf16.msra.mxu0 %v810
        %1868 = vmatpush.bf16.msra.mxu0 %v806
        %1869 = vmatpush.bf16.msra.mxu0 %v802
        %1870 = vmatpush.bf16.msra.mxu0 %v798
        %1871 = vmatpush.bf16.msra.mxu0 %v794
        %1872 = vmatpush.bf16.msra.mxu0 %v790
        %1873 = vmatpush.bf16.msra.mxu0 %v786
        %1874 = vmatmul.bf16.gmra.mxu0 %v1839
        %v1875 = vpop.f32.mrf.mxu0
        %v1876 = vadd.f32 0.0, %v1875
        %v1877 = vpop.f32.mrf.mxu0
        %1878 = vdwg.mxu0
        %1879 = vmatpush.bf16.msra.mxu0 %v815
        %1880 = vmatpush.bf16.msra.mxu0 %v811
        %1881 = vmatpush.bf16.msra.mxu0 %v807
        %1882 = vmatpush.bf16.msra.mxu0 %v803
        %1883 = vmatpush.bf16.msra.mxu0 %v799
        %1884 = vmatpush.bf16.msra.mxu0 %v795
        %1885 = vmatpush.bf16.msra.mxu0 %v791
        %1886 = vmatpush.bf16.msra.mxu0 %v787
        %1887 = vmatmul.bf16.gmra.mxu0 %v1839
        %v1888 = vpop.f32.mrf.mxu0
        %v1889 = vadd.f32 0.0, %v1888
        %v1890 = vpop.f32.mrf.mxu0
        %1891 = vdwg.mxu0
        %v1892 = vadd.f32 %v1835, %v1850
        %v1893 = vadd.f32 %v1836, %v1863
        %v1894 = vadd.f32 %v1837, %v1876
        %v1895 = vadd.f32 %v1838, %v1889
        %v1896 = vxor.u32 %v1892, 2147483648
        %v1897 = vmul.f32 %v1896, 1.442695
        %v1898 = vpow.pop %v1897
        %v1899 = vadd.f32 %v1898, 1.0
        %v1900 = vrcp.pop %v1899
        %v1901 = vmul.f32 %v1899, %v1900
        %v1902 = vsub.f32 1.0, %v1901
        %v1903 = vmul.f32 %v1900, %v1902
        %v1904 = vadd.f32 %v1900, %v1903
        %vm1905 = vweird.f32 %v1899
        %vm1906 = vweird.f32 %v1900
        %vm1907 = vmor %vm1905, %vm1906
        %v1908 = vsel %vm1907, %v1900, %v1904
        %v1909 = vand.u32 2147483647, %v1899
        %vm1910 = vcmp.eq.f32.partialorder %v1909, 8.507059e+37
        %v1911 = vand.u32 %v1899, 2147483648
        %v1912 = vor.u32 1.1754944e-38, %v1911
        %v1913 = vsel %vm1910, %v1912, %v1908
        %v1914 = vmul.f32 1.0, %v1913
        %v1915 = vxor.u32 %v1893, 2147483648
        %v1916 = vmul.f32 %v1915, 1.442695
        %v1917 = vpow.pop %v1916
        %v1918 = vadd.f32 %v1917, 1.0
        %v1919 = vrcp.pop %v1918
        %v1920 = vmul.f32 %v1918, %v1919
        %v1921 = vsub.f32 1.0, %v1920
        %v1922 = vmul.f32 %v1919, %v1921
        %v1923 = vadd.f32 %v1919, %v1922
        %vm1924 = vweird.f32 %v1918
        %vm1925 = vweird.f32 %v1919
        %vm1926 = vmor %vm1924, %vm1925
        %v1927 = vsel %vm1926, %v1919, %v1923
        %v1928 = vand.u32 2147483647, %v1918
        %vm1929 = vcmp.eq.f32.partialorder %v1928, 8.507059e+37
        %v1930 = vand.u32 %v1918, 2147483648
        %v1931 = vor.u32 1.1754944e-38, %v1930
        %v1932 = vsel %vm1929, %v1931, %v1927
        %v1933 = vmul.f32 1.0, %v1932
        %v1934 = vtanh.pop %v1894
        %v1935 = vxor.u32 %v1895, 2147483648
        %v1936 = vmul.f32 %v1935, 1.442695
        %v1937 = vpow.pop %v1936
        %v1938 = vadd.f32 %v1937, 1.0
        %v1939 = vrcp.pop %v1938
        %v1940 = vmul.f32 %v1938, %v1939
        %v1941 = vsub.f32 1.0, %v1940
        %v1942 = vmul.f32 %v1939, %v1941
        %v1943 = vadd.f32 %v1939, %v1942
        %vm1944 = vweird.f32 %v1938
        %vm1945 = vweird.f32 %v1939
        %vm1946 = vmor %vm1944, %vm1945
        %v1947 = vsel %vm1946, %v1939, %v1943
        %v1948 = vand.u32 2147483647, %v1938
        %vm1949 = vcmp.eq.f32.partialorder %v1948, 8.507059e+37
        %v1950 = vand.u32 %v1938, 2147483648
        %v1951 = vor.u32 1.1754944e-38, %v1950
        %v1952 = vsel %vm1949, %v1951, %v1947
        %v1953 = vmul.f32 1.0, %v1952
        %v1954 = vmul.f32 %v1933, %v1825
        %v1955 = vmul.f32 %v1914, %v1934
        %v1956 = vadd.f32 %v1954, %v1955
        %v1957 = vtanh.pop %v1956
        %v1958 = vmul.f32 %v1953, %v1957
        %s1959 = sadd.s32 %s677, 7
        %v1960 = vstv %s1959
        %vm1961 = vcmp.gt.s32.totalorder %v676, %v1960
        %v1962 = vsel %vm1961, 1, 0
        %1963 = vset.pattern.permute.xlu0 0
        %1964 = vperm.xlu0 %1963, %v1962
        %v1965 = vpop.permute.xlu0 %1964
        %vm1966 = vcmp.eq.s32.totalorder %v1965, 1
        %v1967 = vsel %vm1966, %v1956, %v1825
        %v1968 = vsel %vm1966, %v1958, %v1826
        %v1969 = vsel %vm1966, 1, 0
        %v1970 = vcvt.s32.f32 %v1969
        %v1971 = vmul.f32 %v1958, %v1970
        %s1972 = scalar_lea.vmem %s385, 56 [#allocation5]
        %1973 = vst [vmem:[%s1972] sm:$0xff] %v1971
        %1974 = vst [vmem:[#allocation3] sm:$0xff] %v1968
        %1975 = vst [vmem:[#allocation4] sm:$0xff] %v1967
        // Predicated region
        $region53: #{base_local_encoder_forward.2} parent=47 // pred_check
          %p1976 = pneg %p429
        $region54: #{base_local_encoder_forward.2} parent=47 // pred_check_branch
          %1978 = sbr.rel (%p1976) target = $region56
        $region55: #{base_local_encoder_forward.2} parent=47 // pred_region
          %1979 = vst [vmem:[%s423] sm:$0xff] %v1968
          %1980 = vst [vmem:[%s427] sm:$0xff] %v1967
        $region56: #{base_local_encoder_forward.2} parent=47 // pred_fallthru
          _
        %s1981 = sand.u32 %s212, 1
        %s1982 = sand.u32 %s212, 1
        %s1983 = smul.addr %s1982, 64
        %s1984 = scalar_lea.vmem [#allocation5], %s1983
        %p1985 = scmp.lt.s32.totalorder %s25, 1
        %s1986 = scalar_select %p1985, %s25, 1
        %s1987 = smul.addr %s1986, 8
        %s1988 = scalar_lea.vmem %s8, %s1987
        %p1989 = scmp.lt.s32.totalorder %s25, 1
        %s1990 = scalar_select %p1989, %s25, 1
        %s1991 = smul.addr %s1990, 8
        %s1992 = scalar_lea.vmem %s9, %s1991
        // Predicated region
        $region57: #{base_local_encoder_forward.2} parent=47 // pred_check
          %p1993 = pneg %p222
        $region58: #{base_local_encoder_forward.2} parent=47 // pred_check_branch
          %1995 = sbr.rel (%p1993) target = $region60
        $region59: #{base_local_encoder_forward.2} parent=47 // pred_region
          %s1996 = smul.u32 8, %s26
          %s1997 = smul.addr %s1996, 2
          %s1998 = sadd.s32 %s25, %s1997
          %s1999 = smul.addr %s1998, 8
          %s2000 = scalar_lea.vmem %s7, %s1999
          // Predicated region
          $region61: #{base_local_encoder_forward.2} parent=59 // pred_check
            _
          $region62: #{base_local_encoder_forward.2} parent=59 // pred_check_branch
            %2002 = sbr.rel (0) target = $region64
          $region63: #{base_local_encoder_forward.2} parent=59 // pred_region
            // Predicated region
            $region65: #{base_local_encoder_forward.2} parent=63 // pred_check
              _
            $region66: #{base_local_encoder_forward.2} parent=63 // pred_check_branch
              %2004 = sbr.rel (0) target = $region68
            $region67: #{base_local_encoder_forward.2} parent=63 // pred_region
              // Predicated region
              $region80: #{base_local_encoder_forward.2} parent=67 // pred_check
                _
              $region81: #{base_local_encoder_forward.2} parent=67 // pred_check_branch
                %2034 = sbr.rel (0) target = $region83
              $region82: #{base_local_encoder_forward.2} parent=67 // pred_region
                loop: start=0, step=1, limit=1
                $region84: #{base_local_encoder_forward.2} parent=82 // loop_pre_header
                  _
                $region85: #{base_local_encoder_forward.2} parent=82 // loop_header
                  %s2036 = sphi 0, %s2040
                  %p2037 = scmp.ge.s32.totalorder %s2036, 1
                  %s2041 = sphi %s1984, %s1984
                  %s2042 = sphi %s2000, %s2000
                $region86: #{base_local_encoder_forward.2} parent=82 // loop_header_branch
                  %2039 = sbr.rel (%p2037) target = $region90
                $region87: #{base_local_encoder_forward.2} parent=82 // loop_body
                  %v2043 = vld [vmem:[%s2041] sm:$0xff]
                  %2044 = vst [vmem:[%s2042] sm:$0xff] %v2043
                  %v2045 = vld [vmem:[%s2041 + $0x8] sm:$0xff]
                  %2046 = vst [vmem:[%s2042 + $0x10] sm:$0xff] %v2045
                  %v2047 = vld [vmem:[%s2041 + $0x10] sm:$0xff]
                  %2048 = vst [vmem:[%s2042 + $0x20] sm:$0xff] %v2047
                  %v2049 = vld [vmem:[%s2041 + $0x18] sm:$0xff]
                  %2050 = vst [vmem:[%s2042 + $0x30] sm:$0xff] %v2049
                  %v2051 = vld [vmem:[%s2041 + $0x20] sm:$0xff]
                  %2052 = vst [vmem:[%s2042 + $0x40] sm:$0xff] %v2051
                  %v2053 = vld [vmem:[%s2041 + $0x28] sm:$0xff]
                  %2054 = vst [vmem:[%s2042 + $0x50] sm:$0xff] %v2053
                  %v2055 = vld [vmem:[%s2041 + $0x30] sm:$0xff]
                  %2056 = vst [vmem:[%s2042 + $0x60] sm:$0xff] %v2055
                  %v2057 = vld [vmem:[%s2041 + $0x38] sm:$0xff]
                  %2058 = vst [vmem:[%s2042 + $0x70] sm:$0xff] %v2057
                $region88: #{base_local_encoder_forward.2} parent=82 // loop_footer
                  %s2040 = sadd.s32 1, %s2036
                $region89: #{base_local_encoder_forward.2} parent=82 // loop_footer_branch
                  %2035 = sbr.rel target = $region85
                $region90: #{base_local_encoder_forward.2} parent=82 // loop_exit
                  _
              $region83: #{base_local_encoder_forward.2} parent=67 // pred_fallthru
                _
              // Predicated region
              $region91: #{base_local_encoder_forward.2} parent=67 // pred_check
                _
              $region92: #{base_local_encoder_forward.2} parent=67 // pred_check_branch
                %2060 = sbr.rel target = $region94
              $region93: #{base_local_encoder_forward.2} parent=67 // pred_region
                _
              $region94: #{base_local_encoder_forward.2} parent=67 // pred_fallthru
                _
            $region68: #{base_local_encoder_forward.2} parent=63 // pred_fallthru
              _
            // Predicated region
            $region69: #{base_local_encoder_forward.2} parent=63 // pred_check
              _
            $region70: #{base_local_encoder_forward.2} parent=63 // pred_check_branch
              %2006 = sbr.rel target = $region72
            $region71: #{base_local_encoder_forward.2} parent=63 // pred_region
              %s2008 = ssub.s32 256, 1
              loop: start=0, step=1, limit=1
              $region73: #{base_local_encoder_forward.2} parent=71 // loop_pre_header
                _
              $region74: #{base_local_encoder_forward.2} parent=71 // loop_header
                %s2010 = sphi 0, %s2014
                %p2011 = scmp.ge.s32.totalorder %s2010, 1
                %s2015 = sphi %s1984, %s1984
                %s2016 = sphi %s2000, %s2000
              $region75: #{base_local_encoder_forward.2} parent=71 // loop_header_branch
                %2013 = sbr.rel (%p2011) target = $region79
              $region76: #{base_local_encoder_forward.2} parent=71 // loop_body
                %v2017 = vld [vmem:[%s2015] sm:%s2008]
                %2018 = vst [vmem:[%s2016] sm:%s2008] %v2017
                %v2019 = vld [vmem:[%s2015 + $0x8] sm:%s2008]
                %2020 = vst [vmem:[%s2016 + $0x10] sm:%s2008] %v2019
                %v2021 = vld [vmem:[%s2015 + $0x10] sm:%s2008]
                %2022 = vst [vmem:[%s2016 + $0x20] sm:%s2008] %v2021
                %v2023 = vld [vmem:[%s2015 + $0x18] sm:%s2008]
                %2024 = vst [vmem:[%s2016 + $0x30] sm:%s2008] %v2023
                %v2025 = vld [vmem:[%s2015 + $0x20] sm:%s2008]
                %2026 = vst [vmem:[%s2016 + $0x40] sm:%s2008] %v2025
                %v2027 = vld [vmem:[%s2015 + $0x28] sm:%s2008]
                %2028 = vst [vmem:[%s2016 + $0x50] sm:%s2008] %v2027
                %v2029 = vld [vmem:[%s2015 + $0x30] sm:%s2008]
                %2030 = vst [vmem:[%s2016 + $0x60] sm:%s2008] %v2029
                %v2031 = vld [vmem:[%s2015 + $0x38] sm:%s2008]
                %2032 = vst [vmem:[%s2016 + $0x70] sm:%s2008] %v2031
              $region77: #{base_local_encoder_forward.2} parent=71 // loop_footer
                %s2014 = sadd.s32 1, %s2010
              $region78: #{base_local_encoder_forward.2} parent=71 // loop_footer_branch
                %2009 = sbr.rel target = $region74
              $region79: #{base_local_encoder_forward.2} parent=71 // loop_exit
                _
            $region72: #{base_local_encoder_forward.2} parent=63 // pred_fallthru
              _
          $region64: #{base_local_encoder_forward.2} parent=59 // pred_fallthru
            _
          %2061 = vnop
        $region60: #{base_local_encoder_forward.2} parent=47 // pred_fallthru
          _
        // Predicated region
        $region95: #{base_local_encoder_forward.2} parent=47 // pred_check
          %p2062 = pneg %p248
        $region96: #{base_local_encoder_forward.2} parent=47 // pred_check_branch
          %2064 = sbr.rel (%p2062) target = $region98
        $region97: #{base_local_encoder_forward.2} parent=47 // pred_region
          _
        $region98: #{base_local_encoder_forward.2} parent=47 // pred_fallthru
          _
        // Predicated region
        $region99: #{base_local_encoder_forward.2} parent=47 // pred_check
          %p2065 = pneg %p274
        $region100: #{base_local_encoder_forward.2} parent=47 // pred_check_branch
          %2067 = sbr.rel (%p2065) target = $region102
        $region101: #{base_local_encoder_forward.2} parent=47 // pred_region
          _
        $region102: #{base_local_encoder_forward.2} parent=47 // pred_fallthru
          _
      $region48: #{base_local_encoder_forward.2} parent=5 // pred_fallthru
        _
      %p2068 = scmp.le.s32.totalorder 2, %s16
      // Predicated region
      $region103: #{base_local_encoder_forward.2} parent=5 // pred_check
        %p2069 = pneg %p2068
      $region104: #{base_local_encoder_forward.2} parent=5 // pred_check_branch
        %2071 = sbr.rel (%p2069) target = $region106
      $region105: #{base_local_encoder_forward.2} parent=5 // pred_region
        %s2072 = ssub.s32 %s16, 2
        // Predicated region
        $region107: #{base_local_encoder_forward.2} parent=105 // pred_check
          %p2073 = pneg %p228
        $region108: #{base_local_encoder_forward.2} parent=105 // pred_check_branch
          %2075 = sbr.rel (%p2073) target = $region110
        $region109: #{base_local_encoder_forward.2} parent=105 // pred_region
          %s2076 = sand.u32 %s213, 1
          %s2077 = sand.u32 %s213, 1
          %s2078 = smul.addr %s2077, 64
          %s2079 = scalar_lea.vmem [#allocation5], %s2078
        $region110: #{base_local_encoder_forward.2} parent=105 // pred_fallthru
          _
        // Predicated region
        $region111: #{base_local_encoder_forward.2} parent=105 // pred_check
          %p2080 = pneg %p254
        $region112: #{base_local_encoder_forward.2} parent=105 // pred_check_branch
          %2082 = sbr.rel (%p2080) target = $region114
        $region113: #{base_local_encoder_forward.2} parent=105 // pred_region
          %p2083 = scmp.lt.s32.totalorder %s27, 1
          %s2084 = scalar_select %p2083, %s27, 1
          %s2085 = smul.addr %s2084, 8
          %s2086 = scalar_lea.vmem %s8, %s2085
        $region114: #{base_local_encoder_forward.2} parent=105 // pred_fallthru
          _
        // Predicated region
        $region115: #{base_local_encoder_forward.2} parent=105 // pred_check
          %p2087 = pneg %p280
        $region116: #{base_local_encoder_forward.2} parent=105 // pred_check_branch
          %2089 = sbr.rel (%p2087) target = $region118
        $region117: #{base_local_encoder_forward.2} parent=105 // pred_region
          %p2090 = scmp.lt.s32.totalorder %s27, 1
          %s2091 = scalar_select %p2090, %s27, 1
          %s2092 = smul.addr %s2091, 8
          %s2093 = scalar_lea.vmem %s9, %s2092
        $region118: #{base_local_encoder_forward.2} parent=105 // pred_fallthru
          _
      $region106: #{base_local_encoder_forward.2} parent=5 // pred_fallthru
        _
    $region6: #{base_local_encoder_forward.2} parent=1 // loop_footer
      %s20 = sadd.s32 1, %s16
    $region7: #{base_local_encoder_forward.2} parent=1 // loop_footer_branch
      %15 = sbr.rel target = $region3
    $region8: #{base_local_encoder_forward.2} parent=1 // loop_exit
      _

</llo_original>
